<compile_context>
chip_gen: v6e
topology: v6e:2x2x1
jax: 0.10.0
libtpu: 0.0.40
codegen_flags: <defaults>
</compile_context>

<pallas_src>
import jax
import jax.numpy as jnp
from jax.experimental import pallas as pl
from jax.experimental.pallas import tpu as pltpu

NUM_CHUNKS = 32   # x.chunk(32, dim=-1) in the reference module
EPS = 1e-12       # F.normalize eps
LANES = 128


# ---------------------------------------------------------------------------
# Fused kernel:
#   conv3x3(SAME) as 3 accumulated row-tap MXU matmuls (in-kernel im2col)
#   + bias + ReLU (f32 VPU)
#   + global average pool as two MXU matmuls
#   + chunked-cosine logits (mean-over-shot prototype, per-chunk L2 normalize,
#     per-chunk dot, * temp).
# Single invocation (no grid): every operand lives fully in VMEM.
# ---------------------------------------------------------------------------
def _meta_baseline_kernel(x_ref, w_ref, b_ref, pool_ref, gw_ref, avg_ref,
                          mask_ref, maskt_ref, way_ref, cmask_ref, temp_ref,
                          feat_ref, logit_ref):
    # x_ref    : (N, Hp, Wp*C)       zero-padded NHWC image rows (f32)
    # w_ref    : (3, Wp*C, W*Co)     block-Toeplitz row-tap conv operators (bf16)
    # b_ref    : (1, W*Co)           conv bias tiled over w (f32)
    # pool_ref : (N, N*H)            per-image row-sum operator
    # gw_ref   : (W*Co, Cp)          width/channel gather, scaled by 1/(H*W)
    # avg_ref  : (n_way, n_s)        prototype operator (1/n_shot block rows)
    # mask_ref : (Cp, nc)            chunk indicator   [d // dc == c], padded rows 0
    # maskt_ref: (nc, Cp)            its transpose
    # way_ref  : (J, n_way)          way selector      [j // nc == w],  J = n_way*nc
    # cmask_ref: (J, Cp)             chunk selector    [j % nc == d // dc], padded 0
    # temp_ref : (1,) SMEM           cosine temperature
    # feat_ref : (N, Cp)             pooled features, lane-dense (output)
    # logit_ref: (n_q, J)            chunked cosine logits (output), col j = w*nc + c
    n_img, hp, wpc = x_ref.shape
    h_out = hp - 2
    n_q = logit_ref.shape[0]
    n_s = feat_ref.shape[0] - n_q

    # --- encoder: conv as 3 row-tap matmuls, bf16 MXU operands, f32 accum -----
    def tap(dy):
        rows = x_ref[:, dy:dy + h_out, :].reshape(n_img * h_out, wpc)
        return jnp.dot(rows.astype(jnp.bfloat16), w_ref[dy],
                       preferred_element_type=jnp.float32)

    acc = tap(0) + tap(1) + tap(2)                       # (N*H, W*Co) f32
    y = jnp.maximum(acc + b_ref[...], 0.0)               # bias + ReLU, f32 VPU

    # --- global average pool, entirely on the (idle) MXU ----------------------
    p1 = jnp.dot(pool_ref[...], y, preferred_element_type=jnp.float32)       # (N, W*Co)
    feats = jnp.dot(p1, gw_ref[...], preferred_element_type=jnp.float32)     # (N, Cp)
    feat_ref[...] = feats                                 # lane-dense 128-wide store

    # --- chunked-cosine logits -------------------------------------------------
    fs = feats[:n_s, :]                                   # (n_s, Cp)
    fq = feats[n_s:, :]                                   # (n_q, Cp)
    proto = jnp.dot(avg_ref[...], fs,
                    preferred_element_type=jnp.float32)   # (n_way, Cp)

    mask = mask_ref[...]
    mask_t = maskt_ref[...]

    def chunk_normalize(v):                               # F.normalize per 32-chunk
        csum = jnp.dot(v * v, mask, preferred_element_type=jnp.float32)      # (M, nc)
        inv = jax.lax.rsqrt(jnp.maximum(csum, EPS * EPS))                    # EUP slot
        return v * jnp.dot(inv, mask_t, preferred_element_type=jnp.float32)

    pn = chunk_normalize(proto)                           # (n_way, Cp)
    zn = chunk_normalize(fq)                              # (n_q, Cp)

    # kmat[j, d] = pn[j // nc, d] * [d // dc == j % nc]
    kmat = jnp.dot(way_ref[...], pn,
                   preferred_element_type=jnp.float32) * cmask_ref[...]      # (J, Cp)
    # Contract last-vs-last on the MXU directly (no XLU transpose of kmat).
    logits = jax.lax.dot_general(
        zn.astype(jnp.bfloat16), kmat.astype(jnp.bfloat16),
        (((1,), (1,)), ((), ())), preferred_element_type=jnp.float32)        # (n_q, J)
    logit_ref[...] = logits * temp_ref[0]


# ---------------------------------------------------------------------------
# MetaBaseline forward (method='cos')
# ---------------------------------------------------------------------------
def meta_baseline_forward(x_shot, x_query, params):
    conv_w, conv_b, temp = params["conv_w"], params["conv_b"], params["temp"]
    shot_shape = x_shot.shape[:-3]            # (1, n_way, n_shot)
    query_shape = x_query.shape[:-3]          # (1, n_q)
    img_shape = x_shot.shape[-3:]
    assert len(shot_shape) == 3 and shot_shape[0] == 1 and query_shape[0] == 1, \
        "reference squeeze/permute path requires a single episode"
    n_way, n_shot = shot_shape[-2], shot_shape[-1]
    n_q = query_shape[-1]

    xs = x_shot.reshape((-1,) + img_shape)
    xq = x_query.reshape((-1,) + img_shape)
    n_s = xs.shape[0]
    x_tot = jnp.concatenate([xs, xq], axis=0)                  # (N, C, H, W)
    N, C, H, W = x_tot.shape
    Cout = conv_w.shape[-1]
    assert Cout % NUM_CHUNKS == 0, "feature dim must be divisible by 32 chunks"

    Hp, Wp = H + 2, W + 2
    D = Cout
    dc = D // NUM_CHUNKS
    J = n_way * NUM_CHUNKS
    Cp = ((D + LANES - 1) // LANES) * LANES                    # lane-dense feature width

    # --- image: NCHW -> zero-padded NHWC rows (N, Hp, Wp*C); 1x HBM, no im2col --
    x = jnp.transpose(x_tot, (0, 2, 3, 1))
    xp = jnp.pad(x, ((0, 0), (1, 1), (1, 1), (0, 0)))
    ximg = xp.reshape(N, Hp, Wp * C).astype(jnp.float32)

    # --- conv weight -> 3 block-Toeplitz row-tap operators (dx folded in) ------
    # w_ops[dy, r*C+ci, w*Co+co] = conv_w[dy, r-w, ci, co] if 0 <= r-w <= 2 else 0
    taps = (jnp.arange(Wp)[:, None, None]
            == jnp.arange(W)[None, None, :]
            + jnp.arange(3)[None, :, None]).astype(jnp.float32)          # (Wp, 3, W)
    w_ops = jnp.einsum("rxw,yxio->yriwo", taps, conv_w)
    w_ops = w_ops.reshape(3, Wp * C, W * Cout).astype(jnp.bfloat16)
    b_tile = jnp.tile(conv_b.astype(jnp.float32), W).reshape(1, W * Cout)

    # --- GAP as two MXU matmuls: per-image row sum, then width/channel gather --
    pool_rows = (jnp.arange(N)[:, None]
                 == jnp.arange(N * H)[None, :] // H).astype(jnp.float32)  # (N, N*H)
    gather_w = ((jnp.arange(W * Cout) % Cout)[:, None]
                == jnp.arange(Cp)[None, :]).astype(jnp.float32) / float(H * W)

    # --- chunked-cosine constant operators, all Cp-lane-dense (padded -> zero) --
    chunk_of = jnp.where(jnp.arange(Cp) < D, jnp.arange(Cp) // dc, -1)
    mask = (chunk_of[:, None] == jnp.arange(NUM_CHUNKS)[None, :]).astype(jnp.float32)
    mask_t = mask.T
    avg_op = ((jnp.arange(n_way)[:, None] == (jnp.arange(n_s) // n_shot)[None, :])
              .astype(jnp.float32) / n_shot)                              # (n_way, n_s)
    j_idx = jnp.arange(J)
    way_sel = ((j_idx // NUM_CHUNKS)[:, None]
               == jnp.arange(n_way)[None, :]).astype(jnp.float32)         # (J, n_way)
    cmask = ((j_idx % NUM_CHUNKS)[:, None] == chunk_of[None, :]).astype(jnp.float32)

    temp_arr = jnp.asarray(temp, jnp.float32).reshape(1)

    feats_p, logits2 = pl.pallas_call(
        _meta_baseline_kernel,
        out_shape=(jax.ShapeDtypeStruct((N, Cp), jnp.float32),
                   jax.ShapeDtypeStruct((n_q, J), jnp.float32)),
        in_specs=[pl.BlockSpec(memory_space=pltpu.MemorySpace.VMEM)] * 10
                 + [pl.BlockSpec(memory_space=pltpu.MemorySpace.SMEM)],
        out_specs=(pl.BlockSpec(memory_space=pltpu.MemorySpace.VMEM),
                   pl.BlockSpec(memory_space=pltpu.MemorySpace.VMEM)),
    )(ximg, w_ops, b_tile, pool_rows, gather_w, avg_op, mask, mask_t,
      way_sel, cmask, temp_arr)

    feats = feats_p[:, :D]                                     # drop lane padding (wrapper side)
    fs = feats[:n_s].reshape(shot_shape + (D,))                # (1, n_way, n_shot, D)
    fq = feats[n_s:].reshape(query_shape + (D,))               # (1, n_q, D)

    # torch: stack -> (nc, 1, n_q, n_way); squeeze -> (nc, n_q, n_way);
    #        permute(1,2,0) -> (n_q, n_way, nc); chunk(n_q, dim=0)
    out = logits2.reshape(n_q, n_way, NUM_CHUNKS)
    out_chunks = [out[i:i + 1] for i in range(n_q)]
    return [out_chunks, fs, fq]


# ---------------------------------------------------------------------------
# Pure-JAX f32 reference (mirrors the PyTorch code) for correctness checking
# ---------------------------------------------------------------------------
def reference_forward(x_shot, x_query, params):
    conv_w, conv_b, temp = params["conv_w"], params["conv_b"], params["temp"]
    shot_shape = x_shot.shape[:-3]
    query_shape = x_query.shape[:-3]
    img_shape = x_shot.shape[-3:]
    xs = x_shot.reshape((-1,) + img_shape)
    xq = x_query.reshape((-1,) + img_shape)
    n_s = xs.shape[0]
    x = jnp.concatenate([xs, xq], axis=0)
    x = jnp.transpose(x, (0, 2, 3, 1))                    # NHWC
    y = jax.lax.conv_general_dilated(x, conv_w, (1, 1), "SAME",
                                     dimension_numbers=("NHWC", "HWIO", "NHWC"))
    y = jnp.maximum(y + conv_b, 0.0)
    feats = jnp.mean(y, axis=(1, 2))
    D = feats.shape[-1]
    fs = feats[:n_s].reshape(shot_shape + (D,))
    fq = feats[n_s:].reshape(query_shape + (D,))
    dc = D // NUM_CHUNKS
    logits_list = []
    for c in range(NUM_CHUNKS):
        ci = fs[..., c * dc:(c + 1) * dc].mean(axis=-2)   # (1, n_way, dc)
        zi = fq[..., c * dc:(c + 1) * dc]                 # (1, n_q, dc)
        ci = ci / jnp.maximum(jnp.linalg.norm(ci, axis=-1, keepdims=True), EPS)
        zi = zi / jnp.maximum(jnp.linalg.norm(zi, axis=-1, keepdims=True), EPS)
        logits_list.append(jnp.einsum("eqd,ewd->eqw", zi, ci) * temp)
    out = jnp.squeeze(jnp.stack(logits_list))             # (nc, n_q, n_way)
    out = jnp.transpose(out, (1, 2, 0))                   # (n_q, n_way, nc)
    return out, fs, fq


if __name__ == "__main__":
    key = jax.random.PRNGKey(0)
    k1, k2, k3, k4 = jax.random.split(key, 4)

    C_IN, H, W = 3, 16, 16
    D_FEAT = 64                      # feature dim (chunked into 32 pieces of 2)
    N_WAY, N_SHOT, N_QUERY = 4, 2, 8

    params = {
        "conv_w": jax.random.normal(k1, (3, 3, C_IN, D_FEAT), jnp.float32) * 0.1,
        "conv_b": jax.random.normal(k2, (D_FEAT,), jnp.float32) * 0.01,
        "temp": 1.0,                 # nn.Parameter(torch.tensor(temp)); fixed value here
    }

    x_shot = jax.random.normal(k3, (1, N_WAY, N_SHOT, C_IN, H, W), jnp.float32)
    x_query = jax.random.normal(k4, (1, N_QUERY, C_IN, H, W), jnp.float32)

    forward = jax.jit(meta_baseline_forward)
    out_chunks, fs, fq = forward(x_shot, x_query, params)
    out_full = jnp.concatenate(out_chunks, axis=0)        # (n_q, n_way, 32)
    jax.block_until_ready((out_full, fs, fq))

    ref_out, ref_fs, ref_fq = reference_forward(x_shot, x_query, params)
    assert out_full.shape == (N_QUERY, N_WAY, NUM_CHUNKS)
    # Tolerances account for bf16 MXU operands in the encoder / logits matmuls
    # (f32 accumulation); elementwise path and pooling are f32.
    assert jnp.allclose(out_full, ref_out, rtol=2e-2, atol=2e-2), \
        float(jnp.max(jnp.abs(out_full - ref_out)))
    assert jnp.allclose(fs, ref_fs, rtol=1e-2, atol=3e-3), \
        float(jnp.max(jnp.abs(fs - ref_fs)))
    assert jnp.allclose(fq, ref_fq, rtol=1e-2, atol=3e-3), \
        float(jnp.max(jnp.abs(fq - ref_fq)))

    print("KERNEL_OK")
</pallas_src>

<mosaic_0001>
module attributes {stable_mosaic.version = 11 : i64} {
  func.func @_meta_baseline_kernel(%arg0: memref<16x18x54xf32, #tpu.memory_space<vmem>>, %arg1: memref<3x54x1024xbf16, #tpu.memory_space<vmem>>, %arg2: memref<1x1024xf32, #tpu.memory_space<vmem>>, %arg3: memref<16x256xf32, #tpu.memory_space<vmem>>, %arg4: memref<1024x128xf32, #tpu.memory_space<vmem>>, %arg5: memref<4x8xf32, #tpu.memory_space<vmem>>, %arg6: memref<128x32xf32, #tpu.memory_space<vmem>>, %arg7: memref<32x128xf32, #tpu.memory_space<vmem>>, %arg8: memref<128x4xf32, #tpu.memory_space<vmem>>, %arg9: memref<128x128xf32, #tpu.memory_space<vmem>>, %arg10: memref<1xf32, #tpu.memory_space<smem>>, %arg11: memref<16x128xf32, #tpu.memory_space<vmem>>, %arg12: memref<8x128xf32, #tpu.memory_space<vmem>>) attributes {dimension_semantics = [], scalar_prefetch = 0 : i64, scratch_operands = 0 : i64, tpu.core_type = #tpu.core_type<tc>} {
    %c0 = arith.constant 0 : index
    %c0_0 = arith.constant 0 : index
    %c0_1 = arith.constant 0 : index
    %0 = vector.load %arg0[%c0, %c0_0, %c0_1] : memref<16x18x54xf32, #tpu.memory_space<vmem>>, vector<16x16x54xf32>
    %1 = vector.shape_cast %0 : vector<16x16x54xf32> to vector<256x54xf32>
    %2 = arith.truncf %1 : vector<256x54xf32> to vector<256x54xbf16>
    %c0_2 = arith.constant 0 : index
    %c0_3 = arith.constant 0 : index
    %c0_4 = arith.constant 0 : index
    %3 = vector.load %arg1[%c0_2, %c0_3, %c0_4] : memref<3x54x1024xbf16, #tpu.memory_space<vmem>>, vector<1x54x1024xbf16>
    %4 = vector.shape_cast %3 : vector<1x54x1024xbf16> to vector<54x1024xbf16>
    %cst = arith.constant dense<0.000000e+00> : vector<256x1024xf32>
    %5 = tpu.matmul %2, %4, %cst {dimension_numbers = #tpu.dot_dimension_numbers<[1], [0], [0], [1], [0, 0, 1, 1], [], []>} : vector<256x54xbf16>, vector<54x1024xbf16>, vector<256x1024xf32> -> vector<256x1024xf32>
    %c0_5 = arith.constant 0 : index
    %c1 = arith.constant 1 : index
    %c0_6 = arith.constant 0 : index
    %6 = vector.load %arg0[%c0_5, %c1, %c0_6] : memref<16x18x54xf32, #tpu.memory_space<vmem>>, vector<16x16x54xf32>
    %7 = vector.shape_cast %6 : vector<16x16x54xf32> to vector<256x54xf32>
    %8 = arith.truncf %7 : vector<256x54xf32> to vector<256x54xbf16>
    %c1_7 = arith.constant 1 : index
    %c0_8 = arith.constant 0 : index
    %c0_9 = arith.constant 0 : index
    %9 = vector.load %arg1[%c1_7, %c0_8, %c0_9] : memref<3x54x1024xbf16, #tpu.memory_space<vmem>>, vector<1x54x1024xbf16>
    %10 = vector.shape_cast %9 : vector<1x54x1024xbf16> to vector<54x1024xbf16>
    %cst_10 = arith.constant dense<0.000000e+00> : vector<256x1024xf32>
    %11 = tpu.matmul %8, %10, %cst_10 {dimension_numbers = #tpu.dot_dimension_numbers<[1], [0], [0], [1], [0, 0, 1, 1], [], []>} : vector<256x54xbf16>, vector<54x1024xbf16>, vector<256x1024xf32> -> vector<256x1024xf32>
    %12 = arith.addf %5, %11 : vector<256x1024xf32>
    %c0_11 = arith.constant 0 : index
    %c2 = arith.constant 2 : index
    %c0_12 = arith.constant 0 : index
    %13 = vector.load %arg0[%c0_11, %c2, %c0_12] : memref<16x18x54xf32, #tpu.memory_space<vmem>>, vector<16x16x54xf32>
    %14 = vector.shape_cast %13 : vector<16x16x54xf32> to vector<256x54xf32>
    %15 = arith.truncf %14 : vector<256x54xf32> to vector<256x54xbf16>
    %c2_13 = arith.constant 2 : index
    %c0_14 = arith.constant 0 : index
    %c0_15 = arith.constant 0 : index
    %16 = vector.load %arg1[%c2_13, %c0_14, %c0_15] : memref<3x54x1024xbf16, #tpu.memory_space<vmem>>, vector<1x54x1024xbf16>
    %17 = vector.shape_cast %16 : vector<1x54x1024xbf16> to vector<54x1024xbf16>
    %cst_16 = arith.constant dense<0.000000e+00> : vector<256x1024xf32>
    %18 = tpu.matmul %15, %17, %cst_16 {dimension_numbers = #tpu.dot_dimension_numbers<[1], [0], [0], [1], [0, 0, 1, 1], [], []>} : vector<256x54xbf16>, vector<54x1024xbf16>, vector<256x1024xf32> -> vector<256x1024xf32>
    %19 = arith.addf %12, %18 : vector<256x1024xf32>
    %c0_17 = arith.constant 0 : index
    %c0_18 = arith.constant 0 : index
    %20 = vector.load %arg2[%c0_17, %c0_18] : memref<1x1024xf32, #tpu.memory_space<vmem>>, vector<1x1024xf32>
    %21 = vector.broadcast %20 : vector<1x1024xf32> to vector<256x1024xf32>
    %22 = arith.addf %19, %21 : vector<256x1024xf32>
    %cst_19 = arith.constant 0.000000e+00 : f32
    %23 = vector.broadcast %cst_19 : f32 to vector<256x1024xf32>
    %24 = arith.maximumf %22, %23 : vector<256x1024xf32>
    %c0_20 = arith.constant 0 : index
    %c0_21 = arith.constant 0 : index
    %25 = vector.load %arg3[%c0_20, %c0_21] : memref<16x256xf32, #tpu.memory_space<vmem>>, vector<16x256xf32>
    %cst_22 = arith.constant dense<0.000000e+00> : vector<16x1024xf32>
    %26 = tpu.matmul %25, %24, %cst_22 {dimension_numbers = #tpu.dot_dimension_numbers<[1], [0], [0], [1], [0, 0, 1, 1], [], []>} : vector<16x256xf32>, vector<256x1024xf32>, vector<16x1024xf32> -> vector<16x1024xf32>
    %c0_23 = arith.constant 0 : index
    %c0_24 = arith.constant 0 : index
    %27 = vector.load %arg4[%c0_23, %c0_24] : memref<1024x128xf32, #tpu.memory_space<vmem>>, vector<1024x128xf32>
    %cst_25 = arith.constant dense<0.000000e+00> : vector<16x128xf32>
    %28 = tpu.matmul %26, %27, %cst_25 {dimension_numbers = #tpu.dot_dimension_numbers<[1], [0], [0], [1], [0, 0, 1, 1], [], []>} : vector<16x1024xf32>, vector<1024x128xf32>, vector<16x128xf32> -> vector<16x128xf32>
    %c0_26 = arith.constant 0 : index
    %c0_27 = arith.constant 0 : index
    %29 = vector.load %arg11[%c0_26, %c0_27] : memref<16x128xf32, #tpu.memory_space<vmem>>, vector<16x128xf32>
    tpu.vector_store %arg11[%c0_26, %c0_27], %28 {strides = array<i32>} : memref<16x128xf32, #tpu.memory_space<vmem>>, vector<16x128xf32>,
    %30 = vector.extract_strided_slice %28 {offsets = [0, 0], sizes = [8, 128], strides = [1, 1]} : vector<16x128xf32> to vector<8x128xf32>
    %31 = vector.extract_strided_slice %28 {offsets = [8, 0], sizes = [8, 128], strides = [1, 1]} : vector<16x128xf32> to vector<8x128xf32>
    %c0_28 = arith.constant 0 : index
    %c0_29 = arith.constant 0 : index
    %32 = vector.load %arg5[%c0_28, %c0_29] : memref<4x8xf32, #tpu.memory_space<vmem>>, vector<4x8xf32>
    %cst_30 = arith.constant dense<0.000000e+00> : vector<4x128xf32>
    %33 = tpu.matmul %32, %30, %cst_30 {dimension_numbers = #tpu.dot_dimension_numbers<[1], [0], [0], [1], [0, 0, 1, 1], [], []>} : vector<4x8xf32>, vector<8x128xf32>, vector<4x128xf32> -> vector<4x128xf32>
    %c0_31 = arith.constant 0 : index
    %c0_32 = arith.constant 0 : index
    %34 = vector.load %arg6[%c0_31, %c0_32] : memref<128x32xf32, #tpu.memory_space<vmem>>, vector<128x32xf32>
    %c0_33 = arith.constant 0 : index
    %c0_34 = arith.constant 0 : index
    %35 = vector.load %arg7[%c0_33, %c0_34] : memref<32x128xf32, #tpu.memory_space<vmem>>, vector<32x128xf32>
    %36 = arith.mulf %33, %33 : vector<4x128xf32>
    %cst_35 = arith.constant dense<0.000000e+00> : vector<4x32xf32>
    %37 = tpu.matmul %36, %34, %cst_35 {dimension_numbers = #tpu.dot_dimension_numbers<[1], [0], [0], [1], [0, 0, 1, 1], [], []>} : vector<4x128xf32>, vector<128x32xf32>, vector<4x32xf32> -> vector<4x32xf32>
    %cst_36 = arith.constant 1.000000e-24 : f32
    %38 = vector.broadcast %cst_36 : f32 to vector<4x32xf32>
    %39 = arith.maximumf %37, %38 : vector<4x32xf32>
    %40 = math.rsqrt %39 : vector<4x32xf32>
    %cst_37 = arith.constant dense<0.000000e+00> : vector<4x128xf32>
    %41 = tpu.matmul %40, %35, %cst_37 {dimension_numbers = #tpu.dot_dimension_numbers<[1], [0], [0], [1], [0, 0, 1, 1], [], []>} : vector<4x32xf32>, vector<32x128xf32>, vector<4x128xf32> -> vector<4x128xf32>
    %42 = arith.mulf %33, %41 : vector<4x128xf32>
    %43 = arith.mulf %31, %31 : vector<8x128xf32>
    %cst_38 = arith.constant dense<0.000000e+00> : vector<8x32xf32>
    %44 = tpu.matmul %43, %34, %cst_38 {dimension_numbers = #tpu.dot_dimension_numbers<[1], [0], [0], [1], [0, 0, 1, 1], [], []>} : vector<8x128xf32>, vector<128x32xf32>, vector<8x32xf32> -> vector<8x32xf32>
    %cst_39 = arith.constant 1.000000e-24 : f32
    %45 = vector.broadcast %cst_39 : f32 to vector<8x32xf32>
    %46 = arith.maximumf %44, %45 : vector<8x32xf32>
    %47 = math.rsqrt %46 : vector<8x32xf32>
    %cst_40 = arith.constant dense<0.000000e+00> : vector<8x128xf32>
    %48 = tpu.matmul %47, %35, %cst_40 {dimension_numbers = #tpu.dot_dimension_numbers<[1], [0], [0], [1], [0, 0, 1, 1], [], []>} : vector<8x32xf32>, vector<32x128xf32>, vector<8x128xf32> -> vector<8x128xf32>
    %49 = arith.mulf %31, %48 : vector<8x128xf32>
    %c0_41 = arith.constant 0 : index
    %c0_42 = arith.constant 0 : index
    %50 = vector.load %arg8[%c0_41, %c0_42] : memref<128x4xf32, #tpu.memory_space<vmem>>, vector<128x4xf32>
    %cst_43 = arith.constant dense<0.000000e+00> : vector<128x128xf32>
    %51 = tpu.matmul %50, %42, %cst_43 {dimension_numbers = #tpu.dot_dimension_numbers<[1], [0], [0], [1], [0, 0, 1, 1], [], []>} : vector<128x4xf32>, vector<4x128xf32>, vector<128x128xf32> -> vector<128x128xf32>
    %c0_44 = arith.constant 0 : index
    %c0_45 = arith.constant 0 : index
    %52 = vector.load %arg9[%c0_44, %c0_45] : memref<128x128xf32, #tpu.memory_space<vmem>>, vector<128x128xf32>
    %53 = arith.mulf %51, %52 : vector<128x128xf32>
    %54 = arith.truncf %49 : vector<8x128xf32> to vector<8x128xbf16>
    %55 = arith.truncf %53 : vector<128x128xf32> to vector<128x128xbf16>
    %cst_46 = arith.constant dense<0.000000e+00> : vector<8x128xf32>
    %56 = tpu.matmul %54, %55, %cst_46 {dimension_numbers = #tpu.dot_dimension_numbers<[1], [1], [0], [0], [0, 0, 1, 0], [], []>} : vector<8x128xbf16>, vector<128x128xbf16>, vector<8x128xf32> -> vector<8x128xf32>
    %c0_47 = arith.constant 0 : index
    %57 = memref.load %arg10[%c0_47] : memref<1xf32, #tpu.memory_space<smem>>
    %58 = vector.broadcast %57 : f32 to vector<8x128xf32>
    %59 = arith.mulf %56, %58 : vector<8x128xf32>
    %c0_48 = arith.constant 0 : index
    %c0_49 = arith.constant 0 : index
    %60 = vector.load %arg12[%c0_48, %c0_49] : memref<8x128xf32, #tpu.memory_space<vmem>>, vector<8x128xf32>
    tpu.vector_store %arg12[%c0_48, %c0_49], %59 {strides = array<i32>} : memref<8x128xf32, #tpu.memory_space<vmem>>, vector<8x128xf32>,
    return
  }
}

</mosaic_0001>

<llo_original>
// kernel: tile.8
$region0: #{tile.8}
  #allocation0 [shape = 's32[1]{0}', space=sflag, size = 0x4, scoped, tag = 'scoped memory for tile.8']
  %s0 = inlined_call_operand.vmem [shape: f32[64], index: 0, kind: input, shape index: {}]
  %s1 = inlined_call_operand.vmem [shape: f32[16,64], index: 1, kind: output, shape index: {}]
  // Predicated region
  $region2: #{tile.8} parent=0 // pred_check
    _
  $region3: #{tile.8} parent=0 // pred_check_branch
    %3 = sbr.rel (0) target = $region5
  $region4: #{tile.8} parent=0 // pred_region
    _
  $region5: #{tile.8} parent=0 // pred_fallthru
    _
  %v4 = vld [vmem:[%s0] ss:$0 sm:$0xff]
  %5 = vst [vmem:[%s1] sm:$0xff] %v4
  %s6 = scalar_lea.vmem %s1, 8
  %7 = vst [vmem:[%s6] sm:$0xff] %v4

// kernel: tile.9
$region0: #{tile.9}
  %s0 = inlined_call_operand.vmem [shape: f32[16,64], index: 0, kind: input, shape index: {}]
  %s1 = inlined_call_operand.vmem [shape: f32[1,1024], index: 1, kind: output, shape index: {}]
  $region1: #{tile.9} parent=0
    #allocation0 [shape = 'u8[32768]{0}', space=vmem, size = 0x8000, scoped, tag = 'scoped mem for output reshape']
    %v2 = vld [vmem:[%s0] ss:$2 sm:$0xff]
    %vm3 = vcmask 523264
    %4 = vst.msk [vmem:[#allocation0] ss:$8 sm:$0xf] %vm3, %v2
    %5 = vst.msk [vmem:[#allocation0] ss:$8 sm:$0xf0] %vm3, %v2
    %s6 = scalar_lea.vmem %s0, 1
    %v7 = vld [vmem:[%s6] ss:$2 sm:$0xff]
    %8 = vrot.lane.b32.xlu0 %v7, 64
    %v9 = vpop.permute.xlu0 %8
    %vm10 = vcmask 1048064
    %11 = vst.msk [vmem:[#allocation0] ss:$8 sm:$0xf] %vm10, %v9
    %12 = vst.msk [vmem:[#allocation0] ss:$8 sm:$0xf0] %vm10, %v9
    %s14 = sshll.u32 1, 1
    %s15 = ssub.s32 %s14, 1
    %v17 = vld [vmem:[#allocation0] sm:%s15]
    %s18 = sshll.u32 1, 1
    %s19 = ssub.s32 %s18, 1
    %20 = vst [vmem:[%s1] sm:%s19] %v17
    %s21 = scalar_lea.vmem [#allocation0], 8
    %v22 = vld [vmem:[%s21] sm:%s15]
    %s23 = sshll.u32 1, 1
    %s24 = ssub.s32 %s23, 1
    %s25 = scalar_lea.vmem %s1, 1
    %26 = vst [vmem:[%s25] sm:%s24] %v22
    %s27 = scalar_lea.vmem [#allocation0], 16
    %v28 = vld [vmem:[%s27] sm:%s15]
    %s29 = sshll.u32 1, 1
    %s30 = ssub.s32 %s29, 1
    %s31 = smul.addr 1, 2
    %s32 = scalar_lea.vmem %s1, %s31
    %33 = vst [vmem:[%s32] sm:%s30] %v28
    %s34 = scalar_lea.vmem [#allocation0], 24
    %v35 = vld [vmem:[%s34] sm:%s15]
    %s36 = sshll.u32 1, 1
    %s37 = ssub.s32 %s36, 1
    %s38 = smul.addr 1, 3
    %s39 = scalar_lea.vmem %s1, %s38
    %40 = vst [vmem:[%s39] sm:%s37] %v35
    %s41 = scalar_lea.vmem [#allocation0], 32
    %v42 = vld [vmem:[%s41] sm:%s15]
    %s43 = sshll.u32 1, 1
    %s44 = ssub.s32 %s43, 1
    %s45 = smul.addr 1, 4
    %s46 = scalar_lea.vmem %s1, %s45
    %47 = vst [vmem:[%s46] sm:%s44] %v42
    %s48 = scalar_lea.vmem [#allocation0], 40
    %v49 = vld [vmem:[%s48] sm:%s15]
    %s50 = sshll.u32 1, 1
    %s51 = ssub.s32 %s50, 1
    %s52 = smul.addr 1, 5
    %s53 = scalar_lea.vmem %s1, %s52
    %54 = vst [vmem:[%s53] sm:%s51] %v49
    %s55 = scalar_lea.vmem [#allocation0], 48
    %v56 = vld [vmem:[%s55] sm:%s15]
    %s57 = sshll.u32 1, 1
    %s58 = ssub.s32 %s57, 1
    %s59 = smul.addr 1, 6
    %s60 = scalar_lea.vmem %s1, %s59
    %61 = vst [vmem:[%s60] sm:%s58] %v56
    %s62 = scalar_lea.vmem [#allocation0], 56
    %v63 = vld [vmem:[%s62] sm:%s15]
    %s64 = sshll.u32 1, 1
    %s65 = ssub.s32 %s64, 1
    %s66 = smul.addr 1, 7
    %s67 = scalar_lea.vmem %s1, %s66
    %68 = vst [vmem:[%s67] sm:%s65] %v63

// kernel: meta_baseline_forward.1
$region0: #{meta_baseline_forward.1}
  #allocation0 [shape = 'u32[]', space=smem, size = 0x4, offset = 0x4, fixed_abs, tag = 'smem constant byte address 0x4 - core index']
  #allocation1 [shape = 'u32[144,128]{1,0:T(1,128)}', space=vmem, size = 0x12000, scoped, tag = 'internal scratch']
  #allocation2 [shape = 'f32[1]{0:T(128)S(6)}', space=smem, size = 0x200, scoped, tag = 'scoped memory for meta_baseline_forward.1']
  %s0 = inlined_call_operand.vmem [shape: f32[16,18,54], index: 0, kind: input, shape index: {}]
  %s1 = inlined_call_operand.vmem [shape: bf16[3,54,1024], index: 1, kind: input, shape index: {}]
  %s2 = inlined_call_operand.vmem [shape: f32[1,1024], index: 2, kind: input, shape index: {}]
  %s3 = inlined_call_operand.vmem [shape: f32[16,256], index: 3, kind: input, shape index: {}]
  %s4 = inlined_call_operand.vmem [shape: f32[1024,128], index: 4, kind: input, shape index: {}]
  %s5 = inlined_call_operand.vmem [shape: f32[4,8], index: 5, kind: input, shape index: {}]
  %s6 = inlined_call_operand.vmem [shape: f32[128,32], index: 6, kind: input, shape index: {}]
  %s7 = inlined_call_operand.vmem [shape: f32[32,128], index: 7, kind: input, shape index: {}]
  %s8 = inlined_call_operand.vmem [shape: f32[128,4], index: 8, kind: input, shape index: {}]
  %s9 = inlined_call_operand.vmem [shape: f32[128,128], index: 9, kind: input, shape index: {}]
  %s10 = inlined_call_operand.<no memory space> [shape: f32[1], index: 10, kind: input, shape index: {}]
  %s11 = inlined_call_operand.vmem [shape: f32[16,128], index: 11, kind: output, shape index: {0}]
  %s12 = inlined_call_operand.vmem [shape: f32[8,128], index: 12, kind: output, shape index: {1}]
  %13 = xla_tuple %s11, %s12
  %s14 = sld [smem:[#allocation0]]
  $region62: #{meta_baseline_forward.1} parent=0
    _
  %s16 = ssub.s32 1, %s14
  %s17 = scalar_select 0, %s16, %s14
  %18 = sst [smem:[#allocation2]] %s10
  // Predicated region
  $region2: #{meta_baseline_forward.1} parent=0 // pred_check
    _
  $region3: #{meta_baseline_forward.1} parent=0 // pred_check_branch
    %20 = sbr.rel (0) target = $region5
  $region4: #{meta_baseline_forward.1} parent=0 // pred_region
    _
  $region5: #{meta_baseline_forward.1} parent=0 // pred_fallthru
    _
  // Predicated region
  $region6: #{meta_baseline_forward.1} parent=0 // pred_check
    _
  $region7: #{meta_baseline_forward.1} parent=0 // pred_check_branch
    %22 = sbr.rel (0) target = $region9
  $region8: #{meta_baseline_forward.1} parent=0 // pred_region
    _
  $region9: #{meta_baseline_forward.1} parent=0 // pred_fallthru
    _
  // Predicated region
  $region10: #{meta_baseline_forward.1} parent=0 // pred_check
    _
  $region11: #{meta_baseline_forward.1} parent=0 // pred_check_branch
    %24 = sbr.rel (0) target = $region13
  $region12: #{meta_baseline_forward.1} parent=0 // pred_region
    _
  $region13: #{meta_baseline_forward.1} parent=0 // pred_fallthru
    _
  // Predicated region
  $region14: #{meta_baseline_forward.1} parent=0 // pred_check
    _
  $region15: #{meta_baseline_forward.1} parent=0 // pred_check_branch
    %26 = sbr.rel (0) target = $region17
  $region16: #{meta_baseline_forward.1} parent=0 // pred_region
    _
  $region17: #{meta_baseline_forward.1} parent=0 // pred_fallthru
    _
  // Predicated region
  $region18: #{meta_baseline_forward.1} parent=0 // pred_check
    _
  $region19: #{meta_baseline_forward.1} parent=0 // pred_check_branch
    %28 = sbr.rel (0) target = $region21
  $region20: #{meta_baseline_forward.1} parent=0 // pred_region
    _
  $region21: #{meta_baseline_forward.1} parent=0 // pred_fallthru
    _
  // Predicated region
  $region22: #{meta_baseline_forward.1} parent=0 // pred_check
    _
  $region23: #{meta_baseline_forward.1} parent=0 // pred_check_branch
    %30 = sbr.rel (0) target = $region25
  $region24: #{meta_baseline_forward.1} parent=0 // pred_region
    _
  $region25: #{meta_baseline_forward.1} parent=0 // pred_fallthru
    _
  // Predicated region
  $region26: #{meta_baseline_forward.1} parent=0 // pred_check
    _
  $region27: #{meta_baseline_forward.1} parent=0 // pred_check_branch
    %32 = sbr.rel (0) target = $region29
  $region28: #{meta_baseline_forward.1} parent=0 // pred_region
    _
  $region29: #{meta_baseline_forward.1} parent=0 // pred_fallthru
    _
  // Predicated region
  $region30: #{meta_baseline_forward.1} parent=0 // pred_check
    _
  $region31: #{meta_baseline_forward.1} parent=0 // pred_check_branch
    %34 = sbr.rel (0) target = $region33
  $region32: #{meta_baseline_forward.1} parent=0 // pred_region
    _
  $region33: #{meta_baseline_forward.1} parent=0 // pred_fallthru
    _
  // Predicated region
  $region34: #{meta_baseline_forward.1} parent=0 // pred_check
    _
  $region35: #{meta_baseline_forward.1} parent=0 // pred_check_branch
    %36 = sbr.rel (0) target = $region37
  $region36: #{meta_baseline_forward.1} parent=0 // pred_region
    _
  $region37: #{meta_baseline_forward.1} parent=0 // pred_fallthru
    _
  // Predicated region
  $region38: #{meta_baseline_forward.1} parent=0 // pred_check
    _
  $region39: #{meta_baseline_forward.1} parent=0 // pred_check_branch
    %38 = sbr.rel (0) target = $region41
  $region40: #{meta_baseline_forward.1} parent=0 // pred_region
    _
  $region41: #{meta_baseline_forward.1} parent=0 // pred_fallthru
    _
  // Predicated region
  $region42: #{meta_baseline_forward.1} parent=0 // pred_check
    _
  $region43: #{meta_baseline_forward.1} parent=0 // pred_check_branch
    %40 = sbr.rel (0) target = $region45
  $region44: #{meta_baseline_forward.1} parent=0 // pred_region
    _
  $region45: #{meta_baseline_forward.1} parent=0 // pred_fallthru
    _
  %v42 = vld [vmem:[%s0] sm:$0xff]
  %v43 = vld [vmem:[%s0 + $0x8] sm:$0xff]
  %v44 = vld [vmem:[%s0 + $0x18] sm:$0xff]
  %v45 = vld [vmem:[%s0 + $0x20] sm:$0xff]
  %v46 = vld [vmem:[%s0 + $0x30] sm:$0xff]
  %v47 = vld [vmem:[%s0 + $0x38] sm:$0xff]
  %v48 = vld [vmem:[%s0 + $0x48] sm:$0xff]
  %v49 = vld [vmem:[%s0 + $0x50] sm:$0xff]
  %v50 = vld [vmem:[%s0 + $0x60] sm:$0xff]
  %v51 = vld [vmem:[%s0 + $0x68] sm:$0xff]
  %v52 = vld [vmem:[%s0 + $0x78] sm:$0xff]
  %v53 = vld [vmem:[%s0 + $0x80] sm:$0xff]
  %v54 = vld [vmem:[%s0 + $0x90] sm:$0xff]
  %v55 = vld [vmem:[%s0 + $0x98] sm:$0xff]
  %v56 = vld [vmem:[%s0 + $0xa8] sm:$0xff]
  %v57 = vld [vmem:[%s0 + $0xb0] sm:$0xff]
  %v58 = vld [vmem:[%s0 + $0xc0] sm:$0xff]
  %v59 = vld [vmem:[%s0 + $0xc8] sm:$0xff]
  %v60 = vld [vmem:[%s0 + $0xd8] sm:$0xff]
  %v61 = vld [vmem:[%s0 + $0xe0] sm:$0xff]
  %v62 = vld [vmem:[%s0 + $0xf0] sm:$0xff]
  %v63 = vld [vmem:[%s0 + $0xf8] sm:$0xff]
  %v64 = vld [vmem:[%s0 + $0x108] sm:$0xff]
  %v65 = vld [vmem:[%s0 + $0x110] sm:$0xff]
  %v66 = vld [vmem:[%s0 + $0x120] sm:$0xff]
  %v67 = vld [vmem:[%s0 + $0x128] sm:$0xff]
  %v68 = vld [vmem:[%s0 + $0x138] sm:$0xff]
  %v69 = vld [vmem:[%s0 + $0x140] sm:$0xff]
  %v70 = vld [vmem:[%s0 + $0x150] sm:$0xff]
  %v71 = vld [vmem:[%s0 + $0x158] sm:$0xff]
  %v72 = vld [vmem:[%s0 + $0x168] sm:$0xff]
  %v73 = vld [vmem:[%s0 + $0x170] sm:$0xff]
  %v74 = vpack.c.bf16 %v43, %v42
  %v75 = vpack.c.bf16 %v45, %v44
  %v76 = vpack.c.bf16 %v47, %v46
  %v77 = vpack.c.bf16 %v49, %v48
  %v78 = vpack.c.bf16 %v51, %v50
  %v79 = vpack.c.bf16 %v53, %v52
  %v80 = vpack.c.bf16 %v55, %v54
  %v81 = vpack.c.bf16 %v57, %v56
  %v82 = vpack.c.bf16 %v59, %v58
  %v83 = vpack.c.bf16 %v61, %v60
  %v84 = vpack.c.bf16 %v63, %v62
  %v85 = vpack.c.bf16 %v65, %v64
  %v86 = vpack.c.bf16 %v67, %v66
  %v87 = vpack.c.bf16 %v69, %v68
  %v88 = vpack.c.bf16 %v71, %v70
  %v89 = vpack.c.bf16 %v73, %v72
  %v90 = vld [vmem:[%s1] sm:$0xff]
  %v91 = vld [vmem:[%s1 + $0x8] sm:$0xff]
  %v92 = vld [vmem:[%s1 + $0x10] sm:$0xff]
  %v93 = vld [vmem:[%s1 + $0x18] sm:$0xff]
  %v94 = vld [vmem:[%s1 + $0x20] sm:$0xff]
  %v95 = vld [vmem:[%s1 + $0x28] sm:$0xff]
  %v96 = vld [vmem:[%s1 + $0x30] sm:$0xff]
  %v97 = vld [vmem:[%s1 + $0x38] sm:$0xff]
  %v98 = vld [vmem:[%s1 + $0x40] sm:$0xff]
  %v99 = vld [vmem:[%s1 + $0x48] sm:$0xff]
  %v100 = vld [vmem:[%s1 + $0x50] sm:$0xff]
  %v101 = vld [vmem:[%s1 + $0x58] sm:$0xff]
  %v102 = vld [vmem:[%s1 + $0x60] sm:$0xff]
  %v103 = vld [vmem:[%s1 + $0x68] sm:$0xff]
  %v104 = vld [vmem:[%s1 + $0x70] sm:$0xff]
  %v105 = vld [vmem:[%s1 + $0x78] sm:$0xff]
  %v106 = vld [vmem:[%s1 + $0x80] sm:$0xff]
  %v107 = vld [vmem:[%s1 + $0x88] sm:$0xff]
  %v108 = vld [vmem:[%s1 + $0x90] sm:$0xff]
  %v109 = vld [vmem:[%s1 + $0x98] sm:$0xff]
  %v110 = vld [vmem:[%s1 + $0xa0] sm:$0xff]
  %v111 = vld [vmem:[%s1 + $0xa8] sm:$0xff]
  %v112 = vld [vmem:[%s1 + $0xb0] sm:$0xff]
  %v113 = vld [vmem:[%s1 + $0xb8] sm:$0xff]
  %v114 = vld [vmem:[%s1 + $0xc0] sm:$0x77]
  %v115 = vld [vmem:[%s1 + $0xc8] sm:$0x77]
  %v116 = vld [vmem:[%s1 + $0xd0] sm:$0x77]
  %v117 = vld [vmem:[%s1 + $0xd8] sm:$0x77]
  %v118 = vld [vmem:[%s0 + $0x1] sm:$0xff]
  %v119 = vld [vmem:[%s0 + $0x9] sm:$0xff]
  %v120 = vld [vmem:[%s0 + $0x19] sm:$0xff]
  %v121 = vld [vmem:[%s0 + $0x21] sm:$0xff]
  %v122 = vld [vmem:[%s0 + $0x31] sm:$0xff]
  %v123 = vld [vmem:[%s0 + $0x39] sm:$0xff]
  %v124 = vld [vmem:[%s0 + $0x49] sm:$0xff]
  %v125 = vld [vmem:[%s0 + $0x51] sm:$0xff]
  %v126 = vld [vmem:[%s0 + $0x61] sm:$0xff]
  %v127 = vld [vmem:[%s0 + $0x69] sm:$0xff]
  %v128 = vld [vmem:[%s0 + $0x79] sm:$0xff]
  %v129 = vld [vmem:[%s0 + $0x81] sm:$0xff]
  %v130 = vld [vmem:[%s0 + $0x91] sm:$0xff]
  %v131 = vld [vmem:[%s0 + $0x99] sm:$0xff]
  %v132 = vld [vmem:[%s0 + $0xa9] sm:$0xff]
  %v133 = vld [vmem:[%s0 + $0xb1] sm:$0xff]
  %v134 = vld [vmem:[%s0 + $0xc1] sm:$0xff]
  %v135 = vld [vmem:[%s0 + $0xc9] sm:$0xff]
  %v136 = vld [vmem:[%s0 + $0xd9] sm:$0xff]
  %v137 = vld [vmem:[%s0 + $0xe1] sm:$0xff]
  %v138 = vld [vmem:[%s0 + $0xf1] sm:$0xff]
  %v139 = vld [vmem:[%s0 + $0xf9] sm:$0xff]
  %v140 = vld [vmem:[%s0 + $0x109] sm:$0xff]
  %v141 = vld [vmem:[%s0 + $0x111] sm:$0xff]
  %v142 = vld [vmem:[%s0 + $0x121] sm:$0xff]
  %v143 = vld [vmem:[%s0 + $0x129] sm:$0xff]
  %v144 = vld [vmem:[%s0 + $0x139] sm:$0xff]
  %v145 = vld [vmem:[%s0 + $0x141] sm:$0xff]
  %v146 = vld [vmem:[%s0 + $0x151] sm:$0xff]
  %v147 = vld [vmem:[%s0 + $0x159] sm:$0xff]
  %v148 = vld [vmem:[%s0 + $0x169] sm:$0xff]
  %v149 = vld [vmem:[%s0 + $0x171] sm:$0xff]
  %v150 = vpack.c.bf16 %v119, %v118
  %v151 = vpack.c.bf16 %v121, %v120
  %v152 = vpack.c.bf16 %v123, %v122
  %v153 = vpack.c.bf16 %v125, %v124
  %v154 = vpack.c.bf16 %v127, %v126
  %v155 = vpack.c.bf16 %v129, %v128
  %v156 = vpack.c.bf16 %v131, %v130
  %v157 = vpack.c.bf16 %v133, %v132
  %v158 = vpack.c.bf16 %v135, %v134
  %v159 = vpack.c.bf16 %v137, %v136
  %v160 = vpack.c.bf16 %v139, %v138
  %v161 = vpack.c.bf16 %v141, %v140
  %v162 = vpack.c.bf16 %v143, %v142
  %v163 = vpack.c.bf16 %v145, %v144
  %v164 = vpack.c.bf16 %v147, %v146
  %v165 = vpack.c.bf16 %v149, %v148
  %s166 = scalar_lea.vmem %s1, 224
  %v167 = vld [vmem:[%s166] sm:$0xff]
  %v168 = vld [vmem:[%s166 + $0x8] sm:$0xff]
  %v169 = vld [vmem:[%s166 + $0x10] sm:$0xff]
  %v170 = vld [vmem:[%s166 + $0x18] sm:$0xff]
  %v171 = vld [vmem:[%s166 + $0x20] sm:$0xff]
  %v172 = vld [vmem:[%s166 + $0x28] sm:$0xff]
  %v173 = vld [vmem:[%s166 + $0x30] sm:$0xff]
  %v174 = vld [vmem:[%s166 + $0x38] sm:$0xff]
  %v175 = vld [vmem:[%s166 + $0x40] sm:$0xff]
  %v176 = vld [vmem:[%s166 + $0x48] sm:$0xff]
  %v177 = vld [vmem:[%s166 + $0x50] sm:$0xff]
  %v178 = vld [vmem:[%s166 + $0x58] sm:$0xff]
  %v179 = vld [vmem:[%s166 + $0x60] sm:$0xff]
  %v180 = vld [vmem:[%s166 + $0x68] sm:$0xff]
  %v181 = vld [vmem:[%s166 + $0x70] sm:$0xff]
  %v182 = vld [vmem:[%s166 + $0x78] sm:$0xff]
  %v183 = vld [vmem:[%s166 + $0x80] sm:$0xff]
  %v184 = vld [vmem:[%s166 + $0x88] sm:$0xff]
  %v185 = vld [vmem:[%s166 + $0x90] sm:$0xff]
  %v186 = vld [vmem:[%s166 + $0x98] sm:$0xff]
  %v187 = vld [vmem:[%s166 + $0xa0] sm:$0xff]
  %v188 = vld [vmem:[%s166 + $0xa8] sm:$0xff]
  %v189 = vld [vmem:[%s166 + $0xb0] sm:$0xff]
  %v190 = vld [vmem:[%s166 + $0xb8] sm:$0xff]
  %v191 = vld [vmem:[%s166 + $0xc0] sm:$0x77]
  %v192 = vld [vmem:[%s166 + $0xc8] sm:$0x77]
  %v193 = vld [vmem:[%s166 + $0xd0] sm:$0x77]
  %v194 = vld [vmem:[%s166 + $0xd8] sm:$0x77]
  %v223 = vunpack.c.l.b16 %v167
  %v224 = vunpack.c.h.b16 %v167
  %v225 = vunpack.c.l.b16 %v168
  %v226 = vunpack.c.h.b16 %v168
  %v227 = vunpack.c.l.b16 %v169
  %v228 = vunpack.c.h.b16 %v169
  %v229 = vunpack.c.l.b16 %v170
  %v230 = vunpack.c.h.b16 %v170
  %v231 = vunpack.c.l.b16 %v171
  %v232 = vunpack.c.h.b16 %v171
  %v233 = vunpack.c.l.b16 %v172
  %v234 = vunpack.c.h.b16 %v172
  %v235 = vunpack.c.l.b16 %v173
  %v236 = vunpack.c.h.b16 %v173
  %v237 = vunpack.c.l.b16 %v174
  %v238 = vunpack.c.h.b16 %v174
  %v239 = vunpack.c.l.b16 %v175
  %v240 = vunpack.c.h.b16 %v175
  %v241 = vunpack.c.l.b16 %v176
  %v242 = vunpack.c.h.b16 %v176
  %v243 = vunpack.c.l.b16 %v177
  %v244 = vunpack.c.h.b16 %v177
  %v245 = vunpack.c.l.b16 %v178
  %v246 = vunpack.c.h.b16 %v178
  %v247 = vunpack.c.l.b16 %v179
  %v248 = vunpack.c.h.b16 %v179
  %v249 = vunpack.c.l.b16 %v180
  %v250 = vunpack.c.h.b16 %v180
  %v251 = vunpack.c.l.b16 %v181
  %v252 = vunpack.c.h.b16 %v181
  %v253 = vunpack.c.l.b16 %v182
  %v254 = vunpack.c.h.b16 %v182
  %v255 = vunpack.c.l.b16 %v183
  %v256 = vunpack.c.h.b16 %v183
  %v257 = vunpack.c.l.b16 %v184
  %v258 = vunpack.c.h.b16 %v184
  %v259 = vunpack.c.l.b16 %v185
  %v260 = vunpack.c.h.b16 %v185
  %v261 = vunpack.c.l.b16 %v186
  %v262 = vunpack.c.h.b16 %v186
  %v263 = vunpack.c.l.b16 %v187
  %v264 = vunpack.c.h.b16 %v187
  %v265 = vunpack.c.l.b16 %v188
  %v266 = vunpack.c.h.b16 %v188
  %v267 = vunpack.c.l.b16 %v189
  %v268 = vunpack.c.h.b16 %v189
  %v269 = vunpack.c.l.b16 %v190
  %v270 = vunpack.c.h.b16 %v190
  %v271 = vunpack.c.l.b16 %v191
  %v272 = vunpack.c.h.b16 %v191
  %v273 = vunpack.c.l.b16 %v192
  %v274 = vunpack.c.h.b16 %v192
  %v275 = vunpack.c.l.b16 %v193
  %v276 = vunpack.c.h.b16 %v193
  %v277 = vunpack.c.l.b16 %v194
  %v278 = vunpack.c.h.b16 %v194
  %v279 = vpack.c.b16 %v231, %v223
  %v280 = vpack.c.b16 %v232, %v224
  %v281 = vpack.c.b16 %v233, %v225
  %v282 = vpack.c.b16 %v234, %v226
  %v283 = vpack.c.b16 %v235, %v227
  %v284 = vpack.c.b16 %v236, %v228
  %v285 = vpack.c.b16 %v237, %v229
  %v286 = vpack.c.b16 %v238, %v230
  %v287 = vpack.c.b16 %v247, %v239
  %v288 = vpack.c.b16 %v248, %v240
  %v289 = vpack.c.b16 %v249, %v241
  %v290 = vpack.c.b16 %v250, %v242
  %v291 = vpack.c.b16 %v251, %v243
  %v292 = vpack.c.b16 %v252, %v244
  %v293 = vpack.c.b16 %v253, %v245
  %v294 = vpack.c.b16 %v254, %v246
  %v295 = vpack.c.b16 %v263, %v255
  %v296 = vpack.c.b16 %v264, %v256
  %v297 = vpack.c.b16 %v265, %v257
  %v298 = vpack.c.b16 %v266, %v258
  %v299 = vpack.c.b16 %v267, %v259
  %v300 = vpack.c.b16 %v268, %v260
  %v301 = vpack.c.b16 %v269, %v261
  %v302 = vpack.c.b16 %v270, %v262
  %v303 = vpack.c.b16 %v271, %v271
  %v304 = vpack.c.b16 %v272, %v272
  %v305 = vpack.c.b16 %v273, %v273
  %v306 = vpack.c.b16 %v274, %v274
  %v307 = vpack.c.b16 %v275, %v275
  %v308 = vpack.c.b16 %v276, %v276
  %v309 = vpack.c.b16 %v277, %v277
  %v310 = vpack.c.b16 %v278, %v278
  %vm335 = vcmask 441344
  %v337 = vsel %vm335, %v150, 0
  %v340 = vsel %vm335, %v151, 0
  %v343 = vsel %vm335, %v152, 0
  %v346 = vsel %vm335, %v153, 0
  %v349 = vsel %vm335, %v154, 0
  %v352 = vsel %vm335, %v155, 0
  %v355 = vsel %vm335, %v156, 0
  %v358 = vsel %vm335, %v157, 0
  %v361 = vsel %vm335, %v158, 0
  %v364 = vsel %vm335, %v159, 0
  %v367 = vsel %vm335, %v160, 0
  %v370 = vsel %vm335, %v161, 0
  %v373 = vsel %vm335, %v162, 0
  %v376 = vsel %vm335, %v163, 0
  %v379 = vsel %vm335, %v164, 0
  %v382 = vsel %vm335, %v165, 0
  %vm384 = vcmask 1042432
  %v386 = vsel %vm384, %v303, 0
  %v389 = vsel %vm384, %v304, 0
  %v392 = vsel %vm384, %v305, 0
  %v395 = vsel %vm384, %v306, 0
  %v398 = vsel %vm384, %v307, 0
  %v401 = vsel %vm384, %v308, 0
  %v404 = vsel %vm384, %v309, 0
  %v407 = vsel %vm384, %v310, 0
  %409 = vmatprep.subr.bf16.mxu0 0
  %410 = vmatpush1.bf16.msra.mxu0 0
  %411 = vmatprep.subr.bf16.mxu0 0
  %412 = vmatpush1.bf16.msra.mxu0 0
  %413 = vmatprep.subr.bf16.mxu0 0
  %414 = vmatpush1.bf16.msra.mxu0 0
  %415 = vmatprep.subr.bf16.mxu0 0
  %416 = vmatpush1.bf16.msra.mxu0 0
  %417 = vmatprep.subr.bf16.mxu0 %v389
  %418 = vmatpush1.bf16.msra.mxu0 %v386
  %419 = vmatprep.subr.bf16.mxu0 %v296
  %420 = vmatpush1.bf16.msra.mxu0 %v295
  %421 = vmatprep.subr.bf16.mxu0 %v288
  %422 = vmatpush1.bf16.msra.mxu0 %v287
  %423 = vmatprep.subr.bf16.mxu0 %v280
  %424 = vmatpush1.bf16.msra.mxu0 %v279
  %425 = vmatprep.subr.bf16.mxu0 0
  %426 = vmatpush2.bf16.msra.mxu0 0
  %427 = vmatprep.subr.bf16.mxu0 0
  %428 = vmatpush2.bf16.msra.mxu0 0
  %429 = vmatprep.subr.bf16.mxu0 0
  %430 = vmatpush2.bf16.msra.mxu0 0
  %431 = vmatprep.subr.bf16.mxu0 0
  %432 = vmatpush2.bf16.msra.mxu0 0
  %433 = vmatprep.subr.bf16.mxu0 0
  %434 = vmatpush2.bf16.msra.mxu0 0
  %435 = vmatprep.subr.bf16.mxu0 0
  %436 = vmatpush2.bf16.msra.mxu0 0
  %437 = vmatprep.subr.bf16.mxu0 0
  %438 = vmatpush2.bf16.msra.mxu0 0
  %439 = vmatprep.subr.bf16.mxu0 0
  %440 = vmatpush2.bf16.msra.mxu0 0
  %441 = vmatprep.mubr.bf16.mxu0 0
  %442 = vmatmul.mubr.bf16.gmra.mxu0 %v337
  %v443 = vpop.f32.mrf.mxu0
  %v444 = vadd.f32 0.0, %v443
  %v445 = vpop.f32.mrf.mxu0
  %v446 = vadd.f32 0.0, %v445
  %v447 = vpop.f32.mrf.mxu0
  %v448 = vadd.f32 0.0, %v447
  %v449 = vpop.f32.mrf.mxu0
  %v450 = vadd.f32 0.0, %v449
  %451 = vmatprep.mubr.bf16.mxu0 0
  %452 = vmatmul.mubr.bf16.gmra.mxu0 %v340
  %v453 = vpop.f32.mrf.mxu0
  %v454 = vadd.f32 0.0, %v453
  %v455 = vpop.f32.mrf.mxu0
  %v456 = vadd.f32 0.0, %v455
  %v457 = vpop.f32.mrf.mxu0
  %v458 = vadd.f32 0.0, %v457
  %v459 = vpop.f32.mrf.mxu0
  %v460 = vadd.f32 0.0, %v459
  %461 = vmatprep.mubr.bf16.mxu0 0
  %462 = vmatmul.mubr.bf16.gmra.mxu0 %v343
  %v463 = vpop.f32.mrf.mxu0
  %v464 = vadd.f32 0.0, %v463
  %v465 = vpop.f32.mrf.mxu0
  %v466 = vadd.f32 0.0, %v465
  %v467 = vpop.f32.mrf.mxu0
  %v468 = vadd.f32 0.0, %v467
  %v469 = vpop.f32.mrf.mxu0
  %v470 = vadd.f32 0.0, %v469
  %471 = vmatprep.mubr.bf16.mxu0 0
  %472 = vmatmul.mubr.bf16.gmra.mxu0 %v346
  %v473 = vpop.f32.mrf.mxu0
  %v474 = vadd.f32 0.0, %v473
  %v475 = vpop.f32.mrf.mxu0
  %v476 = vadd.f32 0.0, %v475
  %v477 = vpop.f32.mrf.mxu0
  %v478 = vadd.f32 0.0, %v477
  %v479 = vpop.f32.mrf.mxu0
  %v480 = vadd.f32 0.0, %v479
  %481 = vmatprep.mubr.bf16.mxu0 0
  %482 = vmatmul.mubr.bf16.gmra.mxu0 %v349
  %v483 = vpop.f32.mrf.mxu0
  %v484 = vadd.f32 0.0, %v483
  %v485 = vpop.f32.mrf.mxu0
  %v486 = vadd.f32 0.0, %v485
  %v487 = vpop.f32.mrf.mxu0
  %v488 = vadd.f32 0.0, %v487
  %v489 = vpop.f32.mrf.mxu0
  %v490 = vadd.f32 0.0, %v489
  %491 = vmatprep.mubr.bf16.mxu0 0
  %492 = vmatmul.mubr.bf16.gmra.mxu0 %v352
  %v493 = vpop.f32.mrf.mxu0
  %v494 = vadd.f32 0.0, %v493
  %v495 = vpop.f32.mrf.mxu0
  %v496 = vadd.f32 0.0, %v495
  %v497 = vpop.f32.mrf.mxu0
  %v498 = vadd.f32 0.0, %v497
  %v499 = vpop.f32.mrf.mxu0
  %v500 = vadd.f32 0.0, %v499
  %501 = vmatprep.mubr.bf16.mxu0 0
  %502 = vmatmul.mubr.bf16.gmra.mxu0 %v355
  %v503 = vpop.f32.mrf.mxu0
  %v504 = vadd.f32 0.0, %v503
  %v505 = vpop.f32.mrf.mxu0
  %v506 = vadd.f32 0.0, %v505
  %v507 = vpop.f32.mrf.mxu0
  %v508 = vadd.f32 0.0, %v507
  %v509 = vpop.f32.mrf.mxu0
  %v510 = vadd.f32 0.0, %v509
  %511 = vmatprep.mubr.bf16.mxu0 0
  %512 = vmatmul.mubr.bf16.gmra.mxu0 %v358
  %v513 = vpop.f32.mrf.mxu0
  %v514 = vadd.f32 0.0, %v513
  %v515 = vpop.f32.mrf.mxu0
  %v516 = vadd.f32 0.0, %v515
  %v517 = vpop.f32.mrf.mxu0
  %v518 = vadd.f32 0.0, %v517
  %v519 = vpop.f32.mrf.mxu0
  %v520 = vadd.f32 0.0, %v519
  %521 = vmatprep.mubr.bf16.mxu0 0
  %522 = vmatmul.mubr.bf16.gmra.mxu0 %v361
  %v523 = vpop.f32.mrf.mxu0
  %v524 = vadd.f32 0.0, %v523
  %v525 = vpop.f32.mrf.mxu0
  %v526 = vadd.f32 0.0, %v525
  %v527 = vpop.f32.mrf.mxu0
  %v528 = vadd.f32 0.0, %v527
  %v529 = vpop.f32.mrf.mxu0
  %v530 = vadd.f32 0.0, %v529
  %531 = vmatprep.mubr.bf16.mxu0 0
  %532 = vmatmul.mubr.bf16.gmra.mxu0 %v364
  %v533 = vpop.f32.mrf.mxu0
  %v534 = vadd.f32 0.0, %v533
  %v535 = vpop.f32.mrf.mxu0
  %v536 = vadd.f32 0.0, %v535
  %v537 = vpop.f32.mrf.mxu0
  %v538 = vadd.f32 0.0, %v537
  %v539 = vpop.f32.mrf.mxu0
  %v540 = vadd.f32 0.0, %v539
  %541 = vmatprep.mubr.bf16.mxu0 0
  %542 = vmatmul.mubr.bf16.gmra.mxu0 %v367
  %v543 = vpop.f32.mrf.mxu0
  %v544 = vadd.f32 0.0, %v543
  %v545 = vpop.f32.mrf.mxu0
  %v546 = vadd.f32 0.0, %v545
  %v547 = vpop.f32.mrf.mxu0
  %v548 = vadd.f32 0.0, %v547
  %v549 = vpop.f32.mrf.mxu0
  %v550 = vadd.f32 0.0, %v549
  %551 = vmatprep.mubr.bf16.mxu0 0
  %552 = vmatmul.mubr.bf16.gmra.mxu0 %v370
  %v553 = vpop.f32.mrf.mxu0
  %v554 = vadd.f32 0.0, %v553
  %v555 = vpop.f32.mrf.mxu0
  %v556 = vadd.f32 0.0, %v555
  %v557 = vpop.f32.mrf.mxu0
  %v558 = vadd.f32 0.0, %v557
  %v559 = vpop.f32.mrf.mxu0
  %v560 = vadd.f32 0.0, %v559
  %561 = vmatprep.mubr.bf16.mxu0 0
  %562 = vmatmul.mubr.bf16.gmra.mxu0 %v373
  %v563 = vpop.f32.mrf.mxu0
  %v564 = vadd.f32 0.0, %v563
  %v565 = vpop.f32.mrf.mxu0
  %v566 = vadd.f32 0.0, %v565
  %v567 = vpop.f32.mrf.mxu0
  %v568 = vadd.f32 0.0, %v567
  %v569 = vpop.f32.mrf.mxu0
  %v570 = vadd.f32 0.0, %v569
  %571 = vmatprep.mubr.bf16.mxu0 0
  %572 = vmatmul.mubr.bf16.gmra.mxu0 %v376
  %v573 = vpop.f32.mrf.mxu0
  %v574 = vadd.f32 0.0, %v573
  %v575 = vpop.f32.mrf.mxu0
  %v576 = vadd.f32 0.0, %v575
  %v577 = vpop.f32.mrf.mxu0
  %v578 = vadd.f32 0.0, %v577
  %v579 = vpop.f32.mrf.mxu0
  %v580 = vadd.f32 0.0, %v579
  %581 = vmatprep.mubr.bf16.mxu0 0
  %582 = vmatmul.mubr.bf16.gmra.mxu0 %v379
  %v583 = vpop.f32.mrf.mxu0
  %v584 = vadd.f32 0.0, %v583
  %v585 = vpop.f32.mrf.mxu0
  %v586 = vadd.f32 0.0, %v585
  %v587 = vpop.f32.mrf.mxu0
  %v588 = vadd.f32 0.0, %v587
  %v589 = vpop.f32.mrf.mxu0
  %v590 = vadd.f32 0.0, %v589
  %591 = vmatprep.mubr.bf16.mxu0 0
  %592 = vmatmul.mubr.bf16.gmra.mxu0 %v382
  %v593 = vpop.f32.mrf.mxu0
  %v594 = vadd.f32 0.0, %v593
  %v595 = vpop.f32.mrf.mxu0
  %v596 = vadd.f32 0.0, %v595
  %v597 = vpop.f32.mrf.mxu0
  %v598 = vadd.f32 0.0, %v597
  %v599 = vpop.f32.mrf.mxu0
  %v600 = vadd.f32 0.0, %v599
  %601 = vdwg.mxu0
  %602 = vmatprep.subr.bf16.mxu0 0
  %603 = vmatpush1.bf16.msra.mxu0 0
  %604 = vmatprep.subr.bf16.mxu0 0
  %605 = vmatpush1.bf16.msra.mxu0 0
  %606 = vmatprep.subr.bf16.mxu0 0
  %607 = vmatpush1.bf16.msra.mxu0 0
  %608 = vmatprep.subr.bf16.mxu0 0
  %609 = vmatpush1.bf16.msra.mxu0 0
  %610 = vmatprep.subr.bf16.mxu0 %v395
  %611 = vmatpush1.bf16.msra.mxu0 %v392
  %612 = vmatprep.subr.bf16.mxu0 %v298
  %613 = vmatpush1.bf16.msra.mxu0 %v297
  %614 = vmatprep.subr.bf16.mxu0 %v290
  %615 = vmatpush1.bf16.msra.mxu0 %v289
  %616 = vmatprep.subr.bf16.mxu0 %v282
  %617 = vmatpush1.bf16.msra.mxu0 %v281
  %618 = vmatprep.subr.bf16.mxu0 0
  %619 = vmatpush2.bf16.msra.mxu0 0
  %620 = vmatprep.subr.bf16.mxu0 0
  %621 = vmatpush2.bf16.msra.mxu0 0
  %622 = vmatprep.subr.bf16.mxu0 0
  %623 = vmatpush2.bf16.msra.mxu0 0
  %624 = vmatprep.subr.bf16.mxu0 0
  %625 = vmatpush2.bf16.msra.mxu0 0
  %626 = vmatprep.subr.bf16.mxu0 0
  %627 = vmatpush2.bf16.msra.mxu0 0
  %628 = vmatprep.subr.bf16.mxu0 0
  %629 = vmatpush2.bf16.msra.mxu0 0
  %630 = vmatprep.subr.bf16.mxu0 0
  %631 = vmatpush2.bf16.msra.mxu0 0
  %632 = vmatprep.subr.bf16.mxu0 0
  %633 = vmatpush2.bf16.msra.mxu0 0
  %634 = vmatprep.mubr.bf16.mxu0 0
  %635 = vmatmul.mubr.bf16.gmra.mxu0 %v337
  %v636 = vpop.f32.mrf.mxu0
  %v637 = vadd.f32 0.0, %v636
  %v638 = vpop.f32.mrf.mxu0
  %v639 = vadd.f32 0.0, %v638
  %v640 = vpop.f32.mrf.mxu0
  %v641 = vadd.f32 0.0, %v640
  %v642 = vpop.f32.mrf.mxu0
  %v643 = vadd.f32 0.0, %v642
  %644 = vmatprep.mubr.bf16.mxu0 0
  %645 = vmatmul.mubr.bf16.gmra.mxu0 %v340
  %v646 = vpop.f32.mrf.mxu0
  %v647 = vadd.f32 0.0, %v646
  %v648 = vpop.f32.mrf.mxu0
  %v649 = vadd.f32 0.0, %v648
  %v650 = vpop.f32.mrf.mxu0
  %v651 = vadd.f32 0.0, %v650
  %v652 = vpop.f32.mrf.mxu0
  %v653 = vadd.f32 0.0, %v652
  %654 = vmatprep.mubr.bf16.mxu0 0
  %655 = vmatmul.mubr.bf16.gmra.mxu0 %v343
  %v656 = vpop.f32.mrf.mxu0
  %v657 = vadd.f32 0.0, %v656
  %v658 = vpop.f32.mrf.mxu0
  %v659 = vadd.f32 0.0, %v658
  %v660 = vpop.f32.mrf.mxu0
  %v661 = vadd.f32 0.0, %v660
  %v662 = vpop.f32.mrf.mxu0
  %v663 = vadd.f32 0.0, %v662
  %664 = vmatprep.mubr.bf16.mxu0 0
  %665 = vmatmul.mubr.bf16.gmra.mxu0 %v346
  %v666 = vpop.f32.mrf.mxu0
  %v667 = vadd.f32 0.0, %v666
  %v668 = vpop.f32.mrf.mxu0
  %v669 = vadd.f32 0.0, %v668
  %v670 = vpop.f32.mrf.mxu0
  %v671 = vadd.f32 0.0, %v670
  %v672 = vpop.f32.mrf.mxu0
  %v673 = vadd.f32 0.0, %v672
  %674 = vmatprep.mubr.bf16.mxu0 0
  %675 = vmatmul.mubr.bf16.gmra.mxu0 %v349
  %v676 = vpop.f32.mrf.mxu0
  %v677 = vadd.f32 0.0, %v676
  %v678 = vpop.f32.mrf.mxu0
  %v679 = vadd.f32 0.0, %v678
  %v680 = vpop.f32.mrf.mxu0
  %v681 = vadd.f32 0.0, %v680
  %v682 = vpop.f32.mrf.mxu0
  %v683 = vadd.f32 0.0, %v682
  %684 = vmatprep.mubr.bf16.mxu0 0
  %685 = vmatmul.mubr.bf16.gmra.mxu0 %v352
  %v686 = vpop.f32.mrf.mxu0
  %v687 = vadd.f32 0.0, %v686
  %v688 = vpop.f32.mrf.mxu0
  %v689 = vadd.f32 0.0, %v688
  %v690 = vpop.f32.mrf.mxu0
  %v691 = vadd.f32 0.0, %v690
  %v692 = vpop.f32.mrf.mxu0
  %v693 = vadd.f32 0.0, %v692
  %694 = vmatprep.mubr.bf16.mxu0 0
  %695 = vmatmul.mubr.bf16.gmra.mxu0 %v355
  %v696 = vpop.f32.mrf.mxu0
  %v697 = vadd.f32 0.0, %v696
  %v698 = vpop.f32.mrf.mxu0
  %v699 = vadd.f32 0.0, %v698
  %v700 = vpop.f32.mrf.mxu0
  %v701 = vadd.f32 0.0, %v700
  %v702 = vpop.f32.mrf.mxu0
  %v703 = vadd.f32 0.0, %v702
  %704 = vmatprep.mubr.bf16.mxu0 0
  %705 = vmatmul.mubr.bf16.gmra.mxu0 %v358
  %v706 = vpop.f32.mrf.mxu0
  %v707 = vadd.f32 0.0, %v706
  %v708 = vpop.f32.mrf.mxu0
  %v709 = vadd.f32 0.0, %v708
  %v710 = vpop.f32.mrf.mxu0
  %v711 = vadd.f32 0.0, %v710
  %v712 = vpop.f32.mrf.mxu0
  %v713 = vadd.f32 0.0, %v712
  %714 = vmatprep.mubr.bf16.mxu0 0
  %715 = vmatmul.mubr.bf16.gmra.mxu0 %v361
  %v716 = vpop.f32.mrf.mxu0
  %v717 = vadd.f32 0.0, %v716
  %v718 = vpop.f32.mrf.mxu0
  %v719 = vadd.f32 0.0, %v718
  %v720 = vpop.f32.mrf.mxu0
  %v721 = vadd.f32 0.0, %v720
  %v722 = vpop.f32.mrf.mxu0
  %v723 = vadd.f32 0.0, %v722
  %724 = vmatprep.mubr.bf16.mxu0 0
  %725 = vmatmul.mubr.bf16.gmra.mxu0 %v364
  %v726 = vpop.f32.mrf.mxu0
  %v727 = vadd.f32 0.0, %v726
  %v728 = vpop.f32.mrf.mxu0
  %v729 = vadd.f32 0.0, %v728
  %v730 = vpop.f32.mrf.mxu0
  %v731 = vadd.f32 0.0, %v730
  %v732 = vpop.f32.mrf.mxu0
  %v733 = vadd.f32 0.0, %v732
  %734 = vmatprep.mubr.bf16.mxu0 0
  %735 = vmatmul.mubr.bf16.gmra.mxu0 %v367
  %v736 = vpop.f32.mrf.mxu0
  %v737 = vadd.f32 0.0, %v736
  %v738 = vpop.f32.mrf.mxu0
  %v739 = vadd.f32 0.0, %v738
  %v740 = vpop.f32.mrf.mxu0
  %v741 = vadd.f32 0.0, %v740
  %v742 = vpop.f32.mrf.mxu0
  %v743 = vadd.f32 0.0, %v742
  %744 = vmatprep.mubr.bf16.mxu0 0
  %745 = vmatmul.mubr.bf16.gmra.mxu0 %v370
  %v746 = vpop.f32.mrf.mxu0
  %v747 = vadd.f32 0.0, %v746
  %v748 = vpop.f32.mrf.mxu0
  %v749 = vadd.f32 0.0, %v748
  %v750 = vpop.f32.mrf.mxu0
  %v751 = vadd.f32 0.0, %v750
  %v752 = vpop.f32.mrf.mxu0
  %v753 = vadd.f32 0.0, %v752
  %754 = vmatprep.mubr.bf16.mxu0 0
  %755 = vmatmul.mubr.bf16.gmra.mxu0 %v373
  %v756 = vpop.f32.mrf.mxu0
  %v757 = vadd.f32 0.0, %v756
  %v758 = vpop.f32.mrf.mxu0
  %v759 = vadd.f32 0.0, %v758
  %v760 = vpop.f32.mrf.mxu0
  %v761 = vadd.f32 0.0, %v760
  %v762 = vpop.f32.mrf.mxu0
  %v763 = vadd.f32 0.0, %v762
  %764 = vmatprep.mubr.bf16.mxu0 0
  %765 = vmatmul.mubr.bf16.gmra.mxu0 %v376
  %v766 = vpop.f32.mrf.mxu0
  %v767 = vadd.f32 0.0, %v766
  %v768 = vpop.f32.mrf.mxu0
  %v769 = vadd.f32 0.0, %v768
  %v770 = vpop.f32.mrf.mxu0
  %v771 = vadd.f32 0.0, %v770
  %v772 = vpop.f32.mrf.mxu0
  %v773 = vadd.f32 0.0, %v772
  %774 = vmatprep.mubr.bf16.mxu0 0
  %775 = vmatmul.mubr.bf16.gmra.mxu0 %v379
  %v776 = vpop.f32.mrf.mxu0
  %v777 = vadd.f32 0.0, %v776
  %v778 = vpop.f32.mrf.mxu0
  %v779 = vadd.f32 0.0, %v778
  %v780 = vpop.f32.mrf.mxu0
  %v781 = vadd.f32 0.0, %v780
  %v782 = vpop.f32.mrf.mxu0
  %v783 = vadd.f32 0.0, %v782
  %784 = vmatprep.mubr.bf16.mxu0 0
  %785 = vmatmul.mubr.bf16.gmra.mxu0 %v382
  %v786 = vpop.f32.mrf.mxu0
  %v787 = vadd.f32 0.0, %v786
  %v788 = vpop.f32.mrf.mxu0
  %v789 = vadd.f32 0.0, %v788
  %v790 = vpop.f32.mrf.mxu0
  %v791 = vadd.f32 0.0, %v790
  %v792 = vpop.f32.mrf.mxu0
  %v793 = vadd.f32 0.0, %v792
  %794 = vdwg.mxu0
  %795 = vmatprep.subr.bf16.mxu0 0
  %796 = vmatpush1.bf16.msra.mxu0 0
  %797 = vmatprep.subr.bf16.mxu0 0
  %798 = vmatpush1.bf16.msra.mxu0 0
  %799 = vmatprep.subr.bf16.mxu0 0
  %800 = vmatpush1.bf16.msra.mxu0 0
  %801 = vmatprep.subr.bf16.mxu0 0
  %802 = vmatpush1.bf16.msra.mxu0 0
  %803 = vmatprep.subr.bf16.mxu0 %v401
  %804 = vmatpush1.bf16.msra.mxu0 %v398
  %805 = vmatprep.subr.bf16.mxu0 %v300
  %806 = vmatpush1.bf16.msra.mxu0 %v299
  %807 = vmatprep.subr.bf16.mxu0 %v292
  %808 = vmatpush1.bf16.msra.mxu0 %v291
  %809 = vmatprep.subr.bf16.mxu0 %v284
  %810 = vmatpush1.bf16.msra.mxu0 %v283
  %811 = vmatprep.subr.bf16.mxu0 0
  %812 = vmatpush2.bf16.msra.mxu0 0
  %813 = vmatprep.subr.bf16.mxu0 0
  %814 = vmatpush2.bf16.msra.mxu0 0
  %815 = vmatprep.subr.bf16.mxu0 0
  %816 = vmatpush2.bf16.msra.mxu0 0
  %817 = vmatprep.subr.bf16.mxu0 0
  %818 = vmatpush2.bf16.msra.mxu0 0
  %819 = vmatprep.subr.bf16.mxu0 0
  %820 = vmatpush2.bf16.msra.mxu0 0
  %821 = vmatprep.subr.bf16.mxu0 0
  %822 = vmatpush2.bf16.msra.mxu0 0
  %823 = vmatprep.subr.bf16.mxu0 0
  %824 = vmatpush2.bf16.msra.mxu0 0
  %825 = vmatprep.subr.bf16.mxu0 0
  %826 = vmatpush2.bf16.msra.mxu0 0
  %827 = vmatprep.mubr.bf16.mxu0 0
  %828 = vmatmul.mubr.bf16.gmra.mxu0 %v337
  %v829 = vpop.f32.mrf.mxu0
  %v830 = vadd.f32 0.0, %v829
  %v831 = vpop.f32.mrf.mxu0
  %v832 = vadd.f32 0.0, %v831
  %v833 = vpop.f32.mrf.mxu0
  %v834 = vadd.f32 0.0, %v833
  %v835 = vpop.f32.mrf.mxu0
  %v836 = vadd.f32 0.0, %v835
  %837 = vmatprep.mubr.bf16.mxu0 0
  %838 = vmatmul.mubr.bf16.gmra.mxu0 %v340
  %v839 = vpop.f32.mrf.mxu0
  %v840 = vadd.f32 0.0, %v839
  %v841 = vpop.f32.mrf.mxu0
  %v842 = vadd.f32 0.0, %v841
  %v843 = vpop.f32.mrf.mxu0
  %v844 = vadd.f32 0.0, %v843
  %v845 = vpop.f32.mrf.mxu0
  %v846 = vadd.f32 0.0, %v845
  %847 = vmatprep.mubr.bf16.mxu0 0
  %848 = vmatmul.mubr.bf16.gmra.mxu0 %v343
  %v849 = vpop.f32.mrf.mxu0
  %v850 = vadd.f32 0.0, %v849
  %v851 = vpop.f32.mrf.mxu0
  %v852 = vadd.f32 0.0, %v851
  %v853 = vpop.f32.mrf.mxu0
  %v854 = vadd.f32 0.0, %v853
  %v855 = vpop.f32.mrf.mxu0
  %v856 = vadd.f32 0.0, %v855
  %857 = vmatprep.mubr.bf16.mxu0 0
  %858 = vmatmul.mubr.bf16.gmra.mxu0 %v346
  %v859 = vpop.f32.mrf.mxu0
  %v860 = vadd.f32 0.0, %v859
  %v861 = vpop.f32.mrf.mxu0
  %v862 = vadd.f32 0.0, %v861
  %v863 = vpop.f32.mrf.mxu0
  %v864 = vadd.f32 0.0, %v863
  %v865 = vpop.f32.mrf.mxu0
  %v866 = vadd.f32 0.0, %v865
  %867 = vmatprep.mubr.bf16.mxu0 0
  %868 = vmatmul.mubr.bf16.gmra.mxu0 %v349
  %v869 = vpop.f32.mrf.mxu0
  %v870 = vadd.f32 0.0, %v869
  %v871 = vpop.f32.mrf.mxu0
  %v872 = vadd.f32 0.0, %v871
  %v873 = vpop.f32.mrf.mxu0
  %v874 = vadd.f32 0.0, %v873
  %v875 = vpop.f32.mrf.mxu0
  %v876 = vadd.f32 0.0, %v875
  %877 = vmatprep.mubr.bf16.mxu0 0
  %878 = vmatmul.mubr.bf16.gmra.mxu0 %v352
  %v879 = vpop.f32.mrf.mxu0
  %v880 = vadd.f32 0.0, %v879
  %v881 = vpop.f32.mrf.mxu0
  %v882 = vadd.f32 0.0, %v881
  %v883 = vpop.f32.mrf.mxu0
  %v884 = vadd.f32 0.0, %v883
  %v885 = vpop.f32.mrf.mxu0
  %v886 = vadd.f32 0.0, %v885
  %887 = vmatprep.mubr.bf16.mxu0 0
  %888 = vmatmul.mubr.bf16.gmra.mxu0 %v355
  %v889 = vpop.f32.mrf.mxu0
  %v890 = vadd.f32 0.0, %v889
  %v891 = vpop.f32.mrf.mxu0
  %v892 = vadd.f32 0.0, %v891
  %v893 = vpop.f32.mrf.mxu0
  %v894 = vadd.f32 0.0, %v893
  %v895 = vpop.f32.mrf.mxu0
  %v896 = vadd.f32 0.0, %v895
  %897 = vmatprep.mubr.bf16.mxu0 0
  %898 = vmatmul.mubr.bf16.gmra.mxu0 %v358
  %v899 = vpop.f32.mrf.mxu0
  %v900 = vadd.f32 0.0, %v899
  %v901 = vpop.f32.mrf.mxu0
  %v902 = vadd.f32 0.0, %v901
  %v903 = vpop.f32.mrf.mxu0
  %v904 = vadd.f32 0.0, %v903
  %v905 = vpop.f32.mrf.mxu0
  %v906 = vadd.f32 0.0, %v905
  %907 = vmatprep.mubr.bf16.mxu0 0
  %908 = vmatmul.mubr.bf16.gmra.mxu0 %v361
  %v909 = vpop.f32.mrf.mxu0
  %v910 = vadd.f32 0.0, %v909
  %v911 = vpop.f32.mrf.mxu0
  %v912 = vadd.f32 0.0, %v911
  %v913 = vpop.f32.mrf.mxu0
  %v914 = vadd.f32 0.0, %v913
  %v915 = vpop.f32.mrf.mxu0
  %v916 = vadd.f32 0.0, %v915
  %917 = vmatprep.mubr.bf16.mxu0 0
  %918 = vmatmul.mubr.bf16.gmra.mxu0 %v364
  %v919 = vpop.f32.mrf.mxu0
  %v920 = vadd.f32 0.0, %v919
  %v921 = vpop.f32.mrf.mxu0
  %v922 = vadd.f32 0.0, %v921
  %v923 = vpop.f32.mrf.mxu0
  %v924 = vadd.f32 0.0, %v923
  %v925 = vpop.f32.mrf.mxu0
  %v926 = vadd.f32 0.0, %v925
  %927 = vmatprep.mubr.bf16.mxu0 0
  %928 = vmatmul.mubr.bf16.gmra.mxu0 %v367
  %v929 = vpop.f32.mrf.mxu0
  %v930 = vadd.f32 0.0, %v929
  %v931 = vpop.f32.mrf.mxu0
  %v932 = vadd.f32 0.0, %v931
  %v933 = vpop.f32.mrf.mxu0
  %v934 = vadd.f32 0.0, %v933
  %v935 = vpop.f32.mrf.mxu0
  %v936 = vadd.f32 0.0, %v935
  %937 = vmatprep.mubr.bf16.mxu0 0
  %938 = vmatmul.mubr.bf16.gmra.mxu0 %v370
  %v939 = vpop.f32.mrf.mxu0
  %v940 = vadd.f32 0.0, %v939
  %v941 = vpop.f32.mrf.mxu0
  %v942 = vadd.f32 0.0, %v941
  %v943 = vpop.f32.mrf.mxu0
  %v944 = vadd.f32 0.0, %v943
  %v945 = vpop.f32.mrf.mxu0
  %v946 = vadd.f32 0.0, %v945
  %947 = vmatprep.mubr.bf16.mxu0 0
  %948 = vmatmul.mubr.bf16.gmra.mxu0 %v373
  %v949 = vpop.f32.mrf.mxu0
  %v950 = vadd.f32 0.0, %v949
  %v951 = vpop.f32.mrf.mxu0
  %v952 = vadd.f32 0.0, %v951
  %v953 = vpop.f32.mrf.mxu0
  %v954 = vadd.f32 0.0, %v953
  %v955 = vpop.f32.mrf.mxu0
  %v956 = vadd.f32 0.0, %v955
  %957 = vmatprep.mubr.bf16.mxu0 0
  %958 = vmatmul.mubr.bf16.gmra.mxu0 %v376
  %v959 = vpop.f32.mrf.mxu0
  %v960 = vadd.f32 0.0, %v959
  %v961 = vpop.f32.mrf.mxu0
  %v962 = vadd.f32 0.0, %v961
  %v963 = vpop.f32.mrf.mxu0
  %v964 = vadd.f32 0.0, %v963
  %v965 = vpop.f32.mrf.mxu0
  %v966 = vadd.f32 0.0, %v965
  %967 = vmatprep.mubr.bf16.mxu0 0
  %968 = vmatmul.mubr.bf16.gmra.mxu0 %v379
  %v969 = vpop.f32.mrf.mxu0
  %v970 = vadd.f32 0.0, %v969
  %v971 = vpop.f32.mrf.mxu0
  %v972 = vadd.f32 0.0, %v971
  %v973 = vpop.f32.mrf.mxu0
  %v974 = vadd.f32 0.0, %v973
  %v975 = vpop.f32.mrf.mxu0
  %v976 = vadd.f32 0.0, %v975
  %977 = vmatprep.mubr.bf16.mxu0 0
  %978 = vmatmul.mubr.bf16.gmra.mxu0 %v382
  %v979 = vpop.f32.mrf.mxu0
  %v980 = vadd.f32 0.0, %v979
  %v981 = vpop.f32.mrf.mxu0
  %v982 = vadd.f32 0.0, %v981
  %v983 = vpop.f32.mrf.mxu0
  %v984 = vadd.f32 0.0, %v983
  %v985 = vpop.f32.mrf.mxu0
  %v986 = vadd.f32 0.0, %v985
  %987 = vdwg.mxu0
  %988 = vmatprep.subr.bf16.mxu0 0
  %989 = vmatpush1.bf16.msra.mxu0 0
  %990 = vmatprep.subr.bf16.mxu0 0
  %991 = vmatpush1.bf16.msra.mxu0 0
  %992 = vmatprep.subr.bf16.mxu0 0
  %993 = vmatpush1.bf16.msra.mxu0 0
  %994 = vmatprep.subr.bf16.mxu0 0
  %995 = vmatpush1.bf16.msra.mxu0 0
  %996 = vmatprep.subr.bf16.mxu0 %v407
  %997 = vmatpush1.bf16.msra.mxu0 %v404
  %998 = vmatprep.subr.bf16.mxu0 %v302
  %999 = vmatpush1.bf16.msra.mxu0 %v301
  %1000 = vmatprep.subr.bf16.mxu0 %v294
  %1001 = vmatpush1.bf16.msra.mxu0 %v293
  %1002 = vmatprep.subr.bf16.mxu0 %v286
  %1003 = vmatpush1.bf16.msra.mxu0 %v285
  %1004 = vmatprep.subr.bf16.mxu0 0
  %1005 = vmatpush2.bf16.msra.mxu0 0
  %1006 = vmatprep.subr.bf16.mxu0 0
  %1007 = vmatpush2.bf16.msra.mxu0 0
  %1008 = vmatprep.subr.bf16.mxu0 0
  %1009 = vmatpush2.bf16.msra.mxu0 0
  %1010 = vmatprep.subr.bf16.mxu0 0
  %1011 = vmatpush2.bf16.msra.mxu0 0
  %1012 = vmatprep.subr.bf16.mxu0 0
  %1013 = vmatpush2.bf16.msra.mxu0 0
  %1014 = vmatprep.subr.bf16.mxu0 0
  %1015 = vmatpush2.bf16.msra.mxu0 0
  %1016 = vmatprep.subr.bf16.mxu0 0
  %1017 = vmatpush2.bf16.msra.mxu0 0
  %1018 = vmatprep.subr.bf16.mxu0 0
  %1019 = vmatpush2.bf16.msra.mxu0 0
  %1020 = vmatprep.mubr.bf16.mxu0 0
  %1021 = vmatmul.mubr.bf16.gmra.mxu0 %v337
  %v1022 = vpop.f32.mrf.mxu0
  %v1023 = vadd.f32 0.0, %v1022
  %v1024 = vpop.f32.mrf.mxu0
  %v1025 = vadd.f32 0.0, %v1024
  %v1026 = vpop.f32.mrf.mxu0
  %v1027 = vadd.f32 0.0, %v1026
  %v1028 = vpop.f32.mrf.mxu0
  %v1029 = vadd.f32 0.0, %v1028
  %1030 = vmatprep.mubr.bf16.mxu0 0
  %1031 = vmatmul.mubr.bf16.gmra.mxu0 %v340
  %v1032 = vpop.f32.mrf.mxu0
  %v1033 = vadd.f32 0.0, %v1032
  %v1034 = vpop.f32.mrf.mxu0
  %v1035 = vadd.f32 0.0, %v1034
  %v1036 = vpop.f32.mrf.mxu0
  %v1037 = vadd.f32 0.0, %v1036
  %v1038 = vpop.f32.mrf.mxu0
  %v1039 = vadd.f32 0.0, %v1038
  %1040 = vmatprep.mubr.bf16.mxu0 0
  %1041 = vmatmul.mubr.bf16.gmra.mxu0 %v343
  %v1042 = vpop.f32.mrf.mxu0
  %v1043 = vadd.f32 0.0, %v1042
  %v1044 = vpop.f32.mrf.mxu0
  %v1045 = vadd.f32 0.0, %v1044
  %v1046 = vpop.f32.mrf.mxu0
  %v1047 = vadd.f32 0.0, %v1046
  %v1048 = vpop.f32.mrf.mxu0
  %v1049 = vadd.f32 0.0, %v1048
  %1050 = vmatprep.mubr.bf16.mxu0 0
  %1051 = vmatmul.mubr.bf16.gmra.mxu0 %v346
  %v1052 = vpop.f32.mrf.mxu0
  %v1053 = vadd.f32 0.0, %v1052
  %v1054 = vpop.f32.mrf.mxu0
  %v1055 = vadd.f32 0.0, %v1054
  %v1056 = vpop.f32.mrf.mxu0
  %v1057 = vadd.f32 0.0, %v1056
  %v1058 = vpop.f32.mrf.mxu0
  %v1059 = vadd.f32 0.0, %v1058
  %1060 = vmatprep.mubr.bf16.mxu0 0
  %1061 = vmatmul.mubr.bf16.gmra.mxu0 %v349
  %v1062 = vpop.f32.mrf.mxu0
  %v1063 = vadd.f32 0.0, %v1062
  %v1064 = vpop.f32.mrf.mxu0
  %v1065 = vadd.f32 0.0, %v1064
  %v1066 = vpop.f32.mrf.mxu0
  %v1067 = vadd.f32 0.0, %v1066
  %v1068 = vpop.f32.mrf.mxu0
  %v1069 = vadd.f32 0.0, %v1068
  %1070 = vmatprep.mubr.bf16.mxu0 0
  %1071 = vmatmul.mubr.bf16.gmra.mxu0 %v352
  %v1072 = vpop.f32.mrf.mxu0
  %v1073 = vadd.f32 0.0, %v1072
  %v1074 = vpop.f32.mrf.mxu0
  %v1075 = vadd.f32 0.0, %v1074
  %v1076 = vpop.f32.mrf.mxu0
  %v1077 = vadd.f32 0.0, %v1076
  %v1078 = vpop.f32.mrf.mxu0
  %v1079 = vadd.f32 0.0, %v1078
  %1080 = vmatprep.mubr.bf16.mxu0 0
  %1081 = vmatmul.mubr.bf16.gmra.mxu0 %v355
  %v1082 = vpop.f32.mrf.mxu0
  %v1083 = vadd.f32 0.0, %v1082
  %v1084 = vpop.f32.mrf.mxu0
  %v1085 = vadd.f32 0.0, %v1084
  %v1086 = vpop.f32.mrf.mxu0
  %v1087 = vadd.f32 0.0, %v1086
  %v1088 = vpop.f32.mrf.mxu0
  %v1089 = vadd.f32 0.0, %v1088
  %1090 = vmatprep.mubr.bf16.mxu0 0
  %1091 = vmatmul.mubr.bf16.gmra.mxu0 %v358
  %v1092 = vpop.f32.mrf.mxu0
  %v1093 = vadd.f32 0.0, %v1092
  %v1094 = vpop.f32.mrf.mxu0
  %v1095 = vadd.f32 0.0, %v1094
  %v1096 = vpop.f32.mrf.mxu0
  %v1097 = vadd.f32 0.0, %v1096
  %v1098 = vpop.f32.mrf.mxu0
  %v1099 = vadd.f32 0.0, %v1098
  %1100 = vmatprep.mubr.bf16.mxu0 0
  %1101 = vmatmul.mubr.bf16.gmra.mxu0 %v361
  %v1102 = vpop.f32.mrf.mxu0
  %v1103 = vadd.f32 0.0, %v1102
  %v1104 = vpop.f32.mrf.mxu0
  %v1105 = vadd.f32 0.0, %v1104
  %v1106 = vpop.f32.mrf.mxu0
  %v1107 = vadd.f32 0.0, %v1106
  %v1108 = vpop.f32.mrf.mxu0
  %v1109 = vadd.f32 0.0, %v1108
  %1110 = vmatprep.mubr.bf16.mxu0 0
  %1111 = vmatmul.mubr.bf16.gmra.mxu0 %v364
  %v1112 = vpop.f32.mrf.mxu0
  %v1113 = vadd.f32 0.0, %v1112
  %v1114 = vpop.f32.mrf.mxu0
  %v1115 = vadd.f32 0.0, %v1114
  %v1116 = vpop.f32.mrf.mxu0
  %v1117 = vadd.f32 0.0, %v1116
  %v1118 = vpop.f32.mrf.mxu0
  %v1119 = vadd.f32 0.0, %v1118
  %1120 = vmatprep.mubr.bf16.mxu0 0
  %1121 = vmatmul.mubr.bf16.gmra.mxu0 %v367
  %v1122 = vpop.f32.mrf.mxu0
  %v1123 = vadd.f32 0.0, %v1122
  %v1124 = vpop.f32.mrf.mxu0
  %v1125 = vadd.f32 0.0, %v1124
  %v1126 = vpop.f32.mrf.mxu0
  %v1127 = vadd.f32 0.0, %v1126
  %v1128 = vpop.f32.mrf.mxu0
  %v1129 = vadd.f32 0.0, %v1128
  %1130 = vmatprep.mubr.bf16.mxu0 0
  %1131 = vmatmul.mubr.bf16.gmra.mxu0 %v370
  %v1132 = vpop.f32.mrf.mxu0
  %v1133 = vadd.f32 0.0, %v1132
  %v1134 = vpop.f32.mrf.mxu0
  %v1135 = vadd.f32 0.0, %v1134
  %v1136 = vpop.f32.mrf.mxu0
  %v1137 = vadd.f32 0.0, %v1136
  %v1138 = vpop.f32.mrf.mxu0
  %v1139 = vadd.f32 0.0, %v1138
  %1140 = vmatprep.mubr.bf16.mxu0 0
  %1141 = vmatmul.mubr.bf16.gmra.mxu0 %v373
  %v1142 = vpop.f32.mrf.mxu0
  %v1143 = vadd.f32 0.0, %v1142
  %v1144 = vpop.f32.mrf.mxu0
  %v1145 = vadd.f32 0.0, %v1144
  %v1146 = vpop.f32.mrf.mxu0
  %v1147 = vadd.f32 0.0, %v1146
  %v1148 = vpop.f32.mrf.mxu0
  %v1149 = vadd.f32 0.0, %v1148
  %1150 = vmatprep.mubr.bf16.mxu0 0
  %1151 = vmatmul.mubr.bf16.gmra.mxu0 %v376
  %v1152 = vpop.f32.mrf.mxu0
  %v1153 = vadd.f32 0.0, %v1152
  %v1154 = vpop.f32.mrf.mxu0
  %v1155 = vadd.f32 0.0, %v1154
  %v1156 = vpop.f32.mrf.mxu0
  %v1157 = vadd.f32 0.0, %v1156
  %v1158 = vpop.f32.mrf.mxu0
  %v1159 = vadd.f32 0.0, %v1158
  %1160 = vmatprep.mubr.bf16.mxu0 0
  %1161 = vmatmul.mubr.bf16.gmra.mxu0 %v379
  %v1162 = vpop.f32.mrf.mxu0
  %v1163 = vadd.f32 0.0, %v1162
  %v1164 = vpop.f32.mrf.mxu0
  %v1165 = vadd.f32 0.0, %v1164
  %v1166 = vpop.f32.mrf.mxu0
  %v1167 = vadd.f32 0.0, %v1166
  %v1168 = vpop.f32.mrf.mxu0
  %v1169 = vadd.f32 0.0, %v1168
  %1170 = vmatprep.mubr.bf16.mxu0 0
  %1171 = vmatmul.mubr.bf16.gmra.mxu0 %v382
  %v1172 = vpop.f32.mrf.mxu0
  %v1173 = vadd.f32 0.0, %v1172
  %v1174 = vpop.f32.mrf.mxu0
  %v1175 = vadd.f32 0.0, %v1174
  %v1176 = vpop.f32.mrf.mxu0
  %v1177 = vadd.f32 0.0, %v1176
  %v1178 = vpop.f32.mrf.mxu0
  %v1179 = vadd.f32 0.0, %v1178
  %1180 = vdwg.mxu0
  %v1209 = vunpack.c.l.b16 %v90
  %v1210 = vunpack.c.h.b16 %v90
  %v1211 = vunpack.c.l.b16 %v91
  %v1212 = vunpack.c.h.b16 %v91
  %v1213 = vunpack.c.l.b16 %v92
  %v1214 = vunpack.c.h.b16 %v92
  %v1215 = vunpack.c.l.b16 %v93
  %v1216 = vunpack.c.h.b16 %v93
  %v1217 = vunpack.c.l.b16 %v94
  %v1218 = vunpack.c.h.b16 %v94
  %v1219 = vunpack.c.l.b16 %v95
  %v1220 = vunpack.c.h.b16 %v95
  %v1221 = vunpack.c.l.b16 %v96
  %v1222 = vunpack.c.h.b16 %v96
  %v1223 = vunpack.c.l.b16 %v97
  %v1224 = vunpack.c.h.b16 %v97
  %v1225 = vunpack.c.l.b16 %v98
  %v1226 = vunpack.c.h.b16 %v98
  %v1227 = vunpack.c.l.b16 %v99
  %v1228 = vunpack.c.h.b16 %v99
  %v1229 = vunpack.c.l.b16 %v100
  %v1230 = vunpack.c.h.b16 %v100
  %v1231 = vunpack.c.l.b16 %v101
  %v1232 = vunpack.c.h.b16 %v101
  %v1233 = vunpack.c.l.b16 %v102
  %v1234 = vunpack.c.h.b16 %v102
  %v1235 = vunpack.c.l.b16 %v103
  %v1236 = vunpack.c.h.b16 %v103
  %v1237 = vunpack.c.l.b16 %v104
  %v1238 = vunpack.c.h.b16 %v104
  %v1239 = vunpack.c.l.b16 %v105
  %v1240 = vunpack.c.h.b16 %v105
  %v1241 = vunpack.c.l.b16 %v106
  %v1242 = vunpack.c.h.b16 %v106
  %v1243 = vunpack.c.l.b16 %v107
  %v1244 = vunpack.c.h.b16 %v107
  %v1245 = vunpack.c.l.b16 %v108
  %v1246 = vunpack.c.h.b16 %v108
  %v1247 = vunpack.c.l.b16 %v109
  %v1248 = vunpack.c.h.b16 %v109
  %v1249 = vunpack.c.l.b16 %v110
  %v1250 = vunpack.c.h.b16 %v110
  %v1251 = vunpack.c.l.b16 %v111
  %v1252 = vunpack.c.h.b16 %v111
  %v1253 = vunpack.c.l.b16 %v112
  %v1254 = vunpack.c.h.b16 %v112
  %v1255 = vunpack.c.l.b16 %v113
  %v1256 = vunpack.c.h.b16 %v113
  %v1257 = vunpack.c.l.b16 %v114
  %v1258 = vunpack.c.h.b16 %v114
  %v1259 = vunpack.c.l.b16 %v115
  %v1260 = vunpack.c.h.b16 %v115
  %v1261 = vunpack.c.l.b16 %v116
  %v1262 = vunpack.c.h.b16 %v116
  %v1263 = vunpack.c.l.b16 %v117
  %v1264 = vunpack.c.h.b16 %v117
  %v1265 = vpack.c.b16 %v1217, %v1209
  %v1266 = vpack.c.b16 %v1218, %v1210
  %v1267 = vpack.c.b16 %v1219, %v1211
  %v1268 = vpack.c.b16 %v1220, %v1212
  %v1269 = vpack.c.b16 %v1221, %v1213
  %v1270 = vpack.c.b16 %v1222, %v1214
  %v1271 = vpack.c.b16 %v1223, %v1215
  %v1272 = vpack.c.b16 %v1224, %v1216
  %v1273 = vpack.c.b16 %v1233, %v1225
  %v1274 = vpack.c.b16 %v1234, %v1226
  %v1275 = vpack.c.b16 %v1235, %v1227
  %v1276 = vpack.c.b16 %v1236, %v1228
  %v1277 = vpack.c.b16 %v1237, %v1229
  %v1278 = vpack.c.b16 %v1238, %v1230
  %v1279 = vpack.c.b16 %v1239, %v1231
  %v1280 = vpack.c.b16 %v1240, %v1232
  %v1281 = vpack.c.b16 %v1249, %v1241
  %v1282 = vpack.c.b16 %v1250, %v1242
  %v1283 = vpack.c.b16 %v1251, %v1243
  %v1284 = vpack.c.b16 %v1252, %v1244
  %v1285 = vpack.c.b16 %v1253, %v1245
  %v1286 = vpack.c.b16 %v1254, %v1246
  %v1287 = vpack.c.b16 %v1255, %v1247
  %v1288 = vpack.c.b16 %v1256, %v1248
  %v1289 = vpack.c.b16 %v1257, %v1257
  %v1290 = vpack.c.b16 %v1258, %v1258
  %v1291 = vpack.c.b16 %v1259, %v1259
  %v1292 = vpack.c.b16 %v1260, %v1260
  %v1293 = vpack.c.b16 %v1261, %v1261
  %v1294 = vpack.c.b16 %v1262, %v1262
  %v1295 = vpack.c.b16 %v1263, %v1263
  %v1296 = vpack.c.b16 %v1264, %v1264
  %v1322 = vsel %vm335, %v74, 0
  %v1325 = vsel %vm335, %v75, 0
  %v1328 = vsel %vm335, %v76, 0
  %v1331 = vsel %vm335, %v77, 0
  %v1334 = vsel %vm335, %v78, 0
  %v1337 = vsel %vm335, %v79, 0
  %v1340 = vsel %vm335, %v80, 0
  %v1343 = vsel %vm335, %v81, 0
  %v1346 = vsel %vm335, %v82, 0
  %v1349 = vsel %vm335, %v83, 0
  %v1352 = vsel %vm335, %v84, 0
  %v1355 = vsel %vm335, %v85, 0
  %v1358 = vsel %vm335, %v86, 0
  %v1361 = vsel %vm335, %v87, 0
  %v1364 = vsel %vm335, %v88, 0
  %v1367 = vsel %vm335, %v89, 0
  %v1370 = vsel %vm384, %v1289, 0
  %v1373 = vsel %vm384, %v1290, 0
  %v1376 = vsel %vm384, %v1291, 0
  %v1379 = vsel %vm384, %v1292, 0
  %v1382 = vsel %vm384, %v1293, 0
  %v1385 = vsel %vm384, %v1294, 0
  %v1388 = vsel %vm384, %v1295, 0
  %v1391 = vsel %vm384, %v1296, 0
  %1393 = vmatprep.subr.bf16.mxu0 0
  %1394 = vmatpush1.bf16.msra.mxu0 0
  %1395 = vmatprep.subr.bf16.mxu0 0
  %1396 = vmatpush1.bf16.msra.mxu0 0
  %1397 = vmatprep.subr.bf16.mxu0 0
  %1398 = vmatpush1.bf16.msra.mxu0 0
  %1399 = vmatprep.subr.bf16.mxu0 0
  %1400 = vmatpush1.bf16.msra.mxu0 0
  %1401 = vmatprep.subr.bf16.mxu0 %v1373
  %1402 = vmatpush1.bf16.msra.mxu0 %v1370
  %1403 = vmatprep.subr.bf16.mxu0 %v1282
  %1404 = vmatpush1.bf16.msra.mxu0 %v1281
  %1405 = vmatprep.subr.bf16.mxu0 %v1274
  %1406 = vmatpush1.bf16.msra.mxu0 %v1273
  %1407 = vmatprep.subr.bf16.mxu0 %v1266
  %1408 = vmatpush1.bf16.msra.mxu0 %v1265
  %1409 = vmatprep.subr.bf16.mxu0 0
  %1410 = vmatpush2.bf16.msra.mxu0 0
  %1411 = vmatprep.subr.bf16.mxu0 0
  %1412 = vmatpush2.bf16.msra.mxu0 0
  %1413 = vmatprep.subr.bf16.mxu0 0
  %1414 = vmatpush2.bf16.msra.mxu0 0
  %1415 = vmatprep.subr.bf16.mxu0 0
  %1416 = vmatpush2.bf16.msra.mxu0 0
  %1417 = vmatprep.subr.bf16.mxu0 0
  %1418 = vmatpush2.bf16.msra.mxu0 0
  %1419 = vmatprep.subr.bf16.mxu0 0
  %1420 = vmatpush2.bf16.msra.mxu0 0
  %1421 = vmatprep.subr.bf16.mxu0 0
  %1422 = vmatpush2.bf16.msra.mxu0 0
  %1423 = vmatprep.subr.bf16.mxu0 0
  %1424 = vmatpush2.bf16.msra.mxu0 0
  %1425 = vmatprep.mubr.bf16.mxu0 0
  %1426 = vmatmul.mubr.bf16.gmra.mxu0 %v1322
  %v1427 = vpop.f32.mrf.mxu0
  %v1428 = vadd.f32 %v444, %v1427
  %v1429 = vpop.f32.mrf.mxu0
  %v1430 = vadd.f32 %v446, %v1429
  %v1431 = vpop.f32.mrf.mxu0
  %v1432 = vadd.f32 %v448, %v1431
  %v1433 = vpop.f32.mrf.mxu0
  %v1434 = vadd.f32 %v450, %v1433
  %1435 = vmatprep.mubr.bf16.mxu0 0
  %1436 = vmatmul.mubr.bf16.gmra.mxu0 %v1325
  %v1437 = vpop.f32.mrf.mxu0
  %v1438 = vadd.f32 %v454, %v1437
  %v1439 = vpop.f32.mrf.mxu0
  %v1440 = vadd.f32 %v456, %v1439
  %v1441 = vpop.f32.mrf.mxu0
  %v1442 = vadd.f32 %v458, %v1441
  %v1443 = vpop.f32.mrf.mxu0
  %v1444 = vadd.f32 %v460, %v1443
  %1445 = vmatprep.mubr.bf16.mxu0 0
  %1446 = vmatmul.mubr.bf16.gmra.mxu0 %v1328
  %v1447 = vpop.f32.mrf.mxu0
  %v1448 = vadd.f32 %v464, %v1447
  %v1449 = vpop.f32.mrf.mxu0
  %v1450 = vadd.f32 %v466, %v1449
  %v1451 = vpop.f32.mrf.mxu0
  %v1452 = vadd.f32 %v468, %v1451
  %v1453 = vpop.f32.mrf.mxu0
  %v1454 = vadd.f32 %v470, %v1453
  %1455 = vmatprep.mubr.bf16.mxu0 0
  %1456 = vmatmul.mubr.bf16.gmra.mxu0 %v1331
  %v1457 = vpop.f32.mrf.mxu0
  %v1458 = vadd.f32 %v474, %v1457
  %v1459 = vpop.f32.mrf.mxu0
  %v1460 = vadd.f32 %v476, %v1459
  %v1461 = vpop.f32.mrf.mxu0
  %v1462 = vadd.f32 %v478, %v1461
  %v1463 = vpop.f32.mrf.mxu0
  %v1464 = vadd.f32 %v480, %v1463
  %1465 = vmatprep.mubr.bf16.mxu0 0
  %1466 = vmatmul.mubr.bf16.gmra.mxu0 %v1334
  %v1467 = vpop.f32.mrf.mxu0
  %v1468 = vadd.f32 %v484, %v1467
  %v1469 = vpop.f32.mrf.mxu0
  %v1470 = vadd.f32 %v486, %v1469
  %v1471 = vpop.f32.mrf.mxu0
  %v1472 = vadd.f32 %v488, %v1471
  %v1473 = vpop.f32.mrf.mxu0
  %v1474 = vadd.f32 %v490, %v1473
  %1475 = vmatprep.mubr.bf16.mxu0 0
  %1476 = vmatmul.mubr.bf16.gmra.mxu0 %v1337
  %v1477 = vpop.f32.mrf.mxu0
  %v1478 = vadd.f32 %v494, %v1477
  %v1479 = vpop.f32.mrf.mxu0
  %v1480 = vadd.f32 %v496, %v1479
  %v1481 = vpop.f32.mrf.mxu0
  %v1482 = vadd.f32 %v498, %v1481
  %v1483 = vpop.f32.mrf.mxu0
  %v1484 = vadd.f32 %v500, %v1483
  %1485 = vmatprep.mubr.bf16.mxu0 0
  %1486 = vmatmul.mubr.bf16.gmra.mxu0 %v1340
  %v1487 = vpop.f32.mrf.mxu0
  %v1488 = vadd.f32 %v504, %v1487
  %v1489 = vpop.f32.mrf.mxu0
  %v1490 = vadd.f32 %v506, %v1489
  %v1491 = vpop.f32.mrf.mxu0
  %v1492 = vadd.f32 %v508, %v1491
  %v1493 = vpop.f32.mrf.mxu0
  %v1494 = vadd.f32 %v510, %v1493
  %1495 = vmatprep.mubr.bf16.mxu0 0
  %1496 = vmatmul.mubr.bf16.gmra.mxu0 %v1343
  %v1497 = vpop.f32.mrf.mxu0
  %v1498 = vadd.f32 %v514, %v1497
  %v1499 = vpop.f32.mrf.mxu0
  %v1500 = vadd.f32 %v516, %v1499
  %v1501 = vpop.f32.mrf.mxu0
  %v1502 = vadd.f32 %v518, %v1501
  %v1503 = vpop.f32.mrf.mxu0
  %v1504 = vadd.f32 %v520, %v1503
  %1505 = vmatprep.mubr.bf16.mxu0 0
  %1506 = vmatmul.mubr.bf16.gmra.mxu0 %v1346
  %v1507 = vpop.f32.mrf.mxu0
  %v1508 = vadd.f32 %v524, %v1507
  %v1509 = vpop.f32.mrf.mxu0
  %v1510 = vadd.f32 %v526, %v1509
  %v1511 = vpop.f32.mrf.mxu0
  %v1512 = vadd.f32 %v528, %v1511
  %v1513 = vpop.f32.mrf.mxu0
  %v1514 = vadd.f32 %v530, %v1513
  %1515 = vmatprep.mubr.bf16.mxu0 0
  %1516 = vmatmul.mubr.bf16.gmra.mxu0 %v1349
  %v1517 = vpop.f32.mrf.mxu0
  %v1518 = vadd.f32 %v534, %v1517
  %v1519 = vpop.f32.mrf.mxu0
  %v1520 = vadd.f32 %v536, %v1519
  %v1521 = vpop.f32.mrf.mxu0
  %v1522 = vadd.f32 %v538, %v1521
  %v1523 = vpop.f32.mrf.mxu0
  %v1524 = vadd.f32 %v540, %v1523
  %1525 = vmatprep.mubr.bf16.mxu0 0
  %1526 = vmatmul.mubr.bf16.gmra.mxu0 %v1352
  %v1527 = vpop.f32.mrf.mxu0
  %v1528 = vadd.f32 %v544, %v1527
  %v1529 = vpop.f32.mrf.mxu0
  %v1530 = vadd.f32 %v546, %v1529
  %v1531 = vpop.f32.mrf.mxu0
  %v1532 = vadd.f32 %v548, %v1531
  %v1533 = vpop.f32.mrf.mxu0
  %v1534 = vadd.f32 %v550, %v1533
  %1535 = vmatprep.mubr.bf16.mxu0 0
  %1536 = vmatmul.mubr.bf16.gmra.mxu0 %v1355
  %v1537 = vpop.f32.mrf.mxu0
  %v1538 = vadd.f32 %v554, %v1537
  %v1539 = vpop.f32.mrf.mxu0
  %v1540 = vadd.f32 %v556, %v1539
  %v1541 = vpop.f32.mrf.mxu0
  %v1542 = vadd.f32 %v558, %v1541
  %v1543 = vpop.f32.mrf.mxu0
  %v1544 = vadd.f32 %v560, %v1543
  %1545 = vmatprep.mubr.bf16.mxu0 0
  %1546 = vmatmul.mubr.bf16.gmra.mxu0 %v1358
  %v1547 = vpop.f32.mrf.mxu0
  %v1548 = vadd.f32 %v564, %v1547
  %v1549 = vpop.f32.mrf.mxu0
  %v1550 = vadd.f32 %v566, %v1549
  %v1551 = vpop.f32.mrf.mxu0
  %v1552 = vadd.f32 %v568, %v1551
  %v1553 = vpop.f32.mrf.mxu0
  %v1554 = vadd.f32 %v570, %v1553
  %1555 = vmatprep.mubr.bf16.mxu0 0
  %1556 = vmatmul.mubr.bf16.gmra.mxu0 %v1361
  %v1557 = vpop.f32.mrf.mxu0
  %v1558 = vadd.f32 %v574, %v1557
  %v1559 = vpop.f32.mrf.mxu0
  %v1560 = vadd.f32 %v576, %v1559
  %v1561 = vpop.f32.mrf.mxu0
  %v1562 = vadd.f32 %v578, %v1561
  %v1563 = vpop.f32.mrf.mxu0
  %v1564 = vadd.f32 %v580, %v1563
  %1565 = vmatprep.mubr.bf16.mxu0 0
  %1566 = vmatmul.mubr.bf16.gmra.mxu0 %v1364
  %v1567 = vpop.f32.mrf.mxu0
  %v1568 = vadd.f32 %v584, %v1567
  %v1569 = vpop.f32.mrf.mxu0
  %v1570 = vadd.f32 %v586, %v1569
  %v1571 = vpop.f32.mrf.mxu0
  %v1572 = vadd.f32 %v588, %v1571
  %v1573 = vpop.f32.mrf.mxu0
  %v1574 = vadd.f32 %v590, %v1573
  %1575 = vmatprep.mubr.bf16.mxu0 0
  %1576 = vmatmul.mubr.bf16.gmra.mxu0 %v1367
  %v1577 = vpop.f32.mrf.mxu0
  %v1578 = vadd.f32 %v594, %v1577
  %v1579 = vpop.f32.mrf.mxu0
  %v1580 = vadd.f32 %v596, %v1579
  %v1581 = vpop.f32.mrf.mxu0
  %v1582 = vadd.f32 %v598, %v1581
  %v1583 = vpop.f32.mrf.mxu0
  %v1584 = vadd.f32 %v600, %v1583
  %1585 = vdwg.mxu0
  %1586 = vmatprep.subr.bf16.mxu0 0
  %1587 = vmatpush1.bf16.msra.mxu0 0
  %1588 = vmatprep.subr.bf16.mxu0 0
  %1589 = vmatpush1.bf16.msra.mxu0 0
  %1590 = vmatprep.subr.bf16.mxu0 0
  %1591 = vmatpush1.bf16.msra.mxu0 0
  %1592 = vmatprep.subr.bf16.mxu0 0
  %1593 = vmatpush1.bf16.msra.mxu0 0
  %1594 = vmatprep.subr.bf16.mxu0 %v1379
  %1595 = vmatpush1.bf16.msra.mxu0 %v1376
  %1596 = vmatprep.subr.bf16.mxu0 %v1284
  %1597 = vmatpush1.bf16.msra.mxu0 %v1283
  %1598 = vmatprep.subr.bf16.mxu0 %v1276
  %1599 = vmatpush1.bf16.msra.mxu0 %v1275
  %1600 = vmatprep.subr.bf16.mxu0 %v1268
  %1601 = vmatpush1.bf16.msra.mxu0 %v1267
  %1602 = vmatprep.subr.bf16.mxu0 0
  %1603 = vmatpush2.bf16.msra.mxu0 0
  %1604 = vmatprep.subr.bf16.mxu0 0
  %1605 = vmatpush2.bf16.msra.mxu0 0
  %1606 = vmatprep.subr.bf16.mxu0 0
  %1607 = vmatpush2.bf16.msra.mxu0 0
  %1608 = vmatprep.subr.bf16.mxu0 0
  %1609 = vmatpush2.bf16.msra.mxu0 0
  %1610 = vmatprep.subr.bf16.mxu0 0
  %1611 = vmatpush2.bf16.msra.mxu0 0
  %1612 = vmatprep.subr.bf16.mxu0 0
  %1613 = vmatpush2.bf16.msra.mxu0 0
  %1614 = vmatprep.subr.bf16.mxu0 0
  %1615 = vmatpush2.bf16.msra.mxu0 0
  %1616 = vmatprep.subr.bf16.mxu0 0
  %1617 = vmatpush2.bf16.msra.mxu0 0
  %1618 = vmatprep.mubr.bf16.mxu0 0
  %1619 = vmatmul.mubr.bf16.gmra.mxu0 %v1322
  %v1620 = vpop.f32.mrf.mxu0
  %v1621 = vadd.f32 %v637, %v1620
  %v1622 = vpop.f32.mrf.mxu0
  %v1623 = vadd.f32 %v639, %v1622
  %v1624 = vpop.f32.mrf.mxu0
  %v1625 = vadd.f32 %v641, %v1624
  %v1626 = vpop.f32.mrf.mxu0
  %v1627 = vadd.f32 %v643, %v1626
  %1628 = vmatprep.mubr.bf16.mxu0 0
  %1629 = vmatmul.mubr.bf16.gmra.mxu0 %v1325
  %v1630 = vpop.f32.mrf.mxu0
  %v1631 = vadd.f32 %v647, %v1630
  %v1632 = vpop.f32.mrf.mxu0
  %v1633 = vadd.f32 %v649, %v1632
  %v1634 = vpop.f32.mrf.mxu0
  %v1635 = vadd.f32 %v651, %v1634
  %v1636 = vpop.f32.mrf.mxu0
  %v1637 = vadd.f32 %v653, %v1636
  %1638 = vmatprep.mubr.bf16.mxu0 0
  %1639 = vmatmul.mubr.bf16.gmra.mxu0 %v1328
  %v1640 = vpop.f32.mrf.mxu0
  %v1641 = vadd.f32 %v657, %v1640
  %v1642 = vpop.f32.mrf.mxu0
  %v1643 = vadd.f32 %v659, %v1642
  %v1644 = vpop.f32.mrf.mxu0
  %v1645 = vadd.f32 %v661, %v1644
  %v1646 = vpop.f32.mrf.mxu0
  %v1647 = vadd.f32 %v663, %v1646
  %1648 = vmatprep.mubr.bf16.mxu0 0
  %1649 = vmatmul.mubr.bf16.gmra.mxu0 %v1331
  %v1650 = vpop.f32.mrf.mxu0
  %v1651 = vadd.f32 %v667, %v1650
  %v1652 = vpop.f32.mrf.mxu0
  %v1653 = vadd.f32 %v669, %v1652
  %v1654 = vpop.f32.mrf.mxu0
  %v1655 = vadd.f32 %v671, %v1654
  %v1656 = vpop.f32.mrf.mxu0
  %v1657 = vadd.f32 %v673, %v1656
  %1658 = vmatprep.mubr.bf16.mxu0 0
  %1659 = vmatmul.mubr.bf16.gmra.mxu0 %v1334
  %v1660 = vpop.f32.mrf.mxu0
  %v1661 = vadd.f32 %v677, %v1660
  %v1662 = vpop.f32.mrf.mxu0
  %v1663 = vadd.f32 %v679, %v1662
  %v1664 = vpop.f32.mrf.mxu0
  %v1665 = vadd.f32 %v681, %v1664
  %v1666 = vpop.f32.mrf.mxu0
  %v1667 = vadd.f32 %v683, %v1666
  %1668 = vmatprep.mubr.bf16.mxu0 0
  %1669 = vmatmul.mubr.bf16.gmra.mxu0 %v1337
  %v1670 = vpop.f32.mrf.mxu0
  %v1671 = vadd.f32 %v687, %v1670
  %v1672 = vpop.f32.mrf.mxu0
  %v1673 = vadd.f32 %v689, %v1672
  %v1674 = vpop.f32.mrf.mxu0
  %v1675 = vadd.f32 %v691, %v1674
  %v1676 = vpop.f32.mrf.mxu0
  %v1677 = vadd.f32 %v693, %v1676
  %1678 = vmatprep.mubr.bf16.mxu0 0
  %1679 = vmatmul.mubr.bf16.gmra.mxu0 %v1340
  %v1680 = vpop.f32.mrf.mxu0
  %v1681 = vadd.f32 %v697, %v1680
  %v1682 = vpop.f32.mrf.mxu0
  %v1683 = vadd.f32 %v699, %v1682
  %v1684 = vpop.f32.mrf.mxu0
  %v1685 = vadd.f32 %v701, %v1684
  %v1686 = vpop.f32.mrf.mxu0
  %v1687 = vadd.f32 %v703, %v1686
  %1688 = vmatprep.mubr.bf16.mxu0 0
  %1689 = vmatmul.mubr.bf16.gmra.mxu0 %v1343
  %v1690 = vpop.f32.mrf.mxu0
  %v1691 = vadd.f32 %v707, %v1690
  %v1692 = vpop.f32.mrf.mxu0
  %v1693 = vadd.f32 %v709, %v1692
  %v1694 = vpop.f32.mrf.mxu0
  %v1695 = vadd.f32 %v711, %v1694
  %v1696 = vpop.f32.mrf.mxu0
  %v1697 = vadd.f32 %v713, %v1696
  %1698 = vmatprep.mubr.bf16.mxu0 0
  %1699 = vmatmul.mubr.bf16.gmra.mxu0 %v1346
  %v1700 = vpop.f32.mrf.mxu0
  %v1701 = vadd.f32 %v717, %v1700
  %v1702 = vpop.f32.mrf.mxu0
  %v1703 = vadd.f32 %v719, %v1702
  %v1704 = vpop.f32.mrf.mxu0
  %v1705 = vadd.f32 %v721, %v1704
  %v1706 = vpop.f32.mrf.mxu0
  %v1707 = vadd.f32 %v723, %v1706
  %1708 = vmatprep.mubr.bf16.mxu0 0
  %1709 = vmatmul.mubr.bf16.gmra.mxu0 %v1349
  %v1710 = vpop.f32.mrf.mxu0
  %v1711 = vadd.f32 %v727, %v1710
  %v1712 = vpop.f32.mrf.mxu0
  %v1713 = vadd.f32 %v729, %v1712
  %v1714 = vpop.f32.mrf.mxu0
  %v1715 = vadd.f32 %v731, %v1714
  %v1716 = vpop.f32.mrf.mxu0
  %v1717 = vadd.f32 %v733, %v1716
  %1718 = vmatprep.mubr.bf16.mxu0 0
  %1719 = vmatmul.mubr.bf16.gmra.mxu0 %v1352
  %v1720 = vpop.f32.mrf.mxu0
  %v1721 = vadd.f32 %v737, %v1720
  %v1722 = vpop.f32.mrf.mxu0
  %v1723 = vadd.f32 %v739, %v1722
  %v1724 = vpop.f32.mrf.mxu0
  %v1725 = vadd.f32 %v741, %v1724
  %v1726 = vpop.f32.mrf.mxu0
  %v1727 = vadd.f32 %v743, %v1726
  %1728 = vmatprep.mubr.bf16.mxu0 0
  %1729 = vmatmul.mubr.bf16.gmra.mxu0 %v1355
  %v1730 = vpop.f32.mrf.mxu0
  %v1731 = vadd.f32 %v747, %v1730
  %v1732 = vpop.f32.mrf.mxu0
  %v1733 = vadd.f32 %v749, %v1732
  %v1734 = vpop.f32.mrf.mxu0
  %v1735 = vadd.f32 %v751, %v1734
  %v1736 = vpop.f32.mrf.mxu0
  %v1737 = vadd.f32 %v753, %v1736
  %1738 = vmatprep.mubr.bf16.mxu0 0
  %1739 = vmatmul.mubr.bf16.gmra.mxu0 %v1358
  %v1740 = vpop.f32.mrf.mxu0
  %v1741 = vadd.f32 %v757, %v1740
  %v1742 = vpop.f32.mrf.mxu0
  %v1743 = vadd.f32 %v759, %v1742
  %v1744 = vpop.f32.mrf.mxu0
  %v1745 = vadd.f32 %v761, %v1744
  %v1746 = vpop.f32.mrf.mxu0
  %v1747 = vadd.f32 %v763, %v1746
  %1748 = vmatprep.mubr.bf16.mxu0 0
  %1749 = vmatmul.mubr.bf16.gmra.mxu0 %v1361
  %v1750 = vpop.f32.mrf.mxu0
  %v1751 = vadd.f32 %v767, %v1750
  %v1752 = vpop.f32.mrf.mxu0
  %v1753 = vadd.f32 %v769, %v1752
  %v1754 = vpop.f32.mrf.mxu0
  %v1755 = vadd.f32 %v771, %v1754
  %v1756 = vpop.f32.mrf.mxu0
  %v1757 = vadd.f32 %v773, %v1756
  %1758 = vmatprep.mubr.bf16.mxu0 0
  %1759 = vmatmul.mubr.bf16.gmra.mxu0 %v1364
  %v1760 = vpop.f32.mrf.mxu0
  %v1761 = vadd.f32 %v777, %v1760
  %v1762 = vpop.f32.mrf.mxu0
  %v1763 = vadd.f32 %v779, %v1762
  %v1764 = vpop.f32.mrf.mxu0
  %v1765 = vadd.f32 %v781, %v1764
  %v1766 = vpop.f32.mrf.mxu0
  %v1767 = vadd.f32 %v783, %v1766
  %1768 = vmatprep.mubr.bf16.mxu0 0
  %1769 = vmatmul.mubr.bf16.gmra.mxu0 %v1367
  %v1770 = vpop.f32.mrf.mxu0
  %v1771 = vadd.f32 %v787, %v1770
  %v1772 = vpop.f32.mrf.mxu0
  %v1773 = vadd.f32 %v789, %v1772
  %v1774 = vpop.f32.mrf.mxu0
  %v1775 = vadd.f32 %v791, %v1774
  %v1776 = vpop.f32.mrf.mxu0
  %v1777 = vadd.f32 %v793, %v1776
  %1778 = vdwg.mxu0
  %1779 = vmatprep.subr.bf16.mxu0 0
  %1780 = vmatpush1.bf16.msra.mxu0 0
  %1781 = vmatprep.subr.bf16.mxu0 0
  %1782 = vmatpush1.bf16.msra.mxu0 0
  %1783 = vmatprep.subr.bf16.mxu0 0
  %1784 = vmatpush1.bf16.msra.mxu0 0
  %1785 = vmatprep.subr.bf16.mxu0 0
  %1786 = vmatpush1.bf16.msra.mxu0 0
  %1787 = vmatprep.subr.bf16.mxu0 %v1385
  %1788 = vmatpush1.bf16.msra.mxu0 %v1382
  %1789 = vmatprep.subr.bf16.mxu0 %v1286
  %1790 = vmatpush1.bf16.msra.mxu0 %v1285
  %1791 = vmatprep.subr.bf16.mxu0 %v1278
  %1792 = vmatpush1.bf16.msra.mxu0 %v1277
  %1793 = vmatprep.subr.bf16.mxu0 %v1270
  %1794 = vmatpush1.bf16.msra.mxu0 %v1269
  %1795 = vmatprep.subr.bf16.mxu0 0
  %1796 = vmatpush2.bf16.msra.mxu0 0
  %1797 = vmatprep.subr.bf16.mxu0 0
  %1798 = vmatpush2.bf16.msra.mxu0 0
  %1799 = vmatprep.subr.bf16.mxu0 0
  %1800 = vmatpush2.bf16.msra.mxu0 0
  %1801 = vmatprep.subr.bf16.mxu0 0
  %1802 = vmatpush2.bf16.msra.mxu0 0
  %1803 = vmatprep.subr.bf16.mxu0 0
  %1804 = vmatpush2.bf16.msra.mxu0 0
  %1805 = vmatprep.subr.bf16.mxu0 0
  %1806 = vmatpush2.bf16.msra.mxu0 0
  %1807 = vmatprep.subr.bf16.mxu0 0
  %1808 = vmatpush2.bf16.msra.mxu0 0
  %1809 = vmatprep.subr.bf16.mxu0 0
  %1810 = vmatpush2.bf16.msra.mxu0 0
  %1811 = vmatprep.mubr.bf16.mxu0 0
  %1812 = vmatmul.mubr.bf16.gmra.mxu0 %v1322
  %v1813 = vpop.f32.mrf.mxu0
  %v1814 = vadd.f32 %v830, %v1813
  %v1815 = vpop.f32.mrf.mxu0
  %v1816 = vadd.f32 %v832, %v1815
  %v1817 = vpop.f32.mrf.mxu0
  %v1818 = vadd.f32 %v834, %v1817
  %v1819 = vpop.f32.mrf.mxu0
  %v1820 = vadd.f32 %v836, %v1819
  %1821 = vmatprep.mubr.bf16.mxu0 0
  %1822 = vmatmul.mubr.bf16.gmra.mxu0 %v1325
  %v1823 = vpop.f32.mrf.mxu0
  %v1824 = vadd.f32 %v840, %v1823
  %v1825 = vpop.f32.mrf.mxu0
  %v1826 = vadd.f32 %v842, %v1825
  %v1827 = vpop.f32.mrf.mxu0
  %v1828 = vadd.f32 %v844, %v1827
  %v1829 = vpop.f32.mrf.mxu0
  %v1830 = vadd.f32 %v846, %v1829
  %1831 = vmatprep.mubr.bf16.mxu0 0
  %1832 = vmatmul.mubr.bf16.gmra.mxu0 %v1328
  %v1833 = vpop.f32.mrf.mxu0
  %v1834 = vadd.f32 %v850, %v1833
  %v1835 = vpop.f32.mrf.mxu0
  %v1836 = vadd.f32 %v852, %v1835
  %v1837 = vpop.f32.mrf.mxu0
  %v1838 = vadd.f32 %v854, %v1837
  %v1839 = vpop.f32.mrf.mxu0
  %v1840 = vadd.f32 %v856, %v1839
  %1841 = vmatprep.mubr.bf16.mxu0 0
  %1842 = vmatmul.mubr.bf16.gmra.mxu0 %v1331
  %v1843 = vpop.f32.mrf.mxu0
  %v1844 = vadd.f32 %v860, %v1843
  %v1845 = vpop.f32.mrf.mxu0
  %v1846 = vadd.f32 %v862, %v1845
  %v1847 = vpop.f32.mrf.mxu0
  %v1848 = vadd.f32 %v864, %v1847
  %v1849 = vpop.f32.mrf.mxu0
  %v1850 = vadd.f32 %v866, %v1849
  %1851 = vmatprep.mubr.bf16.mxu0 0
  %1852 = vmatmul.mubr.bf16.gmra.mxu0 %v1334
  %v1853 = vpop.f32.mrf.mxu0
  %v1854 = vadd.f32 %v870, %v1853
  %v1855 = vpop.f32.mrf.mxu0
  %v1856 = vadd.f32 %v872, %v1855
  %v1857 = vpop.f32.mrf.mxu0
  %v1858 = vadd.f32 %v874, %v1857
  %v1859 = vpop.f32.mrf.mxu0
  %v1860 = vadd.f32 %v876, %v1859
  %1861 = vmatprep.mubr.bf16.mxu0 0
  %1862 = vmatmul.mubr.bf16.gmra.mxu0 %v1337
  %v1863 = vpop.f32.mrf.mxu0
  %v1864 = vadd.f32 %v880, %v1863
  %v1865 = vpop.f32.mrf.mxu0
  %v1866 = vadd.f32 %v882, %v1865
  %v1867 = vpop.f32.mrf.mxu0
  %v1868 = vadd.f32 %v884, %v1867
  %v1869 = vpop.f32.mrf.mxu0
  %v1870 = vadd.f32 %v886, %v1869
  %1871 = vmatprep.mubr.bf16.mxu0 0
  %1872 = vmatmul.mubr.bf16.gmra.mxu0 %v1340
  %v1873 = vpop.f32.mrf.mxu0
  %v1874 = vadd.f32 %v890, %v1873
  %v1875 = vpop.f32.mrf.mxu0
  %v1876 = vadd.f32 %v892, %v1875
  %v1877 = vpop.f32.mrf.mxu0
  %v1878 = vadd.f32 %v894, %v1877
  %v1879 = vpop.f32.mrf.mxu0
  %v1880 = vadd.f32 %v896, %v1879
  %1881 = vmatprep.mubr.bf16.mxu0 0
  %1882 = vmatmul.mubr.bf16.gmra.mxu0 %v1343
  %v1883 = vpop.f32.mrf.mxu0
  %v1884 = vadd.f32 %v900, %v1883
  %v1885 = vpop.f32.mrf.mxu0
  %v1886 = vadd.f32 %v902, %v1885
  %v1887 = vpop.f32.mrf.mxu0
  %v1888 = vadd.f32 %v904, %v1887
  %v1889 = vpop.f32.mrf.mxu0
  %v1890 = vadd.f32 %v906, %v1889
  %1891 = vmatprep.mubr.bf16.mxu0 0
  %1892 = vmatmul.mubr.bf16.gmra.mxu0 %v1346
  %v1893 = vpop.f32.mrf.mxu0
  %v1894 = vadd.f32 %v910, %v1893
  %v1895 = vpop.f32.mrf.mxu0
  %v1896 = vadd.f32 %v912, %v1895
  %v1897 = vpop.f32.mrf.mxu0
  %v1898 = vadd.f32 %v914, %v1897
  %v1899 = vpop.f32.mrf.mxu0
  %v1900 = vadd.f32 %v916, %v1899
  %1901 = vmatprep.mubr.bf16.mxu0 0
  %1902 = vmatmul.mubr.bf16.gmra.mxu0 %v1349
  %v1903 = vpop.f32.mrf.mxu0
  %v1904 = vadd.f32 %v920, %v1903
  %v1905 = vpop.f32.mrf.mxu0
  %v1906 = vadd.f32 %v922, %v1905
  %v1907 = vpop.f32.mrf.mxu0
  %v1908 = vadd.f32 %v924, %v1907
  %v1909 = vpop.f32.mrf.mxu0
  %v1910 = vadd.f32 %v926, %v1909
  %1911 = vmatprep.mubr.bf16.mxu0 0
  %1912 = vmatmul.mubr.bf16.gmra.mxu0 %v1352
  %v1913 = vpop.f32.mrf.mxu0
  %v1914 = vadd.f32 %v930, %v1913
  %v1915 = vpop.f32.mrf.mxu0
  %v1916 = vadd.f32 %v932, %v1915
  %v1917 = vpop.f32.mrf.mxu0
  %v1918 = vadd.f32 %v934, %v1917
  %v1919 = vpop.f32.mrf.mxu0
  %v1920 = vadd.f32 %v936, %v1919
  %1921 = vmatprep.mubr.bf16.mxu0 0
  %1922 = vmatmul.mubr.bf16.gmra.mxu0 %v1355
  %v1923 = vpop.f32.mrf.mxu0
  %v1924 = vadd.f32 %v940, %v1923
  %v1925 = vpop.f32.mrf.mxu0
  %v1926 = vadd.f32 %v942, %v1925
  %v1927 = vpop.f32.mrf.mxu0
  %v1928 = vadd.f32 %v944, %v1927
  %v1929 = vpop.f32.mrf.mxu0
  %v1930 = vadd.f32 %v946, %v1929
  %1931 = vmatprep.mubr.bf16.mxu0 0
  %1932 = vmatmul.mubr.bf16.gmra.mxu0 %v1358
  %v1933 = vpop.f32.mrf.mxu0
  %v1934 = vadd.f32 %v950, %v1933
  %v1935 = vpop.f32.mrf.mxu0
  %v1936 = vadd.f32 %v952, %v1935
  %v1937 = vpop.f32.mrf.mxu0
  %v1938 = vadd.f32 %v954, %v1937
  %v1939 = vpop.f32.mrf.mxu0
  %v1940 = vadd.f32 %v956, %v1939
  %1941 = vmatprep.mubr.bf16.mxu0 0
  %1942 = vmatmul.mubr.bf16.gmra.mxu0 %v1361
  %v1943 = vpop.f32.mrf.mxu0
  %v1944 = vadd.f32 %v960, %v1943
  %v1945 = vpop.f32.mrf.mxu0
  %v1946 = vadd.f32 %v962, %v1945
  %v1947 = vpop.f32.mrf.mxu0
  %v1948 = vadd.f32 %v964, %v1947
  %v1949 = vpop.f32.mrf.mxu0
  %v1950 = vadd.f32 %v966, %v1949
  %1951 = vmatprep.mubr.bf16.mxu0 0
  %1952 = vmatmul.mubr.bf16.gmra.mxu0 %v1364
  %v1953 = vpop.f32.mrf.mxu0
  %v1954 = vadd.f32 %v970, %v1953
  %v1955 = vpop.f32.mrf.mxu0
  %v1956 = vadd.f32 %v972, %v1955
  %v1957 = vpop.f32.mrf.mxu0
  %v1958 = vadd.f32 %v974, %v1957
  %v1959 = vpop.f32.mrf.mxu0
  %v1960 = vadd.f32 %v976, %v1959
  %1961 = vmatprep.mubr.bf16.mxu0 0
  %1962 = vmatmul.mubr.bf16.gmra.mxu0 %v1367
  %v1963 = vpop.f32.mrf.mxu0
  %v1964 = vadd.f32 %v980, %v1963
  %v1965 = vpop.f32.mrf.mxu0
  %v1966 = vadd.f32 %v982, %v1965
  %v1967 = vpop.f32.mrf.mxu0
  %v1968 = vadd.f32 %v984, %v1967
  %v1969 = vpop.f32.mrf.mxu0
  %v1970 = vadd.f32 %v986, %v1969
  %1971 = vdwg.mxu0
  %1972 = vmatprep.subr.bf16.mxu0 0
  %1973 = vmatpush1.bf16.msra.mxu0 0
  %1974 = vmatprep.subr.bf16.mxu0 0
  %1975 = vmatpush1.bf16.msra.mxu0 0
  %1976 = vmatprep.subr.bf16.mxu0 0
  %1977 = vmatpush1.bf16.msra.mxu0 0
  %1978 = vmatprep.subr.bf16.mxu0 0
  %1979 = vmatpush1.bf16.msra.mxu0 0
  %1980 = vmatprep.subr.bf16.mxu0 %v1391
  %1981 = vmatpush1.bf16.msra.mxu0 %v1388
  %1982 = vmatprep.subr.bf16.mxu0 %v1288
  %1983 = vmatpush1.bf16.msra.mxu0 %v1287
  %1984 = vmatprep.subr.bf16.mxu0 %v1280
  %1985 = vmatpush1.bf16.msra.mxu0 %v1279
  %1986 = vmatprep.subr.bf16.mxu0 %v1272
  %1987 = vmatpush1.bf16.msra.mxu0 %v1271
  %1988 = vmatprep.subr.bf16.mxu0 0
  %1989 = vmatpush2.bf16.msra.mxu0 0
  %1990 = vmatprep.subr.bf16.mxu0 0
  %1991 = vmatpush2.bf16.msra.mxu0 0
  %1992 = vmatprep.subr.bf16.mxu0 0
  %1993 = vmatpush2.bf16.msra.mxu0 0
  %1994 = vmatprep.subr.bf16.mxu0 0
  %1995 = vmatpush2.bf16.msra.mxu0 0
  %1996 = vmatprep.subr.bf16.mxu0 0
  %1997 = vmatpush2.bf16.msra.mxu0 0
  %1998 = vmatprep.subr.bf16.mxu0 0
  %1999 = vmatpush2.bf16.msra.mxu0 0
  %2000 = vmatprep.subr.bf16.mxu0 0
  %2001 = vmatpush2.bf16.msra.mxu0 0
  %2002 = vmatprep.subr.bf16.mxu0 0
  %2003 = vmatpush2.bf16.msra.mxu0 0
  %2004 = vmatprep.mubr.bf16.mxu0 0
  %2005 = vmatmul.mubr.bf16.gmra.mxu0 %v1322
  %v2006 = vpop.f32.mrf.mxu0
  %v2007 = vadd.f32 %v1023, %v2006
  %v2008 = vpop.f32.mrf.mxu0
  %v2009 = vadd.f32 %v1025, %v2008
  %v2010 = vpop.f32.mrf.mxu0
  %v2011 = vadd.f32 %v1027, %v2010
  %v2012 = vpop.f32.mrf.mxu0
  %v2013 = vadd.f32 %v1029, %v2012
  %2014 = vmatprep.mubr.bf16.mxu0 0
  %2015 = vmatmul.mubr.bf16.gmra.mxu0 %v1325
  %v2016 = vpop.f32.mrf.mxu0
  %v2017 = vadd.f32 %v1033, %v2016
  %v2018 = vpop.f32.mrf.mxu0
  %v2019 = vadd.f32 %v1035, %v2018
  %v2020 = vpop.f32.mrf.mxu0
  %v2021 = vadd.f32 %v1037, %v2020
  %v2022 = vpop.f32.mrf.mxu0
  %v2023 = vadd.f32 %v1039, %v2022
  %2024 = vmatprep.mubr.bf16.mxu0 0
  %2025 = vmatmul.mubr.bf16.gmra.mxu0 %v1328
  %v2026 = vpop.f32.mrf.mxu0
  %v2027 = vadd.f32 %v1043, %v2026
  %v2028 = vpop.f32.mrf.mxu0
  %v2029 = vadd.f32 %v1045, %v2028
  %v2030 = vpop.f32.mrf.mxu0
  %v2031 = vadd.f32 %v1047, %v2030
  %v2032 = vpop.f32.mrf.mxu0
  %v2033 = vadd.f32 %v1049, %v2032
  %2034 = vmatprep.mubr.bf16.mxu0 0
  %2035 = vmatmul.mubr.bf16.gmra.mxu0 %v1331
  %v2036 = vpop.f32.mrf.mxu0
  %v2037 = vadd.f32 %v1053, %v2036
  %v2038 = vpop.f32.mrf.mxu0
  %v2039 = vadd.f32 %v1055, %v2038
  %v2040 = vpop.f32.mrf.mxu0
  %v2041 = vadd.f32 %v1057, %v2040
  %v2042 = vpop.f32.mrf.mxu0
  %v2043 = vadd.f32 %v1059, %v2042
  %2044 = vmatprep.mubr.bf16.mxu0 0
  %2045 = vmatmul.mubr.bf16.gmra.mxu0 %v1334
  %v2046 = vpop.f32.mrf.mxu0
  %v2047 = vadd.f32 %v1063, %v2046
  %v2048 = vpop.f32.mrf.mxu0
  %v2049 = vadd.f32 %v1065, %v2048
  %v2050 = vpop.f32.mrf.mxu0
  %v2051 = vadd.f32 %v1067, %v2050
  %v2052 = vpop.f32.mrf.mxu0
  %v2053 = vadd.f32 %v1069, %v2052
  %2054 = vmatprep.mubr.bf16.mxu0 0
  %2055 = vmatmul.mubr.bf16.gmra.mxu0 %v1337
  %v2056 = vpop.f32.mrf.mxu0
  %v2057 = vadd.f32 %v1073, %v2056
  %v2058 = vpop.f32.mrf.mxu0
  %v2059 = vadd.f32 %v1075, %v2058
  %v2060 = vpop.f32.mrf.mxu0
  %v2061 = vadd.f32 %v1077, %v2060
  %v2062 = vpop.f32.mrf.mxu0
  %v2063 = vadd.f32 %v1079, %v2062
  %2064 = vmatprep.mubr.bf16.mxu0 0
  %2065 = vmatmul.mubr.bf16.gmra.mxu0 %v1340
  %v2066 = vpop.f32.mrf.mxu0
  %v2067 = vadd.f32 %v1083, %v2066
  %v2068 = vpop.f32.mrf.mxu0
  %v2069 = vadd.f32 %v1085, %v2068
  %v2070 = vpop.f32.mrf.mxu0
  %v2071 = vadd.f32 %v1087, %v2070
  %v2072 = vpop.f32.mrf.mxu0
  %v2073 = vadd.f32 %v1089, %v2072
  %2074 = vmatprep.mubr.bf16.mxu0 0
  %2075 = vmatmul.mubr.bf16.gmra.mxu0 %v1343
  %v2076 = vpop.f32.mrf.mxu0
  %v2077 = vadd.f32 %v1093, %v2076
  %v2078 = vpop.f32.mrf.mxu0
  %v2079 = vadd.f32 %v1095, %v2078
  %v2080 = vpop.f32.mrf.mxu0
  %v2081 = vadd.f32 %v1097, %v2080
  %v2082 = vpop.f32.mrf.mxu0
  %v2083 = vadd.f32 %v1099, %v2082
  %2084 = vmatprep.mubr.bf16.mxu0 0
  %2085 = vmatmul.mubr.bf16.gmra.mxu0 %v1346
  %v2086 = vpop.f32.mrf.mxu0
  %v2087 = vadd.f32 %v1103, %v2086
  %v2088 = vpop.f32.mrf.mxu0
  %v2089 = vadd.f32 %v1105, %v2088
  %v2090 = vpop.f32.mrf.mxu0
  %v2091 = vadd.f32 %v1107, %v2090
  %v2092 = vpop.f32.mrf.mxu0
  %v2093 = vadd.f32 %v1109, %v2092
  %2094 = vmatprep.mubr.bf16.mxu0 0
  %2095 = vmatmul.mubr.bf16.gmra.mxu0 %v1349
  %v2096 = vpop.f32.mrf.mxu0
  %v2097 = vadd.f32 %v1113, %v2096
  %v2098 = vpop.f32.mrf.mxu0
  %v2099 = vadd.f32 %v1115, %v2098
  %v2100 = vpop.f32.mrf.mxu0
  %v2101 = vadd.f32 %v1117, %v2100
  %v2102 = vpop.f32.mrf.mxu0
  %v2103 = vadd.f32 %v1119, %v2102
  %2104 = vmatprep.mubr.bf16.mxu0 0
  %2105 = vmatmul.mubr.bf16.gmra.mxu0 %v1352
  %v2106 = vpop.f32.mrf.mxu0
  %v2107 = vadd.f32 %v1123, %v2106
  %v2108 = vpop.f32.mrf.mxu0
  %v2109 = vadd.f32 %v1125, %v2108
  %v2110 = vpop.f32.mrf.mxu0
  %v2111 = vadd.f32 %v1127, %v2110
  %v2112 = vpop.f32.mrf.mxu0
  %v2113 = vadd.f32 %v1129, %v2112
  %2114 = vmatprep.mubr.bf16.mxu0 0
  %2115 = vmatmul.mubr.bf16.gmra.mxu0 %v1355
  %v2116 = vpop.f32.mrf.mxu0
  %v2117 = vadd.f32 %v1133, %v2116
  %v2118 = vpop.f32.mrf.mxu0
  %v2119 = vadd.f32 %v1135, %v2118
  %v2120 = vpop.f32.mrf.mxu0
  %v2121 = vadd.f32 %v1137, %v2120
  %v2122 = vpop.f32.mrf.mxu0
  %v2123 = vadd.f32 %v1139, %v2122
  %2124 = vmatprep.mubr.bf16.mxu0 0
  %2125 = vmatmul.mubr.bf16.gmra.mxu0 %v1358
  %v2126 = vpop.f32.mrf.mxu0
  %v2127 = vadd.f32 %v1143, %v2126
  %v2128 = vpop.f32.mrf.mxu0
  %v2129 = vadd.f32 %v1145, %v2128
  %v2130 = vpop.f32.mrf.mxu0
  %v2131 = vadd.f32 %v1147, %v2130
  %v2132 = vpop.f32.mrf.mxu0
  %v2133 = vadd.f32 %v1149, %v2132
  %2134 = vmatprep.mubr.bf16.mxu0 0
  %2135 = vmatmul.mubr.bf16.gmra.mxu0 %v1361
  %v2136 = vpop.f32.mrf.mxu0
  %v2137 = vadd.f32 %v1153, %v2136
  %v2138 = vpop.f32.mrf.mxu0
  %v2139 = vadd.f32 %v1155, %v2138
  %v2140 = vpop.f32.mrf.mxu0
  %v2141 = vadd.f32 %v1157, %v2140
  %v2142 = vpop.f32.mrf.mxu0
  %v2143 = vadd.f32 %v1159, %v2142
  %2144 = vmatprep.mubr.bf16.mxu0 0
  %2145 = vmatmul.mubr.bf16.gmra.mxu0 %v1364
  %v2146 = vpop.f32.mrf.mxu0
  %v2147 = vadd.f32 %v1163, %v2146
  %v2148 = vpop.f32.mrf.mxu0
  %v2149 = vadd.f32 %v1165, %v2148
  %v2150 = vpop.f32.mrf.mxu0
  %v2151 = vadd.f32 %v1167, %v2150
  %v2152 = vpop.f32.mrf.mxu0
  %v2153 = vadd.f32 %v1169, %v2152
  %2154 = vmatprep.mubr.bf16.mxu0 0
  %2155 = vmatmul.mubr.bf16.gmra.mxu0 %v1367
  %v2156 = vpop.f32.mrf.mxu0
  %v2157 = vadd.f32 %v1173, %v2156
  %v2158 = vpop.f32.mrf.mxu0
  %v2159 = vadd.f32 %v1175, %v2158
  %v2160 = vpop.f32.mrf.mxu0
  %v2161 = vadd.f32 %v1177, %v2160
  %v2162 = vpop.f32.mrf.mxu0
  %v2163 = vadd.f32 %v1179, %v2162
  %2164 = vdwg.mxu0
  %v2165 = vld [vmem:[%s0 + $0x2] sm:$0xff]
  %v2166 = vld [vmem:[%s0 + $0xa] sm:$0xff]
  %v2167 = vld [vmem:[%s0 + $0x1a] sm:$0xff]
  %v2168 = vld [vmem:[%s0 + $0x22] sm:$0xff]
  %v2169 = vld [vmem:[%s0 + $0x32] sm:$0xff]
  %v2170 = vld [vmem:[%s0 + $0x3a] sm:$0xff]
  %v2171 = vld [vmem:[%s0 + $0x4a] sm:$0xff]
  %v2172 = vld [vmem:[%s0 + $0x52] sm:$0xff]
  %v2173 = vld [vmem:[%s0 + $0x62] sm:$0xff]
  %v2174 = vld [vmem:[%s0 + $0x6a] sm:$0xff]
  %v2175 = vld [vmem:[%s0 + $0x7a] sm:$0xff]
  %v2176 = vld [vmem:[%s0 + $0x82] sm:$0xff]
  %v2177 = vld [vmem:[%s0 + $0x92] sm:$0xff]
  %v2178 = vld [vmem:[%s0 + $0x9a] sm:$0xff]
  %v2179 = vld [vmem:[%s0 + $0xaa] sm:$0xff]
  %v2180 = vld [vmem:[%s0 + $0xb2] sm:$0xff]
  %v2181 = vld [vmem:[%s0 + $0xc2] sm:$0xff]
  %v2182 = vld [vmem:[%s0 + $0xca] sm:$0xff]
  %v2183 = vld [vmem:[%s0 + $0xda] sm:$0xff]
  %v2184 = vld [vmem:[%s0 + $0xe2] sm:$0xff]
  %v2185 = vld [vmem:[%s0 + $0xf2] sm:$0xff]
  %v2186 = vld [vmem:[%s0 + $0xfa] sm:$0xff]
  %v2187 = vld [vmem:[%s0 + $0x10a] sm:$0xff]
  %v2188 = vld [vmem:[%s0 + $0x112] sm:$0xff]
  %v2189 = vld [vmem:[%s0 + $0x122] sm:$0xff]
  %v2190 = vld [vmem:[%s0 + $0x12a] sm:$0xff]
  %v2191 = vld [vmem:[%s0 + $0x13a] sm:$0xff]
  %v2192 = vld [vmem:[%s0 + $0x142] sm:$0xff]
  %v2193 = vld [vmem:[%s0 + $0x152] sm:$0xff]
  %v2194 = vld [vmem:[%s0 + $0x15a] sm:$0xff]
  %v2195 = vld [vmem:[%s0 + $0x16a] sm:$0xff]
  %v2196 = vld [vmem:[%s0 + $0x172] sm:$0xff]
  %v2197 = vpack.c.bf16 %v2166, %v2165
  %v2198 = vpack.c.bf16 %v2168, %v2167
  %v2199 = vpack.c.bf16 %v2170, %v2169
  %v2200 = vpack.c.bf16 %v2172, %v2171
  %v2201 = vpack.c.bf16 %v2174, %v2173
  %v2202 = vpack.c.bf16 %v2176, %v2175
  %v2203 = vpack.c.bf16 %v2178, %v2177
  %v2204 = vpack.c.bf16 %v2180, %v2179
  %v2205 = vpack.c.bf16 %v2182, %v2181
  %v2206 = vpack.c.bf16 %v2184, %v2183
  %v2207 = vpack.c.bf16 %v2186, %v2185
  %v2208 = vpack.c.bf16 %v2188, %v2187
  %v2209 = vpack.c.bf16 %v2190, %v2189
  %v2210 = vpack.c.bf16 %v2192, %v2191
  %v2211 = vpack.c.bf16 %v2194, %v2193
  %v2212 = vpack.c.bf16 %v2196, %v2195
  %s2213 = scalar_lea.vmem %s1, 448
  %v2214 = vld [vmem:[%s2213] sm:$0xff]
  %v2215 = vld [vmem:[%s2213 + $0x8] sm:$0xff]
  %v2216 = vld [vmem:[%s2213 + $0x10] sm:$0xff]
  %v2217 = vld [vmem:[%s2213 + $0x18] sm:$0xff]
  %v2218 = vld [vmem:[%s2213 + $0x20] sm:$0xff]
  %v2219 = vld [vmem:[%s2213 + $0x28] sm:$0xff]
  %v2220 = vld [vmem:[%s2213 + $0x30] sm:$0xff]
  %v2221 = vld [vmem:[%s2213 + $0x38] sm:$0xff]
  %v2222 = vld [vmem:[%s2213 + $0x40] sm:$0xff]
  %v2223 = vld [vmem:[%s2213 + $0x48] sm:$0xff]
  %v2224 = vld [vmem:[%s2213 + $0x50] sm:$0xff]
  %v2225 = vld [vmem:[%s2213 + $0x58] sm:$0xff]
  %v2226 = vld [vmem:[%s2213 + $0x60] sm:$0xff]
  %v2227 = vld [vmem:[%s2213 + $0x68] sm:$0xff]
  %v2228 = vld [vmem:[%s2213 + $0x70] sm:$0xff]
  %v2229 = vld [vmem:[%s2213 + $0x78] sm:$0xff]
  %v2230 = vld [vmem:[%s2213 + $0x80] sm:$0xff]
  %v2231 = vld [vmem:[%s2213 + $0x88] sm:$0xff]
  %v2232 = vld [vmem:[%s2213 + $0x90] sm:$0xff]
  %v2233 = vld [vmem:[%s2213 + $0x98] sm:$0xff]
  %v2234 = vld [vmem:[%s2213 + $0xa0] sm:$0xff]
  %v2235 = vld [vmem:[%s2213 + $0xa8] sm:$0xff]
  %v2236 = vld [vmem:[%s2213 + $0xb0] sm:$0xff]
  %v2237 = vld [vmem:[%s2213 + $0xb8] sm:$0xff]
  %v2238 = vld [vmem:[%s2213 + $0xc0] sm:$0x77]
  %v2239 = vld [vmem:[%s2213 + $0xc8] sm:$0x77]
  %v2240 = vld [vmem:[%s2213 + $0xd0] sm:$0x77]
  %v2241 = vld [vmem:[%s2213 + $0xd8] sm:$0x77]
  %v2270 = vunpack.c.l.b16 %v2214
  %v2271 = vunpack.c.h.b16 %v2214
  %v2272 = vunpack.c.l.b16 %v2215
  %v2273 = vunpack.c.h.b16 %v2215
  %v2274 = vunpack.c.l.b16 %v2216
  %v2275 = vunpack.c.h.b16 %v2216
  %v2276 = vunpack.c.l.b16 %v2217
  %v2277 = vunpack.c.h.b16 %v2217
  %v2278 = vunpack.c.l.b16 %v2218
  %v2279 = vunpack.c.h.b16 %v2218
  %v2280 = vunpack.c.l.b16 %v2219
  %v2281 = vunpack.c.h.b16 %v2219
  %v2282 = vunpack.c.l.b16 %v2220
  %v2283 = vunpack.c.h.b16 %v2220
  %v2284 = vunpack.c.l.b16 %v2221
  %v2285 = vunpack.c.h.b16 %v2221
  %v2286 = vunpack.c.l.b16 %v2222
  %v2287 = vunpack.c.h.b16 %v2222
  %v2288 = vunpack.c.l.b16 %v2223
  %v2289 = vunpack.c.h.b16 %v2223
  %v2290 = vunpack.c.l.b16 %v2224
  %v2291 = vunpack.c.h.b16 %v2224
  %v2292 = vunpack.c.l.b16 %v2225
  %v2293 = vunpack.c.h.b16 %v2225
  %v2294 = vunpack.c.l.b16 %v2226
  %v2295 = vunpack.c.h.b16 %v2226
  %v2296 = vunpack.c.l.b16 %v2227
  %v2297 = vunpack.c.h.b16 %v2227
  %v2298 = vunpack.c.l.b16 %v2228
  %v2299 = vunpack.c.h.b16 %v2228
  %v2300 = vunpack.c.l.b16 %v2229
  %v2301 = vunpack.c.h.b16 %v2229
  %v2302 = vunpack.c.l.b16 %v2230
  %v2303 = vunpack.c.h.b16 %v2230
  %v2304 = vunpack.c.l.b16 %v2231
  %v2305 = vunpack.c.h.b16 %v2231
  %v2306 = vunpack.c.l.b16 %v2232
  %v2307 = vunpack.c.h.b16 %v2232
  %v2308 = vunpack.c.l.b16 %v2233
  %v2309 = vunpack.c.h.b16 %v2233
  %v2310 = vunpack.c.l.b16 %v2234
  %v2311 = vunpack.c.h.b16 %v2234
  %v2312 = vunpack.c.l.b16 %v2235
  %v2313 = vunpack.c.h.b16 %v2235
  %v2314 = vunpack.c.l.b16 %v2236
  %v2315 = vunpack.c.h.b16 %v2236
  %v2316 = vunpack.c.l.b16 %v2237
  %v2317 = vunpack.c.h.b16 %v2237
  %v2318 = vunpack.c.l.b16 %v2238
  %v2319 = vunpack.c.h.b16 %v2238
  %v2320 = vunpack.c.l.b16 %v2239
  %v2321 = vunpack.c.h.b16 %v2239
  %v2322 = vunpack.c.l.b16 %v2240
  %v2323 = vunpack.c.h.b16 %v2240
  %v2324 = vunpack.c.l.b16 %v2241
  %v2325 = vunpack.c.h.b16 %v2241
  %v2326 = vpack.c.b16 %v2278, %v2270
  %v2327 = vpack.c.b16 %v2279, %v2271
  %v2328 = vpack.c.b16 %v2280, %v2272
  %v2329 = vpack.c.b16 %v2281, %v2273
  %v2330 = vpack.c.b16 %v2282, %v2274
  %v2331 = vpack.c.b16 %v2283, %v2275
  %v2332 = vpack.c.b16 %v2284, %v2276
  %v2333 = vpack.c.b16 %v2285, %v2277
  %v2334 = vpack.c.b16 %v2294, %v2286
  %v2335 = vpack.c.b16 %v2295, %v2287
  %v2336 = vpack.c.b16 %v2296, %v2288
  %v2337 = vpack.c.b16 %v2297, %v2289
  %v2338 = vpack.c.b16 %v2298, %v2290
  %v2339 = vpack.c.b16 %v2299, %v2291
  %v2340 = vpack.c.b16 %v2300, %v2292
  %v2341 = vpack.c.b16 %v2301, %v2293
  %v2342 = vpack.c.b16 %v2310, %v2302
  %v2343 = vpack.c.b16 %v2311, %v2303
  %v2344 = vpack.c.b16 %v2312, %v2304
  %v2345 = vpack.c.b16 %v2313, %v2305
  %v2346 = vpack.c.b16 %v2314, %v2306
  %v2347 = vpack.c.b16 %v2315, %v2307
  %v2348 = vpack.c.b16 %v2316, %v2308
  %v2349 = vpack.c.b16 %v2317, %v2309
  %v2350 = vpack.c.b16 %v2318, %v2318
  %v2351 = vpack.c.b16 %v2319, %v2319
  %v2352 = vpack.c.b16 %v2320, %v2320
  %v2353 = vpack.c.b16 %v2321, %v2321
  %v2354 = vpack.c.b16 %v2322, %v2322
  %v2355 = vpack.c.b16 %v2323, %v2323
  %v2356 = vpack.c.b16 %v2324, %v2324
  %v2357 = vpack.c.b16 %v2325, %v2325
  %v2383 = vsel %vm335, %v2197, 0
  %v2386 = vsel %vm335, %v2198, 0
  %v2389 = vsel %vm335, %v2199, 0
  %v2392 = vsel %vm335, %v2200, 0
  %v2395 = vsel %vm335, %v2201, 0
  %v2398 = vsel %vm335, %v2202, 0
  %v2401 = vsel %vm335, %v2203, 0
  %v2404 = vsel %vm335, %v2204, 0
  %v2407 = vsel %vm335, %v2205, 0
  %v2410 = vsel %vm335, %v2206, 0
  %v2413 = vsel %vm335, %v2207, 0
  %v2416 = vsel %vm335, %v2208, 0
  %v2419 = vsel %vm335, %v2209, 0
  %v2422 = vsel %vm335, %v2210, 0
  %v2425 = vsel %vm335, %v2211, 0
  %v2428 = vsel %vm335, %v2212, 0
  %v2431 = vsel %vm384, %v2350, 0
  %v2434 = vsel %vm384, %v2351, 0
  %v2437 = vsel %vm384, %v2352, 0
  %v2440 = vsel %vm384, %v2353, 0
  %v2443 = vsel %vm384, %v2354, 0
  %v2446 = vsel %vm384, %v2355, 0
  %v2449 = vsel %vm384, %v2356, 0
  %v2452 = vsel %vm384, %v2357, 0
  %2454 = vmatprep.subr.bf16.mxu0 0
  %2455 = vmatpush1.bf16.msra.mxu0 0
  %2456 = vmatprep.subr.bf16.mxu0 0
  %2457 = vmatpush1.bf16.msra.mxu0 0
  %2458 = vmatprep.subr.bf16.mxu0 0
  %2459 = vmatpush1.bf16.msra.mxu0 0
  %2460 = vmatprep.subr.bf16.mxu0 0
  %2461 = vmatpush1.bf16.msra.mxu0 0
  %2462 = vmatprep.subr.bf16.mxu0 %v2434
  %2463 = vmatpush1.bf16.msra.mxu0 %v2431
  %2464 = vmatprep.subr.bf16.mxu0 %v2343
  %2465 = vmatpush1.bf16.msra.mxu0 %v2342
  %2466 = vmatprep.subr.bf16.mxu0 %v2335
  %2467 = vmatpush1.bf16.msra.mxu0 %v2334
  %2468 = vmatprep.subr.bf16.mxu0 %v2327
  %2469 = vmatpush1.bf16.msra.mxu0 %v2326
  %2470 = vmatprep.subr.bf16.mxu0 0
  %2471 = vmatpush2.bf16.msra.mxu0 0
  %2472 = vmatprep.subr.bf16.mxu0 0
  %2473 = vmatpush2.bf16.msra.mxu0 0
  %2474 = vmatprep.subr.bf16.mxu0 0
  %2475 = vmatpush2.bf16.msra.mxu0 0
  %2476 = vmatprep.subr.bf16.mxu0 0
  %2477 = vmatpush2.bf16.msra.mxu0 0
  %2478 = vmatprep.subr.bf16.mxu0 0
  %2479 = vmatpush2.bf16.msra.mxu0 0
  %2480 = vmatprep.subr.bf16.mxu0 0
  %2481 = vmatpush2.bf16.msra.mxu0 0
  %2482 = vmatprep.subr.bf16.mxu0 0
  %2483 = vmatpush2.bf16.msra.mxu0 0
  %2484 = vmatprep.subr.bf16.mxu0 0
  %2485 = vmatpush2.bf16.msra.mxu0 0
  %2486 = vmatprep.mubr.bf16.mxu0 0
  %2487 = vmatmul.mubr.bf16.gmra.mxu0 %v2383
  %v2488 = vpop.f32.mrf.mxu0
  %v2489 = vadd.f32 0.0, %v2488
  %v2490 = vpop.f32.mrf.mxu0
  %v2491 = vadd.f32 0.0, %v2490
  %v2492 = vpop.f32.mrf.mxu0
  %v2493 = vadd.f32 0.0, %v2492
  %v2494 = vpop.f32.mrf.mxu0
  %v2495 = vadd.f32 0.0, %v2494
  %2496 = vmatprep.mubr.bf16.mxu0 0
  %2497 = vmatmul.mubr.bf16.gmra.mxu0 %v2386
  %v2498 = vpop.f32.mrf.mxu0
  %v2499 = vadd.f32 0.0, %v2498
  %v2500 = vpop.f32.mrf.mxu0
  %v2501 = vadd.f32 0.0, %v2500
  %v2502 = vpop.f32.mrf.mxu0
  %v2503 = vadd.f32 0.0, %v2502
  %v2504 = vpop.f32.mrf.mxu0
  %v2505 = vadd.f32 0.0, %v2504
  %2506 = vmatprep.mubr.bf16.mxu0 0
  %2507 = vmatmul.mubr.bf16.gmra.mxu0 %v2389
  %v2508 = vpop.f32.mrf.mxu0
  %v2509 = vadd.f32 0.0, %v2508
  %v2510 = vpop.f32.mrf.mxu0
  %v2511 = vadd.f32 0.0, %v2510
  %v2512 = vpop.f32.mrf.mxu0
  %v2513 = vadd.f32 0.0, %v2512
  %v2514 = vpop.f32.mrf.mxu0
  %v2515 = vadd.f32 0.0, %v2514
  %2516 = vmatprep.mubr.bf16.mxu0 0
  %2517 = vmatmul.mubr.bf16.gmra.mxu0 %v2392
  %v2518 = vpop.f32.mrf.mxu0
  %v2519 = vadd.f32 0.0, %v2518
  %v2520 = vpop.f32.mrf.mxu0
  %v2521 = vadd.f32 0.0, %v2520
  %v2522 = vpop.f32.mrf.mxu0
  %v2523 = vadd.f32 0.0, %v2522
  %v2524 = vpop.f32.mrf.mxu0
  %v2525 = vadd.f32 0.0, %v2524
  %2526 = vmatprep.mubr.bf16.mxu0 0
  %2527 = vmatmul.mubr.bf16.gmra.mxu0 %v2395
  %v2528 = vpop.f32.mrf.mxu0
  %v2529 = vadd.f32 0.0, %v2528
  %v2530 = vpop.f32.mrf.mxu0
  %v2531 = vadd.f32 0.0, %v2530
  %v2532 = vpop.f32.mrf.mxu0
  %v2533 = vadd.f32 0.0, %v2532
  %v2534 = vpop.f32.mrf.mxu0
  %v2535 = vadd.f32 0.0, %v2534
  %2536 = vmatprep.mubr.bf16.mxu0 0
  %2537 = vmatmul.mubr.bf16.gmra.mxu0 %v2398
  %v2538 = vpop.f32.mrf.mxu0
  %v2539 = vadd.f32 0.0, %v2538
  %v2540 = vpop.f32.mrf.mxu0
  %v2541 = vadd.f32 0.0, %v2540
  %v2542 = vpop.f32.mrf.mxu0
  %v2543 = vadd.f32 0.0, %v2542
  %v2544 = vpop.f32.mrf.mxu0
  %v2545 = vadd.f32 0.0, %v2544
  %2546 = vmatprep.mubr.bf16.mxu0 0
  %2547 = vmatmul.mubr.bf16.gmra.mxu0 %v2401
  %v2548 = vpop.f32.mrf.mxu0
  %v2549 = vadd.f32 0.0, %v2548
  %v2550 = vpop.f32.mrf.mxu0
  %v2551 = vadd.f32 0.0, %v2550
  %v2552 = vpop.f32.mrf.mxu0
  %v2553 = vadd.f32 0.0, %v2552
  %v2554 = vpop.f32.mrf.mxu0
  %v2555 = vadd.f32 0.0, %v2554
  %2556 = vmatprep.mubr.bf16.mxu0 0
  %2557 = vmatmul.mubr.bf16.gmra.mxu0 %v2404
  %v2558 = vpop.f32.mrf.mxu0
  %v2559 = vadd.f32 0.0, %v2558
  %v2560 = vpop.f32.mrf.mxu0
  %v2561 = vadd.f32 0.0, %v2560
  %v2562 = vpop.f32.mrf.mxu0
  %v2563 = vadd.f32 0.0, %v2562
  %v2564 = vpop.f32.mrf.mxu0
  %v2565 = vadd.f32 0.0, %v2564
  %2566 = vmatprep.mubr.bf16.mxu0 0
  %2567 = vmatmul.mubr.bf16.gmra.mxu0 %v2407
  %v2568 = vpop.f32.mrf.mxu0
  %v2569 = vadd.f32 0.0, %v2568
  %v2570 = vpop.f32.mrf.mxu0
  %v2571 = vadd.f32 0.0, %v2570
  %v2572 = vpop.f32.mrf.mxu0
  %v2573 = vadd.f32 0.0, %v2572
  %v2574 = vpop.f32.mrf.mxu0
  %v2575 = vadd.f32 0.0, %v2574
  %2576 = vmatprep.mubr.bf16.mxu0 0
  %2577 = vmatmul.mubr.bf16.gmra.mxu0 %v2410
  %v2578 = vpop.f32.mrf.mxu0
  %v2579 = vadd.f32 0.0, %v2578
  %v2580 = vpop.f32.mrf.mxu0
  %v2581 = vadd.f32 0.0, %v2580
  %v2582 = vpop.f32.mrf.mxu0
  %v2583 = vadd.f32 0.0, %v2582
  %v2584 = vpop.f32.mrf.mxu0
  %v2585 = vadd.f32 0.0, %v2584
  %2586 = vmatprep.mubr.bf16.mxu0 0
  %2587 = vmatmul.mubr.bf16.gmra.mxu0 %v2413
  %v2588 = vpop.f32.mrf.mxu0
  %v2589 = vadd.f32 0.0, %v2588
  %v2590 = vpop.f32.mrf.mxu0
  %v2591 = vadd.f32 0.0, %v2590
  %v2592 = vpop.f32.mrf.mxu0
  %v2593 = vadd.f32 0.0, %v2592
  %v2594 = vpop.f32.mrf.mxu0
  %v2595 = vadd.f32 0.0, %v2594
  %2596 = vmatprep.mubr.bf16.mxu0 0
  %2597 = vmatmul.mubr.bf16.gmra.mxu0 %v2416
  %v2598 = vpop.f32.mrf.mxu0
  %v2599 = vadd.f32 0.0, %v2598
  %v2600 = vpop.f32.mrf.mxu0
  %v2601 = vadd.f32 0.0, %v2600
  %v2602 = vpop.f32.mrf.mxu0
  %v2603 = vadd.f32 0.0, %v2602
  %v2604 = vpop.f32.mrf.mxu0
  %v2605 = vadd.f32 0.0, %v2604
  %2606 = vmatprep.mubr.bf16.mxu0 0
  %2607 = vmatmul.mubr.bf16.gmra.mxu0 %v2419
  %v2608 = vpop.f32.mrf.mxu0
  %v2609 = vadd.f32 0.0, %v2608
  %v2610 = vpop.f32.mrf.mxu0
  %v2611 = vadd.f32 0.0, %v2610
  %v2612 = vpop.f32.mrf.mxu0
  %v2613 = vadd.f32 0.0, %v2612
  %v2614 = vpop.f32.mrf.mxu0
  %v2615 = vadd.f32 0.0, %v2614
  %2616 = vmatprep.mubr.bf16.mxu0 0
  %2617 = vmatmul.mubr.bf16.gmra.mxu0 %v2422
  %v2618 = vpop.f32.mrf.mxu0
  %v2619 = vadd.f32 0.0, %v2618
  %v2620 = vpop.f32.mrf.mxu0
  %v2621 = vadd.f32 0.0, %v2620
  %v2622 = vpop.f32.mrf.mxu0
  %v2623 = vadd.f32 0.0, %v2622
  %v2624 = vpop.f32.mrf.mxu0
  %v2625 = vadd.f32 0.0, %v2624
  %2626 = vmatprep.mubr.bf16.mxu0 0
  %2627 = vmatmul.mubr.bf16.gmra.mxu0 %v2425
  %v2628 = vpop.f32.mrf.mxu0
  %v2629 = vadd.f32 0.0, %v2628
  %v2630 = vpop.f32.mrf.mxu0
  %v2631 = vadd.f32 0.0, %v2630
  %v2632 = vpop.f32.mrf.mxu0
  %v2633 = vadd.f32 0.0, %v2632
  %v2634 = vpop.f32.mrf.mxu0
  %v2635 = vadd.f32 0.0, %v2634
  %2636 = vmatprep.mubr.bf16.mxu0 0
  %2637 = vmatmul.mubr.bf16.gmra.mxu0 %v2428
  %v2638 = vpop.f32.mrf.mxu0
  %v2639 = vadd.f32 0.0, %v2638
  %v2640 = vpop.f32.mrf.mxu0
  %v2641 = vadd.f32 0.0, %v2640
  %v2642 = vpop.f32.mrf.mxu0
  %v2643 = vadd.f32 0.0, %v2642
  %v2644 = vpop.f32.mrf.mxu0
  %v2645 = vadd.f32 0.0, %v2644
  %2646 = vdwg.mxu0
  %2647 = vmatprep.subr.bf16.mxu0 0
  %2648 = vmatpush1.bf16.msra.mxu0 0
  %2649 = vmatprep.subr.bf16.mxu0 0
  %2650 = vmatpush1.bf16.msra.mxu0 0
  %2651 = vmatprep.subr.bf16.mxu0 0
  %2652 = vmatpush1.bf16.msra.mxu0 0
  %2653 = vmatprep.subr.bf16.mxu0 0
  %2654 = vmatpush1.bf16.msra.mxu0 0
  %2655 = vmatprep.subr.bf16.mxu0 %v2440
  %2656 = vmatpush1.bf16.msra.mxu0 %v2437
  %2657 = vmatprep.subr.bf16.mxu0 %v2345
  %2658 = vmatpush1.bf16.msra.mxu0 %v2344
  %2659 = vmatprep.subr.bf16.mxu0 %v2337
  %2660 = vmatpush1.bf16.msra.mxu0 %v2336
  %2661 = vmatprep.subr.bf16.mxu0 %v2329
  %2662 = vmatpush1.bf16.msra.mxu0 %v2328
  %2663 = vmatprep.subr.bf16.mxu0 0
  %2664 = vmatpush2.bf16.msra.mxu0 0
  %2665 = vmatprep.subr.bf16.mxu0 0
  %2666 = vmatpush2.bf16.msra.mxu0 0
  %2667 = vmatprep.subr.bf16.mxu0 0
  %2668 = vmatpush2.bf16.msra.mxu0 0
  %2669 = vmatprep.subr.bf16.mxu0 0
  %2670 = vmatpush2.bf16.msra.mxu0 0
  %2671 = vmatprep.subr.bf16.mxu0 0
  %2672 = vmatpush2.bf16.msra.mxu0 0
  %2673 = vmatprep.subr.bf16.mxu0 0
  %2674 = vmatpush2.bf16.msra.mxu0 0
  %2675 = vmatprep.subr.bf16.mxu0 0
  %2676 = vmatpush2.bf16.msra.mxu0 0
  %2677 = vmatprep.subr.bf16.mxu0 0
  %2678 = vmatpush2.bf16.msra.mxu0 0
  %2679 = vmatprep.mubr.bf16.mxu0 0
  %2680 = vmatmul.mubr.bf16.gmra.mxu0 %v2383
  %v2681 = vpop.f32.mrf.mxu0
  %v2682 = vadd.f32 0.0, %v2681
  %v2683 = vpop.f32.mrf.mxu0
  %v2684 = vadd.f32 0.0, %v2683
  %v2685 = vpop.f32.mrf.mxu0
  %v2686 = vadd.f32 0.0, %v2685
  %v2687 = vpop.f32.mrf.mxu0
  %v2688 = vadd.f32 0.0, %v2687
  %2689 = vmatprep.mubr.bf16.mxu0 0
  %2690 = vmatmul.mubr.bf16.gmra.mxu0 %v2386
  %v2691 = vpop.f32.mrf.mxu0
  %v2692 = vadd.f32 0.0, %v2691
  %v2693 = vpop.f32.mrf.mxu0
  %v2694 = vadd.f32 0.0, %v2693
  %v2695 = vpop.f32.mrf.mxu0
  %v2696 = vadd.f32 0.0, %v2695
  %v2697 = vpop.f32.mrf.mxu0
  %v2698 = vadd.f32 0.0, %v2697
  %2699 = vmatprep.mubr.bf16.mxu0 0
  %2700 = vmatmul.mubr.bf16.gmra.mxu0 %v2389
  %v2701 = vpop.f32.mrf.mxu0
  %v2702 = vadd.f32 0.0, %v2701
  %v2703 = vpop.f32.mrf.mxu0
  %v2704 = vadd.f32 0.0, %v2703
  %v2705 = vpop.f32.mrf.mxu0
  %v2706 = vadd.f32 0.0, %v2705
  %v2707 = vpop.f32.mrf.mxu0
  %v2708 = vadd.f32 0.0, %v2707
  %2709 = vmatprep.mubr.bf16.mxu0 0
  %2710 = vmatmul.mubr.bf16.gmra.mxu0 %v2392
  %v2711 = vpop.f32.mrf.mxu0
  %v2712 = vadd.f32 0.0, %v2711
  %v2713 = vpop.f32.mrf.mxu0
  %v2714 = vadd.f32 0.0, %v2713
  %v2715 = vpop.f32.mrf.mxu0
  %v2716 = vadd.f32 0.0, %v2715
  %v2717 = vpop.f32.mrf.mxu0
  %v2718 = vadd.f32 0.0, %v2717
  %2719 = vmatprep.mubr.bf16.mxu0 0
  %2720 = vmatmul.mubr.bf16.gmra.mxu0 %v2395
  %v2721 = vpop.f32.mrf.mxu0
  %v2722 = vadd.f32 0.0, %v2721
  %v2723 = vpop.f32.mrf.mxu0
  %v2724 = vadd.f32 0.0, %v2723
  %v2725 = vpop.f32.mrf.mxu0
  %v2726 = vadd.f32 0.0, %v2725
  %v2727 = vpop.f32.mrf.mxu0
  %v2728 = vadd.f32 0.0, %v2727
  %2729 = vmatprep.mubr.bf16.mxu0 0
  %2730 = vmatmul.mubr.bf16.gmra.mxu0 %v2398
  %v2731 = vpop.f32.mrf.mxu0
  %v2732 = vadd.f32 0.0, %v2731
  %v2733 = vpop.f32.mrf.mxu0
  %v2734 = vadd.f32 0.0, %v2733
  %v2735 = vpop.f32.mrf.mxu0
  %v2736 = vadd.f32 0.0, %v2735
  %v2737 = vpop.f32.mrf.mxu0
  %v2738 = vadd.f32 0.0, %v2737
  %2739 = vmatprep.mubr.bf16.mxu0 0
  %2740 = vmatmul.mubr.bf16.gmra.mxu0 %v2401
  %v2741 = vpop.f32.mrf.mxu0
  %v2742 = vadd.f32 0.0, %v2741
  %v2743 = vpop.f32.mrf.mxu0
  %v2744 = vadd.f32 0.0, %v2743
  %v2745 = vpop.f32.mrf.mxu0
  %v2746 = vadd.f32 0.0, %v2745
  %v2747 = vpop.f32.mrf.mxu0
  %v2748 = vadd.f32 0.0, %v2747
  %2749 = vmatprep.mubr.bf16.mxu0 0
  %2750 = vmatmul.mubr.bf16.gmra.mxu0 %v2404
  %v2751 = vpop.f32.mrf.mxu0
  %v2752 = vadd.f32 0.0, %v2751
  %v2753 = vpop.f32.mrf.mxu0
  %v2754 = vadd.f32 0.0, %v2753
  %v2755 = vpop.f32.mrf.mxu0
  %v2756 = vadd.f32 0.0, %v2755
  %v2757 = vpop.f32.mrf.mxu0
  %v2758 = vadd.f32 0.0, %v2757
  %2759 = vmatprep.mubr.bf16.mxu0 0
  %2760 = vmatmul.mubr.bf16.gmra.mxu0 %v2407
  %v2761 = vpop.f32.mrf.mxu0
  %v2762 = vadd.f32 0.0, %v2761
  %v2763 = vpop.f32.mrf.mxu0
  %v2764 = vadd.f32 0.0, %v2763
  %v2765 = vpop.f32.mrf.mxu0
  %v2766 = vadd.f32 0.0, %v2765
  %v2767 = vpop.f32.mrf.mxu0
  %v2768 = vadd.f32 0.0, %v2767
  %2769 = vmatprep.mubr.bf16.mxu0 0
  %2770 = vmatmul.mubr.bf16.gmra.mxu0 %v2410
  %v2771 = vpop.f32.mrf.mxu0
  %v2772 = vadd.f32 0.0, %v2771
  %v2773 = vpop.f32.mrf.mxu0
  %v2774 = vadd.f32 0.0, %v2773
  %v2775 = vpop.f32.mrf.mxu0
  %v2776 = vadd.f32 0.0, %v2775
  %v2777 = vpop.f32.mrf.mxu0
  %v2778 = vadd.f32 0.0, %v2777
  %2779 = vmatprep.mubr.bf16.mxu0 0
  %2780 = vmatmul.mubr.bf16.gmra.mxu0 %v2413
  %v2781 = vpop.f32.mrf.mxu0
  %v2782 = vadd.f32 0.0, %v2781
  %v2783 = vpop.f32.mrf.mxu0
  %v2784 = vadd.f32 0.0, %v2783
  %v2785 = vpop.f32.mrf.mxu0
  %v2786 = vadd.f32 0.0, %v2785
  %v2787 = vpop.f32.mrf.mxu0
  %v2788 = vadd.f32 0.0, %v2787
  %2789 = vmatprep.mubr.bf16.mxu0 0
  %2790 = vmatmul.mubr.bf16.gmra.mxu0 %v2416
  %v2791 = vpop.f32.mrf.mxu0
  %v2792 = vadd.f32 0.0, %v2791
  %v2793 = vpop.f32.mrf.mxu0
  %v2794 = vadd.f32 0.0, %v2793
  %v2795 = vpop.f32.mrf.mxu0
  %v2796 = vadd.f32 0.0, %v2795
  %v2797 = vpop.f32.mrf.mxu0
  %v2798 = vadd.f32 0.0, %v2797
  %2799 = vmatprep.mubr.bf16.mxu0 0
  %2800 = vmatmul.mubr.bf16.gmra.mxu0 %v2419
  %v2801 = vpop.f32.mrf.mxu0
  %v2802 = vadd.f32 0.0, %v2801
  %v2803 = vpop.f32.mrf.mxu0
  %v2804 = vadd.f32 0.0, %v2803
  %v2805 = vpop.f32.mrf.mxu0
  %v2806 = vadd.f32 0.0, %v2805
  %v2807 = vpop.f32.mrf.mxu0
  %v2808 = vadd.f32 0.0, %v2807
  %2809 = vmatprep.mubr.bf16.mxu0 0
  %2810 = vmatmul.mubr.bf16.gmra.mxu0 %v2422
  %v2811 = vpop.f32.mrf.mxu0
  %v2812 = vadd.f32 0.0, %v2811
  %v2813 = vpop.f32.mrf.mxu0
  %v2814 = vadd.f32 0.0, %v2813
  %v2815 = vpop.f32.mrf.mxu0
  %v2816 = vadd.f32 0.0, %v2815
  %v2817 = vpop.f32.mrf.mxu0
  %v2818 = vadd.f32 0.0, %v2817
  %2819 = vmatprep.mubr.bf16.mxu0 0
  %2820 = vmatmul.mubr.bf16.gmra.mxu0 %v2425
  %v2821 = vpop.f32.mrf.mxu0
  %v2822 = vadd.f32 0.0, %v2821
  %v2823 = vpop.f32.mrf.mxu0
  %v2824 = vadd.f32 0.0, %v2823
  %v2825 = vpop.f32.mrf.mxu0
  %v2826 = vadd.f32 0.0, %v2825
  %v2827 = vpop.f32.mrf.mxu0
  %v2828 = vadd.f32 0.0, %v2827
  %2829 = vmatprep.mubr.bf16.mxu0 0
  %2830 = vmatmul.mubr.bf16.gmra.mxu0 %v2428
  %v2831 = vpop.f32.mrf.mxu0
  %v2832 = vadd.f32 0.0, %v2831
  %v2833 = vpop.f32.mrf.mxu0
  %v2834 = vadd.f32 0.0, %v2833
  %v2835 = vpop.f32.mrf.mxu0
  %v2836 = vadd.f32 0.0, %v2835
  %v2837 = vpop.f32.mrf.mxu0
  %v2838 = vadd.f32 0.0, %v2837
  %2839 = vdwg.mxu0
  %2840 = vmatprep.subr.bf16.mxu0 0
  %2841 = vmatpush1.bf16.msra.mxu0 0
  %2842 = vmatprep.subr.bf16.mxu0 0
  %2843 = vmatpush1.bf16.msra.mxu0 0
  %2844 = vmatprep.subr.bf16.mxu0 0
  %2845 = vmatpush1.bf16.msra.mxu0 0
  %2846 = vmatprep.subr.bf16.mxu0 0
  %2847 = vmatpush1.bf16.msra.mxu0 0
  %2848 = vmatprep.subr.bf16.mxu0 %v2446
  %2849 = vmatpush1.bf16.msra.mxu0 %v2443
  %2850 = vmatprep.subr.bf16.mxu0 %v2347
  %2851 = vmatpush1.bf16.msra.mxu0 %v2346
  %2852 = vmatprep.subr.bf16.mxu0 %v2339
  %2853 = vmatpush1.bf16.msra.mxu0 %v2338
  %2854 = vmatprep.subr.bf16.mxu0 %v2331
  %2855 = vmatpush1.bf16.msra.mxu0 %v2330
  %2856 = vmatprep.subr.bf16.mxu0 0
  %2857 = vmatpush2.bf16.msra.mxu0 0
  %2858 = vmatprep.subr.bf16.mxu0 0
  %2859 = vmatpush2.bf16.msra.mxu0 0
  %2860 = vmatprep.subr.bf16.mxu0 0
  %2861 = vmatpush2.bf16.msra.mxu0 0
  %2862 = vmatprep.subr.bf16.mxu0 0
  %2863 = vmatpush2.bf16.msra.mxu0 0
  %2864 = vmatprep.subr.bf16.mxu0 0
  %2865 = vmatpush2.bf16.msra.mxu0 0
  %2866 = vmatprep.subr.bf16.mxu0 0
  %2867 = vmatpush2.bf16.msra.mxu0 0
  %2868 = vmatprep.subr.bf16.mxu0 0
  %2869 = vmatpush2.bf16.msra.mxu0 0
  %2870 = vmatprep.subr.bf16.mxu0 0
  %2871 = vmatpush2.bf16.msra.mxu0 0
  %2872 = vmatprep.mubr.bf16.mxu0 0
  %2873 = vmatmul.mubr.bf16.gmra.mxu0 %v2383
  %v2874 = vpop.f32.mrf.mxu0
  %v2875 = vadd.f32 0.0, %v2874
  %v2876 = vpop.f32.mrf.mxu0
  %v2877 = vadd.f32 0.0, %v2876
  %v2878 = vpop.f32.mrf.mxu0
  %v2879 = vadd.f32 0.0, %v2878
  %v2880 = vpop.f32.mrf.mxu0
  %v2881 = vadd.f32 0.0, %v2880
  %2882 = vmatprep.mubr.bf16.mxu0 0
  %2883 = vmatmul.mubr.bf16.gmra.mxu0 %v2386
  %v2884 = vpop.f32.mrf.mxu0
  %v2885 = vadd.f32 0.0, %v2884
  %v2886 = vpop.f32.mrf.mxu0
  %v2887 = vadd.f32 0.0, %v2886
  %v2888 = vpop.f32.mrf.mxu0
  %v2889 = vadd.f32 0.0, %v2888
  %v2890 = vpop.f32.mrf.mxu0
  %v2891 = vadd.f32 0.0, %v2890
  %2892 = vmatprep.mubr.bf16.mxu0 0
  %2893 = vmatmul.mubr.bf16.gmra.mxu0 %v2389
  %v2894 = vpop.f32.mrf.mxu0
  %v2895 = vadd.f32 0.0, %v2894
  %v2896 = vpop.f32.mrf.mxu0
  %v2897 = vadd.f32 0.0, %v2896
  %v2898 = vpop.f32.mrf.mxu0
  %v2899 = vadd.f32 0.0, %v2898
  %v2900 = vpop.f32.mrf.mxu0
  %v2901 = vadd.f32 0.0, %v2900
  %2902 = vmatprep.mubr.bf16.mxu0 0
  %2903 = vmatmul.mubr.bf16.gmra.mxu0 %v2392
  %v2904 = vpop.f32.mrf.mxu0
  %v2905 = vadd.f32 0.0, %v2904
  %v2906 = vpop.f32.mrf.mxu0
  %v2907 = vadd.f32 0.0, %v2906
  %v2908 = vpop.f32.mrf.mxu0
  %v2909 = vadd.f32 0.0, %v2908
  %v2910 = vpop.f32.mrf.mxu0
  %v2911 = vadd.f32 0.0, %v2910
  %2912 = vmatprep.mubr.bf16.mxu0 0
  %2913 = vmatmul.mubr.bf16.gmra.mxu0 %v2395
  %v2914 = vpop.f32.mrf.mxu0
  %v2915 = vadd.f32 0.0, %v2914
  %v2916 = vpop.f32.mrf.mxu0
  %v2917 = vadd.f32 0.0, %v2916
  %v2918 = vpop.f32.mrf.mxu0
  %v2919 = vadd.f32 0.0, %v2918
  %v2920 = vpop.f32.mrf.mxu0
  %v2921 = vadd.f32 0.0, %v2920
  %2922 = vmatprep.mubr.bf16.mxu0 0
  %2923 = vmatmul.mubr.bf16.gmra.mxu0 %v2398
  %v2924 = vpop.f32.mrf.mxu0
  %v2925 = vadd.f32 0.0, %v2924
  %v2926 = vpop.f32.mrf.mxu0
  %v2927 = vadd.f32 0.0, %v2926
  %v2928 = vpop.f32.mrf.mxu0
  %v2929 = vadd.f32 0.0, %v2928
  %v2930 = vpop.f32.mrf.mxu0
  %v2931 = vadd.f32 0.0, %v2930
  %2932 = vmatprep.mubr.bf16.mxu0 0
  %2933 = vmatmul.mubr.bf16.gmra.mxu0 %v2401
  %v2934 = vpop.f32.mrf.mxu0
  %v2935 = vadd.f32 0.0, %v2934
  %v2936 = vpop.f32.mrf.mxu0
  %v2937 = vadd.f32 0.0, %v2936
  %v2938 = vpop.f32.mrf.mxu0
  %v2939 = vadd.f32 0.0, %v2938
  %v2940 = vpop.f32.mrf.mxu0
  %v2941 = vadd.f32 0.0, %v2940
  %2942 = vmatprep.mubr.bf16.mxu0 0
  %2943 = vmatmul.mubr.bf16.gmra.mxu0 %v2404
  %v2944 = vpop.f32.mrf.mxu0
  %v2945 = vadd.f32 0.0, %v2944
  %v2946 = vpop.f32.mrf.mxu0
  %v2947 = vadd.f32 0.0, %v2946
  %v2948 = vpop.f32.mrf.mxu0
  %v2949 = vadd.f32 0.0, %v2948
  %v2950 = vpop.f32.mrf.mxu0
  %v2951 = vadd.f32 0.0, %v2950
  %2952 = vmatprep.mubr.bf16.mxu0 0
  %2953 = vmatmul.mubr.bf16.gmra.mxu0 %v2407
  %v2954 = vpop.f32.mrf.mxu0
  %v2955 = vadd.f32 0.0, %v2954
  %v2956 = vpop.f32.mrf.mxu0
  %v2957 = vadd.f32 0.0, %v2956
  %v2958 = vpop.f32.mrf.mxu0
  %v2959 = vadd.f32 0.0, %v2958
  %v2960 = vpop.f32.mrf.mxu0
  %v2961 = vadd.f32 0.0, %v2960
  %2962 = vmatprep.mubr.bf16.mxu0 0
  %2963 = vmatmul.mubr.bf16.gmra.mxu0 %v2410
  %v2964 = vpop.f32.mrf.mxu0
  %v2965 = vadd.f32 0.0, %v2964
  %v2966 = vpop.f32.mrf.mxu0
  %v2967 = vadd.f32 0.0, %v2966
  %v2968 = vpop.f32.mrf.mxu0
  %v2969 = vadd.f32 0.0, %v2968
  %v2970 = vpop.f32.mrf.mxu0
  %v2971 = vadd.f32 0.0, %v2970
  %2972 = vmatprep.mubr.bf16.mxu0 0
  %2973 = vmatmul.mubr.bf16.gmra.mxu0 %v2413
  %v2974 = vpop.f32.mrf.mxu0
  %v2975 = vadd.f32 0.0, %v2974
  %v2976 = vpop.f32.mrf.mxu0
  %v2977 = vadd.f32 0.0, %v2976
  %v2978 = vpop.f32.mrf.mxu0
  %v2979 = vadd.f32 0.0, %v2978
  %v2980 = vpop.f32.mrf.mxu0
  %v2981 = vadd.f32 0.0, %v2980
  %2982 = vmatprep.mubr.bf16.mxu0 0
  %2983 = vmatmul.mubr.bf16.gmra.mxu0 %v2416
  %v2984 = vpop.f32.mrf.mxu0
  %v2985 = vadd.f32 0.0, %v2984
  %v2986 = vpop.f32.mrf.mxu0
  %v2987 = vadd.f32 0.0, %v2986
  %v2988 = vpop.f32.mrf.mxu0
  %v2989 = vadd.f32 0.0, %v2988
  %v2990 = vpop.f32.mrf.mxu0
  %v2991 = vadd.f32 0.0, %v2990
  %2992 = vmatprep.mubr.bf16.mxu0 0
  %2993 = vmatmul.mubr.bf16.gmra.mxu0 %v2419
  %v2994 = vpop.f32.mrf.mxu0
  %v2995 = vadd.f32 0.0, %v2994
  %v2996 = vpop.f32.mrf.mxu0
  %v2997 = vadd.f32 0.0, %v2996
  %v2998 = vpop.f32.mrf.mxu0
  %v2999 = vadd.f32 0.0, %v2998
  %v3000 = vpop.f32.mrf.mxu0
  %v3001 = vadd.f32 0.0, %v3000
  %3002 = vmatprep.mubr.bf16.mxu0 0
  %3003 = vmatmul.mubr.bf16.gmra.mxu0 %v2422
  %v3004 = vpop.f32.mrf.mxu0
  %v3005 = vadd.f32 0.0, %v3004
  %v3006 = vpop.f32.mrf.mxu0
  %v3007 = vadd.f32 0.0, %v3006
  %v3008 = vpop.f32.mrf.mxu0
  %v3009 = vadd.f32 0.0, %v3008
  %v3010 = vpop.f32.mrf.mxu0
  %v3011 = vadd.f32 0.0, %v3010
  %3012 = vmatprep.mubr.bf16.mxu0 0
  %3013 = vmatmul.mubr.bf16.gmra.mxu0 %v2425
  %v3014 = vpop.f32.mrf.mxu0
  %v3015 = vadd.f32 0.0, %v3014
  %v3016 = vpop.f32.mrf.mxu0
  %v3017 = vadd.f32 0.0, %v3016
  %v3018 = vpop.f32.mrf.mxu0
  %v3019 = vadd.f32 0.0, %v3018
  %v3020 = vpop.f32.mrf.mxu0
  %v3021 = vadd.f32 0.0, %v3020
  %3022 = vmatprep.mubr.bf16.mxu0 0
  %3023 = vmatmul.mubr.bf16.gmra.mxu0 %v2428
  %v3024 = vpop.f32.mrf.mxu0
  %v3025 = vadd.f32 0.0, %v3024
  %v3026 = vpop.f32.mrf.mxu0
  %v3027 = vadd.f32 0.0, %v3026
  %v3028 = vpop.f32.mrf.mxu0
  %v3029 = vadd.f32 0.0, %v3028
  %v3030 = vpop.f32.mrf.mxu0
  %v3031 = vadd.f32 0.0, %v3030
  %3032 = vdwg.mxu0
  %3033 = vmatprep.subr.bf16.mxu0 0
  %3034 = vmatpush1.bf16.msra.mxu0 0
  %3035 = vmatprep.subr.bf16.mxu0 0
  %3036 = vmatpush1.bf16.msra.mxu0 0
  %3037 = vmatprep.subr.bf16.mxu0 0
  %3038 = vmatpush1.bf16.msra.mxu0 0
  %3039 = vmatprep.subr.bf16.mxu0 0
  %3040 = vmatpush1.bf16.msra.mxu0 0
  %3041 = vmatprep.subr.bf16.mxu0 %v2452
  %3042 = vmatpush1.bf16.msra.mxu0 %v2449
  %3043 = vmatprep.subr.bf16.mxu0 %v2349
  %3044 = vmatpush1.bf16.msra.mxu0 %v2348
  %3045 = vmatprep.subr.bf16.mxu0 %v2341
  %3046 = vmatpush1.bf16.msra.mxu0 %v2340
  %3047 = vmatprep.subr.bf16.mxu0 %v2333
  %3048 = vmatpush1.bf16.msra.mxu0 %v2332
  %3049 = vmatprep.subr.bf16.mxu0 0
  %3050 = vmatpush2.bf16.msra.mxu0 0
  %3051 = vmatprep.subr.bf16.mxu0 0
  %3052 = vmatpush2.bf16.msra.mxu0 0
  %3053 = vmatprep.subr.bf16.mxu0 0
  %3054 = vmatpush2.bf16.msra.mxu0 0
  %3055 = vmatprep.subr.bf16.mxu0 0
  %3056 = vmatpush2.bf16.msra.mxu0 0
  %3057 = vmatprep.subr.bf16.mxu0 0
  %3058 = vmatpush2.bf16.msra.mxu0 0
  %3059 = vmatprep.subr.bf16.mxu0 0
  %3060 = vmatpush2.bf16.msra.mxu0 0
  %3061 = vmatprep.subr.bf16.mxu0 0
  %3062 = vmatpush2.bf16.msra.mxu0 0
  %3063 = vmatprep.subr.bf16.mxu0 0
  %3064 = vmatpush2.bf16.msra.mxu0 0
  %3065 = vmatprep.mubr.bf16.mxu0 0
  %3066 = vmatmul.mubr.bf16.gmra.mxu0 %v2383
  %v3067 = vpop.f32.mrf.mxu0
  %v3068 = vadd.f32 0.0, %v3067
  %v3069 = vpop.f32.mrf.mxu0
  %v3070 = vadd.f32 0.0, %v3069
  %v3071 = vpop.f32.mrf.mxu0
  %v3072 = vadd.f32 0.0, %v3071
  %v3073 = vpop.f32.mrf.mxu0
  %v3074 = vadd.f32 0.0, %v3073
  %3075 = vmatprep.mubr.bf16.mxu0 0
  %3076 = vmatmul.mubr.bf16.gmra.mxu0 %v2386
  %v3077 = vpop.f32.mrf.mxu0
  %v3078 = vadd.f32 0.0, %v3077
  %v3079 = vpop.f32.mrf.mxu0
  %v3080 = vadd.f32 0.0, %v3079
  %v3081 = vpop.f32.mrf.mxu0
  %v3082 = vadd.f32 0.0, %v3081
  %v3083 = vpop.f32.mrf.mxu0
  %v3084 = vadd.f32 0.0, %v3083
  %3085 = vmatprep.mubr.bf16.mxu0 0
  %3086 = vmatmul.mubr.bf16.gmra.mxu0 %v2389
  %v3087 = vpop.f32.mrf.mxu0
  %v3088 = vadd.f32 0.0, %v3087
  %v3089 = vpop.f32.mrf.mxu0
  %v3090 = vadd.f32 0.0, %v3089
  %v3091 = vpop.f32.mrf.mxu0
  %v3092 = vadd.f32 0.0, %v3091
  %v3093 = vpop.f32.mrf.mxu0
  %v3094 = vadd.f32 0.0, %v3093
  %3095 = vmatprep.mubr.bf16.mxu0 0
  %3096 = vmatmul.mubr.bf16.gmra.mxu0 %v2392
  %v3097 = vpop.f32.mrf.mxu0
  %v3098 = vadd.f32 0.0, %v3097
  %v3099 = vpop.f32.mrf.mxu0
  %v3100 = vadd.f32 0.0, %v3099
  %v3101 = vpop.f32.mrf.mxu0
  %v3102 = vadd.f32 0.0, %v3101
  %v3103 = vpop.f32.mrf.mxu0
  %v3104 = vadd.f32 0.0, %v3103
  %3105 = vmatprep.mubr.bf16.mxu0 0
  %3106 = vmatmul.mubr.bf16.gmra.mxu0 %v2395
  %v3107 = vpop.f32.mrf.mxu0
  %v3108 = vadd.f32 0.0, %v3107
  %v3109 = vpop.f32.mrf.mxu0
  %v3110 = vadd.f32 0.0, %v3109
  %v3111 = vpop.f32.mrf.mxu0
  %v3112 = vadd.f32 0.0, %v3111
  %v3113 = vpop.f32.mrf.mxu0
  %v3114 = vadd.f32 0.0, %v3113
  %3115 = vmatprep.mubr.bf16.mxu0 0
  %3116 = vmatmul.mubr.bf16.gmra.mxu0 %v2398
  %v3117 = vpop.f32.mrf.mxu0
  %v3118 = vadd.f32 0.0, %v3117
  %v3119 = vpop.f32.mrf.mxu0
  %v3120 = vadd.f32 0.0, %v3119
  %v3121 = vpop.f32.mrf.mxu0
  %v3122 = vadd.f32 0.0, %v3121
  %v3123 = vpop.f32.mrf.mxu0
  %v3124 = vadd.f32 0.0, %v3123
  %3125 = vmatprep.mubr.bf16.mxu0 0
  %3126 = vmatmul.mubr.bf16.gmra.mxu0 %v2401
  %v3127 = vpop.f32.mrf.mxu0
  %v3128 = vadd.f32 0.0, %v3127
  %v3129 = vpop.f32.mrf.mxu0
  %v3130 = vadd.f32 0.0, %v3129
  %v3131 = vpop.f32.mrf.mxu0
  %v3132 = vadd.f32 0.0, %v3131
  %v3133 = vpop.f32.mrf.mxu0
  %v3134 = vadd.f32 0.0, %v3133
  %3135 = vmatprep.mubr.bf16.mxu0 0
  %3136 = vmatmul.mubr.bf16.gmra.mxu0 %v2404
  %v3137 = vpop.f32.mrf.mxu0
  %v3138 = vadd.f32 0.0, %v3137
  %v3139 = vpop.f32.mrf.mxu0
  %v3140 = vadd.f32 0.0, %v3139
  %v3141 = vpop.f32.mrf.mxu0
  %v3142 = vadd.f32 0.0, %v3141
  %v3143 = vpop.f32.mrf.mxu0
  %v3144 = vadd.f32 0.0, %v3143
  %3145 = vmatprep.mubr.bf16.mxu0 0
  %3146 = vmatmul.mubr.bf16.gmra.mxu0 %v2407
  %v3147 = vpop.f32.mrf.mxu0
  %v3148 = vadd.f32 0.0, %v3147
  %v3149 = vpop.f32.mrf.mxu0
  %v3150 = vadd.f32 0.0, %v3149
  %v3151 = vpop.f32.mrf.mxu0
  %v3152 = vadd.f32 0.0, %v3151
  %v3153 = vpop.f32.mrf.mxu0
  %v3154 = vadd.f32 0.0, %v3153
  %3155 = vmatprep.mubr.bf16.mxu0 0
  %3156 = vmatmul.mubr.bf16.gmra.mxu0 %v2410
  %v3157 = vpop.f32.mrf.mxu0
  %v3158 = vadd.f32 0.0, %v3157
  %v3159 = vpop.f32.mrf.mxu0
  %v3160 = vadd.f32 0.0, %v3159
  %v3161 = vpop.f32.mrf.mxu0
  %v3162 = vadd.f32 0.0, %v3161
  %v3163 = vpop.f32.mrf.mxu0
  %v3164 = vadd.f32 0.0, %v3163
  %3165 = vmatprep.mubr.bf16.mxu0 0
  %3166 = vmatmul.mubr.bf16.gmra.mxu0 %v2413
  %v3167 = vpop.f32.mrf.mxu0
  %v3168 = vadd.f32 0.0, %v3167
  %v3169 = vpop.f32.mrf.mxu0
  %v3170 = vadd.f32 0.0, %v3169
  %v3171 = vpop.f32.mrf.mxu0
  %v3172 = vadd.f32 0.0, %v3171
  %v3173 = vpop.f32.mrf.mxu0
  %v3174 = vadd.f32 0.0, %v3173
  %3175 = vmatprep.mubr.bf16.mxu0 0
  %3176 = vmatmul.mubr.bf16.gmra.mxu0 %v2416
  %v3177 = vpop.f32.mrf.mxu0
  %v3178 = vadd.f32 0.0, %v3177
  %v3179 = vpop.f32.mrf.mxu0
  %v3180 = vadd.f32 0.0, %v3179
  %v3181 = vpop.f32.mrf.mxu0
  %v3182 = vadd.f32 0.0, %v3181
  %v3183 = vpop.f32.mrf.mxu0
  %v3184 = vadd.f32 0.0, %v3183
  %3185 = vmatprep.mubr.bf16.mxu0 0
  %3186 = vmatmul.mubr.bf16.gmra.mxu0 %v2419
  %v3187 = vpop.f32.mrf.mxu0
  %v3188 = vadd.f32 0.0, %v3187
  %v3189 = vpop.f32.mrf.mxu0
  %v3190 = vadd.f32 0.0, %v3189
  %v3191 = vpop.f32.mrf.mxu0
  %v3192 = vadd.f32 0.0, %v3191
  %v3193 = vpop.f32.mrf.mxu0
  %v3194 = vadd.f32 0.0, %v3193
  %3195 = vmatprep.mubr.bf16.mxu0 0
  %3196 = vmatmul.mubr.bf16.gmra.mxu0 %v2422
  %v3197 = vpop.f32.mrf.mxu0
  %v3198 = vadd.f32 0.0, %v3197
  %v3199 = vpop.f32.mrf.mxu0
  %v3200 = vadd.f32 0.0, %v3199
  %v3201 = vpop.f32.mrf.mxu0
  %v3202 = vadd.f32 0.0, %v3201
  %v3203 = vpop.f32.mrf.mxu0
  %v3204 = vadd.f32 0.0, %v3203
  %3205 = vmatprep.mubr.bf16.mxu0 0
  %3206 = vmatmul.mubr.bf16.gmra.mxu0 %v2425
  %v3207 = vpop.f32.mrf.mxu0
  %v3208 = vadd.f32 0.0, %v3207
  %v3209 = vpop.f32.mrf.mxu0
  %v3210 = vadd.f32 0.0, %v3209
  %v3211 = vpop.f32.mrf.mxu0
  %v3212 = vadd.f32 0.0, %v3211
  %v3213 = vpop.f32.mrf.mxu0
  %v3214 = vadd.f32 0.0, %v3213
  %3215 = vmatprep.mubr.bf16.mxu0 0
  %3216 = vmatmul.mubr.bf16.gmra.mxu0 %v2428
  %v3217 = vpop.f32.mrf.mxu0
  %v3218 = vadd.f32 0.0, %v3217
  %v3219 = vpop.f32.mrf.mxu0
  %v3220 = vadd.f32 0.0, %v3219
  %v3221 = vpop.f32.mrf.mxu0
  %v3222 = vadd.f32 0.0, %v3221
  %v3223 = vpop.f32.mrf.mxu0
  %v3224 = vadd.f32 0.0, %v3223
  %3225 = vdwg.mxu0
  %v3226 = vadd.f32 %v1428, %v2489
  %v3227 = vadd.f32 %v1430, %v2491
  %v3228 = vadd.f32 %v1621, %v2682
  %v3229 = vadd.f32 %v1623, %v2684
  %v3230 = vadd.f32 %v1814, %v2875
  %v3231 = vadd.f32 %v1816, %v2877
  %v3232 = vadd.f32 %v2007, %v3068
  %v3233 = vadd.f32 %v2009, %v3070
  %v3234 = vadd.f32 %v1432, %v2493
  %v3235 = vadd.f32 %v1434, %v2495
  %v3236 = vadd.f32 %v1625, %v2686
  %v3237 = vadd.f32 %v1627, %v2688
  %v3238 = vadd.f32 %v1818, %v2879
  %v3239 = vadd.f32 %v1820, %v2881
  %v3240 = vadd.f32 %v2011, %v3072
  %v3241 = vadd.f32 %v2013, %v3074
  %v3242 = vadd.f32 %v1438, %v2499
  %v3243 = vadd.f32 %v1440, %v2501
  %v3244 = vadd.f32 %v1631, %v2692
  %v3245 = vadd.f32 %v1633, %v2694
  %v3246 = vadd.f32 %v1824, %v2885
  %v3247 = vadd.f32 %v1826, %v2887
  %v3248 = vadd.f32 %v2017, %v3078
  %v3249 = vadd.f32 %v2019, %v3080
  %v3250 = vadd.f32 %v1442, %v2503
  %v3251 = vadd.f32 %v1444, %v2505
  %v3252 = vadd.f32 %v1635, %v2696
  %v3253 = vadd.f32 %v1637, %v2698
  %v3254 = vadd.f32 %v1828, %v2889
  %v3255 = vadd.f32 %v1830, %v2891
  %v3256 = vadd.f32 %v2021, %v3082
  %v3257 = vadd.f32 %v2023, %v3084
  %v3258 = vadd.f32 %v1448, %v2509
  %v3259 = vadd.f32 %v1450, %v2511
  %v3260 = vadd.f32 %v1641, %v2702
  %v3261 = vadd.f32 %v1643, %v2704
  %v3262 = vadd.f32 %v1834, %v2895
  %v3263 = vadd.f32 %v1836, %v2897
  %v3264 = vadd.f32 %v2027, %v3088
  %v3265 = vadd.f32 %v2029, %v3090
  %v3266 = vadd.f32 %v1452, %v2513
  %v3267 = vadd.f32 %v1454, %v2515
  %v3268 = vadd.f32 %v1645, %v2706
  %v3269 = vadd.f32 %v1647, %v2708
  %v3270 = vadd.f32 %v1838, %v2899
  %v3271 = vadd.f32 %v1840, %v2901
  %v3272 = vadd.f32 %v2031, %v3092
  %v3273 = vadd.f32 %v2033, %v3094
  %v3274 = vadd.f32 %v1458, %v2519
  %v3275 = vadd.f32 %v1460, %v2521
  %v3276 = vadd.f32 %v1651, %v2712
  %v3277 = vadd.f32 %v1653, %v2714
  %v3278 = vadd.f32 %v1844, %v2905
  %v3279 = vadd.f32 %v1846, %v2907
  %v3280 = vadd.f32 %v2037, %v3098
  %v3281 = vadd.f32 %v2039, %v3100
  %v3282 = vadd.f32 %v1462, %v2523
  %v3283 = vadd.f32 %v1464, %v2525
  %v3284 = vadd.f32 %v1655, %v2716
  %v3285 = vadd.f32 %v1657, %v2718
  %v3286 = vadd.f32 %v1848, %v2909
  %v3287 = vadd.f32 %v1850, %v2911
  %v3288 = vadd.f32 %v2041, %v3102
  %v3289 = vadd.f32 %v2043, %v3104
  %v3290 = vadd.f32 %v1468, %v2529
  %v3291 = vadd.f32 %v1470, %v2531
  %v3292 = vadd.f32 %v1661, %v2722
  %v3293 = vadd.f32 %v1663, %v2724
  %v3294 = vadd.f32 %v1854, %v2915
  %v3295 = vadd.f32 %v1856, %v2917
  %v3296 = vadd.f32 %v2047, %v3108
  %v3297 = vadd.f32 %v2049, %v3110
  %v3298 = vadd.f32 %v1472, %v2533
  %v3299 = vadd.f32 %v1474, %v2535
  %v3300 = vadd.f32 %v1665, %v2726
  %v3301 = vadd.f32 %v1667, %v2728
  %v3302 = vadd.f32 %v1858, %v2919
  %v3303 = vadd.f32 %v1860, %v2921
  %v3304 = vadd.f32 %v2051, %v3112
  %v3305 = vadd.f32 %v2053, %v3114
  %v3306 = vadd.f32 %v1478, %v2539
  %v3307 = vadd.f32 %v1480, %v2541
  %v3308 = vadd.f32 %v1671, %v2732
  %v3309 = vadd.f32 %v1673, %v2734
  %v3310 = vadd.f32 %v1864, %v2925
  %v3311 = vadd.f32 %v1866, %v2927
  %v3312 = vadd.f32 %v2057, %v3118
  %v3313 = vadd.f32 %v2059, %v3120
  %v3314 = vadd.f32 %v1482, %v2543
  %v3315 = vadd.f32 %v1484, %v2545
  %v3316 = vadd.f32 %v1675, %v2736
  %v3317 = vadd.f32 %v1677, %v2738
  %v3318 = vadd.f32 %v1868, %v2929
  %v3319 = vadd.f32 %v1870, %v2931
  %v3320 = vadd.f32 %v2061, %v3122
  %v3321 = vadd.f32 %v2063, %v3124
  %v3322 = vadd.f32 %v1488, %v2549
  %v3323 = vadd.f32 %v1490, %v2551
  %v3324 = vadd.f32 %v1681, %v2742
  %v3325 = vadd.f32 %v1683, %v2744
  %v3326 = vadd.f32 %v1874, %v2935
  %v3327 = vadd.f32 %v1876, %v2937
  %v3328 = vadd.f32 %v2067, %v3128
  %v3329 = vadd.f32 %v2069, %v3130
  %v3330 = vadd.f32 %v1492, %v2553
  %v3331 = vadd.f32 %v1494, %v2555
  %v3332 = vadd.f32 %v1685, %v2746
  %v3333 = vadd.f32 %v1687, %v2748
  %v3334 = vadd.f32 %v1878, %v2939
  %v3335 = vadd.f32 %v1880, %v2941
  %v3336 = vadd.f32 %v2071, %v3132
  %v3337 = vadd.f32 %v2073, %v3134
  %v3338 = vadd.f32 %v1498, %v2559
  %v3339 = vadd.f32 %v1500, %v2561
  %v3340 = vadd.f32 %v1691, %v2752
  %v3341 = vadd.f32 %v1693, %v2754
  %v3342 = vadd.f32 %v1884, %v2945
  %v3343 = vadd.f32 %v1886, %v2947
  %v3344 = vadd.f32 %v2077, %v3138
  %v3345 = vadd.f32 %v2079, %v3140
  %v3346 = vadd.f32 %v1502, %v2563
  %v3347 = vadd.f32 %v1504, %v2565
  %v3348 = vadd.f32 %v1695, %v2756
  %v3349 = vadd.f32 %v1697, %v2758
  %v3350 = vadd.f32 %v1888, %v2949
  %v3351 = vadd.f32 %v1890, %v2951
  %v3352 = vadd.f32 %v2081, %v3142
  %v3353 = vadd.f32 %v2083, %v3144
  %v3354 = vadd.f32 %v1508, %v2569
  %v3355 = vadd.f32 %v1510, %v2571
  %v3356 = vadd.f32 %v1701, %v2762
  %v3357 = vadd.f32 %v1703, %v2764
  %v3358 = vadd.f32 %v1894, %v2955
  %v3359 = vadd.f32 %v1896, %v2957
  %v3360 = vadd.f32 %v2087, %v3148
  %v3361 = vadd.f32 %v2089, %v3150
  %v3362 = vadd.f32 %v1512, %v2573
  %v3363 = vadd.f32 %v1514, %v2575
  %v3364 = vadd.f32 %v1705, %v2766
  %v3365 = vadd.f32 %v1707, %v2768
  %v3366 = vadd.f32 %v1898, %v2959
  %v3367 = vadd.f32 %v1900, %v2961
  %v3368 = vadd.f32 %v2091, %v3152
  %v3369 = vadd.f32 %v2093, %v3154
  %v3370 = vadd.f32 %v1518, %v2579
  %v3371 = vadd.f32 %v1520, %v2581
  %v3372 = vadd.f32 %v1711, %v2772
  %v3373 = vadd.f32 %v1713, %v2774
  %v3374 = vadd.f32 %v1904, %v2965
  %v3375 = vadd.f32 %v1906, %v2967
  %v3376 = vadd.f32 %v2097, %v3158
  %v3377 = vadd.f32 %v2099, %v3160
  %v3378 = vadd.f32 %v1522, %v2583
  %v3379 = vadd.f32 %v1524, %v2585
  %v3380 = vadd.f32 %v1715, %v2776
  %v3381 = vadd.f32 %v1717, %v2778
  %v3382 = vadd.f32 %v1908, %v2969
  %v3383 = vadd.f32 %v1910, %v2971
  %v3384 = vadd.f32 %v2101, %v3162
  %v3385 = vadd.f32 %v2103, %v3164
  %v3386 = vadd.f32 %v1528, %v2589
  %v3387 = vadd.f32 %v1530, %v2591
  %v3388 = vadd.f32 %v1721, %v2782
  %v3389 = vadd.f32 %v1723, %v2784
  %v3390 = vadd.f32 %v1914, %v2975
  %v3391 = vadd.f32 %v1916, %v2977
  %v3392 = vadd.f32 %v2107, %v3168
  %v3393 = vadd.f32 %v2109, %v3170
  %v3394 = vadd.f32 %v1532, %v2593
  %v3395 = vadd.f32 %v1534, %v2595
  %v3396 = vadd.f32 %v1725, %v2786
  %v3397 = vadd.f32 %v1727, %v2788
  %v3398 = vadd.f32 %v1918, %v2979
  %v3399 = vadd.f32 %v1920, %v2981
  %v3400 = vadd.f32 %v2111, %v3172
  %v3401 = vadd.f32 %v2113, %v3174
  %v3402 = vadd.f32 %v1538, %v2599
  %v3403 = vadd.f32 %v1540, %v2601
  %v3404 = vadd.f32 %v1731, %v2792
  %v3405 = vadd.f32 %v1733, %v2794
  %v3406 = vadd.f32 %v1924, %v2985
  %v3407 = vadd.f32 %v1926, %v2987
  %v3408 = vadd.f32 %v2117, %v3178
  %v3409 = vadd.f32 %v2119, %v3180
  %v3410 = vadd.f32 %v1542, %v2603
  %v3411 = vadd.f32 %v1544, %v2605
  %v3412 = vadd.f32 %v1735, %v2796
  %v3413 = vadd.f32 %v1737, %v2798
  %v3414 = vadd.f32 %v1928, %v2989
  %v3415 = vadd.f32 %v1930, %v2991
  %v3416 = vadd.f32 %v2121, %v3182
  %v3417 = vadd.f32 %v2123, %v3184
  %v3418 = vadd.f32 %v1548, %v2609
  %v3419 = vadd.f32 %v1550, %v2611
  %v3420 = vadd.f32 %v1741, %v2802
  %v3421 = vadd.f32 %v1743, %v2804
  %v3422 = vadd.f32 %v1934, %v2995
  %v3423 = vadd.f32 %v1936, %v2997
  %v3424 = vadd.f32 %v2127, %v3188
  %v3425 = vadd.f32 %v2129, %v3190
  %v3426 = vadd.f32 %v1552, %v2613
  %v3427 = vadd.f32 %v1554, %v2615
  %v3428 = vadd.f32 %v1745, %v2806
  %v3429 = vadd.f32 %v1747, %v2808
  %v3430 = vadd.f32 %v1938, %v2999
  %v3431 = vadd.f32 %v1940, %v3001
  %v3432 = vadd.f32 %v2131, %v3192
  %v3433 = vadd.f32 %v2133, %v3194
  %v3434 = vadd.f32 %v1558, %v2619
  %v3435 = vadd.f32 %v1560, %v2621
  %v3436 = vadd.f32 %v1751, %v2812
  %v3437 = vadd.f32 %v1753, %v2814
  %v3438 = vadd.f32 %v1944, %v3005
  %v3439 = vadd.f32 %v1946, %v3007
  %v3440 = vadd.f32 %v2137, %v3198
  %v3441 = vadd.f32 %v2139, %v3200
  %v3442 = vadd.f32 %v1562, %v2623
  %v3443 = vadd.f32 %v1564, %v2625
  %v3444 = vadd.f32 %v1755, %v2816
  %v3445 = vadd.f32 %v1757, %v2818
  %v3446 = vadd.f32 %v1948, %v3009
  %v3447 = vadd.f32 %v1950, %v3011
  %v3448 = vadd.f32 %v2141, %v3202
  %v3449 = vadd.f32 %v2143, %v3204
  %v3450 = vadd.f32 %v1568, %v2629
  %v3451 = vadd.f32 %v1570, %v2631
  %v3452 = vadd.f32 %v1761, %v2822
  %v3453 = vadd.f32 %v1763, %v2824
  %v3454 = vadd.f32 %v1954, %v3015
  %v3455 = vadd.f32 %v1956, %v3017
  %v3456 = vadd.f32 %v2147, %v3208
  %v3457 = vadd.f32 %v2149, %v3210
  %v3458 = vadd.f32 %v1572, %v2633
  %v3459 = vadd.f32 %v1574, %v2635
  %v3460 = vadd.f32 %v1765, %v2826
  %v3461 = vadd.f32 %v1767, %v2828
  %v3462 = vadd.f32 %v1958, %v3019
  %v3463 = vadd.f32 %v1960, %v3021
  %v3464 = vadd.f32 %v2151, %v3212
  %v3465 = vadd.f32 %v2153, %v3214
  %v3466 = vadd.f32 %v1578, %v2639
  %v3467 = vadd.f32 %v1580, %v2641
  %v3468 = vadd.f32 %v1771, %v2832
  %v3469 = vadd.f32 %v1773, %v2834
  %v3470 = vadd.f32 %v1964, %v3025
  %v3471 = vadd.f32 %v1966, %v3027
  %v3472 = vadd.f32 %v2157, %v3218
  %v3473 = vadd.f32 %v2159, %v3220
  %v3474 = vadd.f32 %v1582, %v2643
  %v3475 = vadd.f32 %v1584, %v2645
  %v3476 = vadd.f32 %v1775, %v2836
  %v3477 = vadd.f32 %v1777, %v2838
  %v3478 = vadd.f32 %v1968, %v3029
  %v3479 = vadd.f32 %v1970, %v3031
  %v3480 = vadd.f32 %v2161, %v3222
  %v3481 = vadd.f32 %v2163, %v3224
  %v3482 = vld [vmem:[%s2] sm:$0xff]
  %v3484 = vlaneseq
  %v3485 = vshrl.u32 %v3484, 7
  %v3486 = vsub.s32 0, %v3485
  %v3487 = vrot.slane %v3482, %v3486
  %v3488 = vlaneseq
  %v3489 = vshrl.u32 %v3488, 7
  %v3490 = vsub.s32 1, %v3489
  %v3491 = vrot.slane %v3482, %v3490
  %v3492 = vlaneseq
  %v3493 = vshrl.u32 %v3492, 7
  %v3494 = vsub.s32 2, %v3493
  %v3495 = vrot.slane %v3482, %v3494
  %v3496 = vlaneseq
  %v3497 = vshrl.u32 %v3496, 7
  %v3498 = vsub.s32 3, %v3497
  %v3499 = vrot.slane %v3482, %v3498
  %v3500 = vlaneseq
  %v3501 = vshrl.u32 %v3500, 7
  %v3502 = vsub.s32 4, %v3501
  %v3503 = vrot.slane %v3482, %v3502
  %v3504 = vlaneseq
  %v3505 = vshrl.u32 %v3504, 7
  %v3506 = vsub.s32 5, %v3505
  %v3507 = vrot.slane %v3482, %v3506
  %v3508 = vlaneseq
  %v3509 = vshrl.u32 %v3508, 7
  %v3510 = vsub.s32 6, %v3509
  %v3511 = vrot.slane %v3482, %v3510
  %v3512 = vlaneseq
  %v3513 = vshrl.u32 %v3512, 7
  %v3514 = vsub.s32 7, %v3513
  %v3515 = vrot.slane %v3482, %v3514
  %v3524 = vadd.f32 %v3226, %v3487
  %v3525 = vadd.f32 %v3227, %v3491
  %v3526 = vadd.f32 %v3228, %v3495
  %v3527 = vadd.f32 %v3229, %v3499
  %v3528 = vadd.f32 %v3230, %v3503
  %v3529 = vadd.f32 %v3231, %v3507
  %v3530 = vadd.f32 %v3232, %v3511
  %v3531 = vadd.f32 %v3233, %v3515
  %v3532 = vadd.f32 %v3234, %v3487
  %v3533 = vadd.f32 %v3235, %v3491
  %v3534 = vadd.f32 %v3236, %v3495
  %v3535 = vadd.f32 %v3237, %v3499
  %v3536 = vadd.f32 %v3238, %v3503
  %v3537 = vadd.f32 %v3239, %v3507
  %v3538 = vadd.f32 %v3240, %v3511
  %v3539 = vadd.f32 %v3241, %v3515
  %v3540 = vadd.f32 %v3242, %v3487
  %v3541 = vadd.f32 %v3243, %v3491
  %v3542 = vadd.f32 %v3244, %v3495
  %v3543 = vadd.f32 %v3245, %v3499
  %v3544 = vadd.f32 %v3246, %v3503
  %v3545 = vadd.f32 %v3247, %v3507
  %v3546 = vadd.f32 %v3248, %v3511
  %v3547 = vadd.f32 %v3249, %v3515
  %v3548 = vadd.f32 %v3250, %v3487
  %v3549 = vadd.f32 %v3251, %v3491
  %v3550 = vadd.f32 %v3252, %v3495
  %v3551 = vadd.f32 %v3253, %v3499
  %v3552 = vadd.f32 %v3254, %v3503
  %v3553 = vadd.f32 %v3255, %v3507
  %v3554 = vadd.f32 %v3256, %v3511
  %v3555 = vadd.f32 %v3257, %v3515
  %v3556 = vadd.f32 %v3258, %v3487
  %v3557 = vadd.f32 %v3259, %v3491
  %v3558 = vadd.f32 %v3260, %v3495
  %v3559 = vadd.f32 %v3261, %v3499
  %v3560 = vadd.f32 %v3262, %v3503
  %v3561 = vadd.f32 %v3263, %v3507
  %v3562 = vadd.f32 %v3264, %v3511
  %v3563 = vadd.f32 %v3265, %v3515
  %v3564 = vadd.f32 %v3266, %v3487
  %v3565 = vadd.f32 %v3267, %v3491
  %v3566 = vadd.f32 %v3268, %v3495
  %v3567 = vadd.f32 %v3269, %v3499
  %v3568 = vadd.f32 %v3270, %v3503
  %v3569 = vadd.f32 %v3271, %v3507
  %v3570 = vadd.f32 %v3272, %v3511
  %v3571 = vadd.f32 %v3273, %v3515
  %v3572 = vadd.f32 %v3274, %v3487
  %v3573 = vadd.f32 %v3275, %v3491
  %v3574 = vadd.f32 %v3276, %v3495
  %v3575 = vadd.f32 %v3277, %v3499
  %v3576 = vadd.f32 %v3278, %v3503
  %v3577 = vadd.f32 %v3279, %v3507
  %v3578 = vadd.f32 %v3280, %v3511
  %v3579 = vadd.f32 %v3281, %v3515
  %v3580 = vadd.f32 %v3282, %v3487
  %v3581 = vadd.f32 %v3283, %v3491
  %v3582 = vadd.f32 %v3284, %v3495
  %v3583 = vadd.f32 %v3285, %v3499
  %v3584 = vadd.f32 %v3286, %v3503
  %v3585 = vadd.f32 %v3287, %v3507
  %v3586 = vadd.f32 %v3288, %v3511
  %v3587 = vadd.f32 %v3289, %v3515
  %v3588 = vadd.f32 %v3290, %v3487
  %v3589 = vadd.f32 %v3291, %v3491
  %v3590 = vadd.f32 %v3292, %v3495
  %v3591 = vadd.f32 %v3293, %v3499
  %v3592 = vadd.f32 %v3294, %v3503
  %v3593 = vadd.f32 %v3295, %v3507
  %v3594 = vadd.f32 %v3296, %v3511
  %v3595 = vadd.f32 %v3297, %v3515
  %v3596 = vadd.f32 %v3298, %v3487
  %v3597 = vadd.f32 %v3299, %v3491
  %v3598 = vadd.f32 %v3300, %v3495
  %v3599 = vadd.f32 %v3301, %v3499
  %v3600 = vadd.f32 %v3302, %v3503
  %v3601 = vadd.f32 %v3303, %v3507
  %v3602 = vadd.f32 %v3304, %v3511
  %v3603 = vadd.f32 %v3305, %v3515
  %v3604 = vadd.f32 %v3306, %v3487
  %v3605 = vadd.f32 %v3307, %v3491
  %v3606 = vadd.f32 %v3308, %v3495
  %v3607 = vadd.f32 %v3309, %v3499
  %v3608 = vadd.f32 %v3310, %v3503
  %v3609 = vadd.f32 %v3311, %v3507
  %v3610 = vadd.f32 %v3312, %v3511
  %v3611 = vadd.f32 %v3313, %v3515
  %v3612 = vadd.f32 %v3314, %v3487
  %v3613 = vadd.f32 %v3315, %v3491
  %v3614 = vadd.f32 %v3316, %v3495
  %v3615 = vadd.f32 %v3317, %v3499
  %v3616 = vadd.f32 %v3318, %v3503
  %v3617 = vadd.f32 %v3319, %v3507
  %v3618 = vadd.f32 %v3320, %v3511
  %v3619 = vadd.f32 %v3321, %v3515
  %v3620 = vadd.f32 %v3322, %v3487
  %v3621 = vadd.f32 %v3323, %v3491
  %v3622 = vadd.f32 %v3324, %v3495
  %v3623 = vadd.f32 %v3325, %v3499
  %v3624 = vadd.f32 %v3326, %v3503
  %v3625 = vadd.f32 %v3327, %v3507
  %v3626 = vadd.f32 %v3328, %v3511
  %v3627 = vadd.f32 %v3329, %v3515
  %v3628 = vadd.f32 %v3330, %v3487
  %v3629 = vadd.f32 %v3331, %v3491
  %v3630 = vadd.f32 %v3332, %v3495
  %v3631 = vadd.f32 %v3333, %v3499
  %v3632 = vadd.f32 %v3334, %v3503
  %v3633 = vadd.f32 %v3335, %v3507
  %v3634 = vadd.f32 %v3336, %v3511
  %v3635 = vadd.f32 %v3337, %v3515
  %v3636 = vadd.f32 %v3338, %v3487
  %v3637 = vadd.f32 %v3339, %v3491
  %v3638 = vadd.f32 %v3340, %v3495
  %v3639 = vadd.f32 %v3341, %v3499
  %v3640 = vadd.f32 %v3342, %v3503
  %v3641 = vadd.f32 %v3343, %v3507
  %v3642 = vadd.f32 %v3344, %v3511
  %v3643 = vadd.f32 %v3345, %v3515
  %v3644 = vadd.f32 %v3346, %v3487
  %v3645 = vadd.f32 %v3347, %v3491
  %v3646 = vadd.f32 %v3348, %v3495
  %v3647 = vadd.f32 %v3349, %v3499
  %v3648 = vadd.f32 %v3350, %v3503
  %v3649 = vadd.f32 %v3351, %v3507
  %v3650 = vadd.f32 %v3352, %v3511
  %v3651 = vadd.f32 %v3353, %v3515
  %v3652 = vadd.f32 %v3354, %v3487
  %v3653 = vadd.f32 %v3355, %v3491
  %v3654 = vadd.f32 %v3356, %v3495
  %v3655 = vadd.f32 %v3357, %v3499
  %v3656 = vadd.f32 %v3358, %v3503
  %v3657 = vadd.f32 %v3359, %v3507
  %v3658 = vadd.f32 %v3360, %v3511
  %v3659 = vadd.f32 %v3361, %v3515
  %v3660 = vadd.f32 %v3362, %v3487
  %v3661 = vadd.f32 %v3363, %v3491
  %v3662 = vadd.f32 %v3364, %v3495
  %v3663 = vadd.f32 %v3365, %v3499
  %v3664 = vadd.f32 %v3366, %v3503
  %v3665 = vadd.f32 %v3367, %v3507
  %v3666 = vadd.f32 %v3368, %v3511
  %v3667 = vadd.f32 %v3369, %v3515
  %v3668 = vadd.f32 %v3370, %v3487
  %v3669 = vadd.f32 %v3371, %v3491
  %v3670 = vadd.f32 %v3372, %v3495
  %v3671 = vadd.f32 %v3373, %v3499
  %v3672 = vadd.f32 %v3374, %v3503
  %v3673 = vadd.f32 %v3375, %v3507
  %v3674 = vadd.f32 %v3376, %v3511
  %v3675 = vadd.f32 %v3377, %v3515
  %v3676 = vadd.f32 %v3378, %v3487
  %v3677 = vadd.f32 %v3379, %v3491
  %v3678 = vadd.f32 %v3380, %v3495
  %v3679 = vadd.f32 %v3381, %v3499
  %v3680 = vadd.f32 %v3382, %v3503
  %v3681 = vadd.f32 %v3383, %v3507
  %v3682 = vadd.f32 %v3384, %v3511
  %v3683 = vadd.f32 %v3385, %v3515
  %v3684 = vadd.f32 %v3386, %v3487
  %v3685 = vadd.f32 %v3387, %v3491
  %v3686 = vadd.f32 %v3388, %v3495
  %v3687 = vadd.f32 %v3389, %v3499
  %v3688 = vadd.f32 %v3390, %v3503
  %v3689 = vadd.f32 %v3391, %v3507
  %v3690 = vadd.f32 %v3392, %v3511
  %v3691 = vadd.f32 %v3393, %v3515
  %v3692 = vadd.f32 %v3394, %v3487
  %v3693 = vadd.f32 %v3395, %v3491
  %v3694 = vadd.f32 %v3396, %v3495
  %v3695 = vadd.f32 %v3397, %v3499
  %v3696 = vadd.f32 %v3398, %v3503
  %v3697 = vadd.f32 %v3399, %v3507
  %v3698 = vadd.f32 %v3400, %v3511
  %v3699 = vadd.f32 %v3401, %v3515
  %v3700 = vadd.f32 %v3402, %v3487
  %v3701 = vadd.f32 %v3403, %v3491
  %v3702 = vadd.f32 %v3404, %v3495
  %v3703 = vadd.f32 %v3405, %v3499
  %v3704 = vadd.f32 %v3406, %v3503
  %v3705 = vadd.f32 %v3407, %v3507
  %v3706 = vadd.f32 %v3408, %v3511
  %v3707 = vadd.f32 %v3409, %v3515
  %v3708 = vadd.f32 %v3410, %v3487
  %v3709 = vadd.f32 %v3411, %v3491
  %v3710 = vadd.f32 %v3412, %v3495
  %v3711 = vadd.f32 %v3413, %v3499
  %v3712 = vadd.f32 %v3414, %v3503
  %v3713 = vadd.f32 %v3415, %v3507
  %v3714 = vadd.f32 %v3416, %v3511
  %v3715 = vadd.f32 %v3417, %v3515
  %v3716 = vadd.f32 %v3418, %v3487
  %v3717 = vadd.f32 %v3419, %v3491
  %v3718 = vadd.f32 %v3420, %v3495
  %v3719 = vadd.f32 %v3421, %v3499
  %v3720 = vadd.f32 %v3422, %v3503
  %v3721 = vadd.f32 %v3423, %v3507
  %v3722 = vadd.f32 %v3424, %v3511
  %v3723 = vadd.f32 %v3425, %v3515
  %v3724 = vadd.f32 %v3426, %v3487
  %v3725 = vadd.f32 %v3427, %v3491
  %v3726 = vadd.f32 %v3428, %v3495
  %v3727 = vadd.f32 %v3429, %v3499
  %v3728 = vadd.f32 %v3430, %v3503
  %v3729 = vadd.f32 %v3431, %v3507
  %v3730 = vadd.f32 %v3432, %v3511
  %v3731 = vadd.f32 %v3433, %v3515
  %v3732 = vadd.f32 %v3434, %v3487
  %v3733 = vadd.f32 %v3435, %v3491
  %v3734 = vadd.f32 %v3436, %v3495
  %v3735 = vadd.f32 %v3437, %v3499
  %v3736 = vadd.f32 %v3438, %v3503
  %v3737 = vadd.f32 %v3439, %v3507
  %v3738 = vadd.f32 %v3440, %v3511
  %v3739 = vadd.f32 %v3441, %v3515
  %v3740 = vadd.f32 %v3442, %v3487
  %v3741 = vadd.f32 %v3443, %v3491
  %v3742 = vadd.f32 %v3444, %v3495
  %v3743 = vadd.f32 %v3445, %v3499
  %v3744 = vadd.f32 %v3446, %v3503
  %v3745 = vadd.f32 %v3447, %v3507
  %v3746 = vadd.f32 %v3448, %v3511
  %v3747 = vadd.f32 %v3449, %v3515
  %v3748 = vadd.f32 %v3450, %v3487
  %v3749 = vadd.f32 %v3451, %v3491
  %v3750 = vadd.f32 %v3452, %v3495
  %v3751 = vadd.f32 %v3453, %v3499
  %v3752 = vadd.f32 %v3454, %v3503
  %v3753 = vadd.f32 %v3455, %v3507
  %v3754 = vadd.f32 %v3456, %v3511
  %v3755 = vadd.f32 %v3457, %v3515
  %v3756 = vadd.f32 %v3458, %v3487
  %v3757 = vadd.f32 %v3459, %v3491
  %v3758 = vadd.f32 %v3460, %v3495
  %v3759 = vadd.f32 %v3461, %v3499
  %v3760 = vadd.f32 %v3462, %v3503
  %v3761 = vadd.f32 %v3463, %v3507
  %v3762 = vadd.f32 %v3464, %v3511
  %v3763 = vadd.f32 %v3465, %v3515
  %v3764 = vadd.f32 %v3466, %v3487
  %v3765 = vadd.f32 %v3467, %v3491
  %v3766 = vadd.f32 %v3468, %v3495
  %v3767 = vadd.f32 %v3469, %v3499
  %v3768 = vadd.f32 %v3470, %v3503
  %v3769 = vadd.f32 %v3471, %v3507
  %v3770 = vadd.f32 %v3472, %v3511
  %v3771 = vadd.f32 %v3473, %v3515
  %v3772 = vadd.f32 %v3474, %v3487
  %v3773 = vadd.f32 %v3475, %v3491
  %v3774 = vadd.f32 %v3476, %v3495
  %v3775 = vadd.f32 %v3477, %v3499
  %v3776 = vadd.f32 %v3478, %v3503
  %v3777 = vadd.f32 %v3479, %v3507
  %v3778 = vadd.f32 %v3480, %v3511
  %v3779 = vadd.f32 %v3481, %v3515
  %v3780 = vmax.f32 %v3524, 0.0
  %v3781 = vmax.f32 %v3525, 0.0
  %v3782 = vmax.f32 %v3526, 0.0
  %v3783 = vmax.f32 %v3527, 0.0
  %v3784 = vmax.f32 %v3528, 0.0
  %v3785 = vmax.f32 %v3529, 0.0
  %v3786 = vmax.f32 %v3530, 0.0
  %v3787 = vmax.f32 %v3531, 0.0
  %v3788 = vmax.f32 %v3532, 0.0
  %v3789 = vmax.f32 %v3533, 0.0
  %v3790 = vmax.f32 %v3534, 0.0
  %v3791 = vmax.f32 %v3535, 0.0
  %v3792 = vmax.f32 %v3536, 0.0
  %v3793 = vmax.f32 %v3537, 0.0
  %v3794 = vmax.f32 %v3538, 0.0
  %v3795 = vmax.f32 %v3539, 0.0
  %v3796 = vmax.f32 %v3540, 0.0
  %v3797 = vmax.f32 %v3541, 0.0
  %v3798 = vmax.f32 %v3542, 0.0
  %v3799 = vmax.f32 %v3543, 0.0
  %v3800 = vmax.f32 %v3544, 0.0
  %v3801 = vmax.f32 %v3545, 0.0
  %v3802 = vmax.f32 %v3546, 0.0
  %v3803 = vmax.f32 %v3547, 0.0
  %v3804 = vmax.f32 %v3548, 0.0
  %v3805 = vmax.f32 %v3549, 0.0
  %v3806 = vmax.f32 %v3550, 0.0
  %v3807 = vmax.f32 %v3551, 0.0
  %v3808 = vmax.f32 %v3552, 0.0
  %v3809 = vmax.f32 %v3553, 0.0
  %v3810 = vmax.f32 %v3554, 0.0
  %v3811 = vmax.f32 %v3555, 0.0
  %v3812 = vmax.f32 %v3556, 0.0
  %v3813 = vmax.f32 %v3557, 0.0
  %v3814 = vmax.f32 %v3558, 0.0
  %v3815 = vmax.f32 %v3559, 0.0
  %v3816 = vmax.f32 %v3560, 0.0
  %v3817 = vmax.f32 %v3561, 0.0
  %v3818 = vmax.f32 %v3562, 0.0
  %v3819 = vmax.f32 %v3563, 0.0
  %v3820 = vmax.f32 %v3564, 0.0
  %v3821 = vmax.f32 %v3565, 0.0
  %v3822 = vmax.f32 %v3566, 0.0
  %v3823 = vmax.f32 %v3567, 0.0
  %v3824 = vmax.f32 %v3568, 0.0
  %v3825 = vmax.f32 %v3569, 0.0
  %v3826 = vmax.f32 %v3570, 0.0
  %v3827 = vmax.f32 %v3571, 0.0
  %v3828 = vmax.f32 %v3572, 0.0
  %v3829 = vmax.f32 %v3573, 0.0
  %v3830 = vmax.f32 %v3574, 0.0
  %v3831 = vmax.f32 %v3575, 0.0
  %v3832 = vmax.f32 %v3576, 0.0
  %v3833 = vmax.f32 %v3577, 0.0
  %v3834 = vmax.f32 %v3578, 0.0
  %v3835 = vmax.f32 %v3579, 0.0
  %v3836 = vmax.f32 %v3580, 0.0
  %v3837 = vmax.f32 %v3581, 0.0
  %v3838 = vmax.f32 %v3582, 0.0
  %v3839 = vmax.f32 %v3583, 0.0
  %v3840 = vmax.f32 %v3584, 0.0
  %v3841 = vmax.f32 %v3585, 0.0
  %v3842 = vmax.f32 %v3586, 0.0
  %v3843 = vmax.f32 %v3587, 0.0
  %v3844 = vmax.f32 %v3588, 0.0
  %v3845 = vmax.f32 %v3589, 0.0
  %v3846 = vmax.f32 %v3590, 0.0
  %v3847 = vmax.f32 %v3591, 0.0
  %v3848 = vmax.f32 %v3592, 0.0
  %v3849 = vmax.f32 %v3593, 0.0
  %v3850 = vmax.f32 %v3594, 0.0
  %v3851 = vmax.f32 %v3595, 0.0
  %v3852 = vmax.f32 %v3596, 0.0
  %v3853 = vmax.f32 %v3597, 0.0
  %v3854 = vmax.f32 %v3598, 0.0
  %v3855 = vmax.f32 %v3599, 0.0
  %v3856 = vmax.f32 %v3600, 0.0
  %v3857 = vmax.f32 %v3601, 0.0
  %v3858 = vmax.f32 %v3602, 0.0
  %v3859 = vmax.f32 %v3603, 0.0
  %v3860 = vmax.f32 %v3604, 0.0
  %v3861 = vmax.f32 %v3605, 0.0
  %v3862 = vmax.f32 %v3606, 0.0
  %v3863 = vmax.f32 %v3607, 0.0
  %v3864 = vmax.f32 %v3608, 0.0
  %v3865 = vmax.f32 %v3609, 0.0
  %v3866 = vmax.f32 %v3610, 0.0
  %v3867 = vmax.f32 %v3611, 0.0
  %v3868 = vmax.f32 %v3612, 0.0
  %v3869 = vmax.f32 %v3613, 0.0
  %v3870 = vmax.f32 %v3614, 0.0
  %v3871 = vmax.f32 %v3615, 0.0
  %v3872 = vmax.f32 %v3616, 0.0
  %v3873 = vmax.f32 %v3617, 0.0
  %v3874 = vmax.f32 %v3618, 0.0
  %v3875 = vmax.f32 %v3619, 0.0
  %v3876 = vmax.f32 %v3620, 0.0
  %v3877 = vmax.f32 %v3621, 0.0
  %v3878 = vmax.f32 %v3622, 0.0
  %v3879 = vmax.f32 %v3623, 0.0
  %v3880 = vmax.f32 %v3624, 0.0
  %v3881 = vmax.f32 %v3625, 0.0
  %v3882 = vmax.f32 %v3626, 0.0
  %v3883 = vmax.f32 %v3627, 0.0
  %v3884 = vmax.f32 %v3628, 0.0
  %v3885 = vmax.f32 %v3629, 0.0
  %v3886 = vmax.f32 %v3630, 0.0
  %v3887 = vmax.f32 %v3631, 0.0
  %v3888 = vmax.f32 %v3632, 0.0
  %v3889 = vmax.f32 %v3633, 0.0
  %v3890 = vmax.f32 %v3634, 0.0
  %v3891 = vmax.f32 %v3635, 0.0
  %v3892 = vmax.f32 %v3636, 0.0
  %v3893 = vmax.f32 %v3637, 0.0
  %v3894 = vmax.f32 %v3638, 0.0
  %v3895 = vmax.f32 %v3639, 0.0
  %v3896 = vmax.f32 %v3640, 0.0
  %v3897 = vmax.f32 %v3641, 0.0
  %v3898 = vmax.f32 %v3642, 0.0
  %v3899 = vmax.f32 %v3643, 0.0
  %v3900 = vmax.f32 %v3644, 0.0
  %v3901 = vmax.f32 %v3645, 0.0
  %v3902 = vmax.f32 %v3646, 0.0
  %v3903 = vmax.f32 %v3647, 0.0
  %v3904 = vmax.f32 %v3648, 0.0
  %v3905 = vmax.f32 %v3649, 0.0
  %v3906 = vmax.f32 %v3650, 0.0
  %v3907 = vmax.f32 %v3651, 0.0
  %v3908 = vmax.f32 %v3652, 0.0
  %v3909 = vmax.f32 %v3653, 0.0
  %v3910 = vmax.f32 %v3654, 0.0
  %v3911 = vmax.f32 %v3655, 0.0
  %v3912 = vmax.f32 %v3656, 0.0
  %v3913 = vmax.f32 %v3657, 0.0
  %v3914 = vmax.f32 %v3658, 0.0
  %v3915 = vmax.f32 %v3659, 0.0
  %v3916 = vmax.f32 %v3660, 0.0
  %v3917 = vmax.f32 %v3661, 0.0
  %v3918 = vmax.f32 %v3662, 0.0
  %v3919 = vmax.f32 %v3663, 0.0
  %v3920 = vmax.f32 %v3664, 0.0
  %v3921 = vmax.f32 %v3665, 0.0
  %v3922 = vmax.f32 %v3666, 0.0
  %v3923 = vmax.f32 %v3667, 0.0
  %v3924 = vmax.f32 %v3668, 0.0
  %v3925 = vmax.f32 %v3669, 0.0
  %v3926 = vmax.f32 %v3670, 0.0
  %v3927 = vmax.f32 %v3671, 0.0
  %v3928 = vmax.f32 %v3672, 0.0
  %v3929 = vmax.f32 %v3673, 0.0
  %v3930 = vmax.f32 %v3674, 0.0
  %v3931 = vmax.f32 %v3675, 0.0
  %v3932 = vmax.f32 %v3676, 0.0
  %v3933 = vmax.f32 %v3677, 0.0
  %v3934 = vmax.f32 %v3678, 0.0
  %v3935 = vmax.f32 %v3679, 0.0
  %v3936 = vmax.f32 %v3680, 0.0
  %v3937 = vmax.f32 %v3681, 0.0
  %v3938 = vmax.f32 %v3682, 0.0
  %v3939 = vmax.f32 %v3683, 0.0
  %v3940 = vmax.f32 %v3684, 0.0
  %v3941 = vmax.f32 %v3685, 0.0
  %v3942 = vmax.f32 %v3686, 0.0
  %v3943 = vmax.f32 %v3687, 0.0
  %v3944 = vmax.f32 %v3688, 0.0
  %v3945 = vmax.f32 %v3689, 0.0
  %v3946 = vmax.f32 %v3690, 0.0
  %v3947 = vmax.f32 %v3691, 0.0
  %v3948 = vmax.f32 %v3692, 0.0
  %v3949 = vmax.f32 %v3693, 0.0
  %v3950 = vmax.f32 %v3694, 0.0
  %v3951 = vmax.f32 %v3695, 0.0
  %v3952 = vmax.f32 %v3696, 0.0
  %v3953 = vmax.f32 %v3697, 0.0
  %v3954 = vmax.f32 %v3698, 0.0
  %v3955 = vmax.f32 %v3699, 0.0
  %v3956 = vmax.f32 %v3700, 0.0
  %v3957 = vmax.f32 %v3701, 0.0
  %v3958 = vmax.f32 %v3702, 0.0
  %v3959 = vmax.f32 %v3703, 0.0
  %v3960 = vmax.f32 %v3704, 0.0
  %v3961 = vmax.f32 %v3705, 0.0
  %v3962 = vmax.f32 %v3706, 0.0
  %v3963 = vmax.f32 %v3707, 0.0
  %v3964 = vmax.f32 %v3708, 0.0
  %v3965 = vmax.f32 %v3709, 0.0
  %v3966 = vmax.f32 %v3710, 0.0
  %v3967 = vmax.f32 %v3711, 0.0
  %v3968 = vmax.f32 %v3712, 0.0
  %v3969 = vmax.f32 %v3713, 0.0
  %v3970 = vmax.f32 %v3714, 0.0
  %v3971 = vmax.f32 %v3715, 0.0
  %v3972 = vmax.f32 %v3716, 0.0
  %v3973 = vmax.f32 %v3717, 0.0
  %v3974 = vmax.f32 %v3718, 0.0
  %v3975 = vmax.f32 %v3719, 0.0
  %v3976 = vmax.f32 %v3720, 0.0
  %v3977 = vmax.f32 %v3721, 0.0
  %v3978 = vmax.f32 %v3722, 0.0
  %v3979 = vmax.f32 %v3723, 0.0
  %v3980 = vmax.f32 %v3724, 0.0
  %v3981 = vmax.f32 %v3725, 0.0
  %v3982 = vmax.f32 %v3726, 0.0
  %v3983 = vmax.f32 %v3727, 0.0
  %v3984 = vmax.f32 %v3728, 0.0
  %v3985 = vmax.f32 %v3729, 0.0
  %v3986 = vmax.f32 %v3730, 0.0
  %v3987 = vmax.f32 %v3731, 0.0
  %v3988 = vmax.f32 %v3732, 0.0
  %v3989 = vmax.f32 %v3733, 0.0
  %v3990 = vmax.f32 %v3734, 0.0
  %v3991 = vmax.f32 %v3735, 0.0
  %v3992 = vmax.f32 %v3736, 0.0
  %v3993 = vmax.f32 %v3737, 0.0
  %v3994 = vmax.f32 %v3738, 0.0
  %v3995 = vmax.f32 %v3739, 0.0
  %v3996 = vmax.f32 %v3740, 0.0
  %v3997 = vmax.f32 %v3741, 0.0
  %v3998 = vmax.f32 %v3742, 0.0
  %v3999 = vmax.f32 %v3743, 0.0
  %v4000 = vmax.f32 %v3744, 0.0
  %v4001 = vmax.f32 %v3745, 0.0
  %v4002 = vmax.f32 %v3746, 0.0
  %v4003 = vmax.f32 %v3747, 0.0
  %v4004 = vmax.f32 %v3748, 0.0
  %v4005 = vmax.f32 %v3749, 0.0
  %v4006 = vmax.f32 %v3750, 0.0
  %v4007 = vmax.f32 %v3751, 0.0
  %v4008 = vmax.f32 %v3752, 0.0
  %v4009 = vmax.f32 %v3753, 0.0
  %v4010 = vmax.f32 %v3754, 0.0
  %v4011 = vmax.f32 %v3755, 0.0
  %v4012 = vmax.f32 %v3756, 0.0
  %v4013 = vmax.f32 %v3757, 0.0
  %v4014 = vmax.f32 %v3758, 0.0
  %v4015 = vmax.f32 %v3759, 0.0
  %v4016 = vmax.f32 %v3760, 0.0
  %v4017 = vmax.f32 %v3761, 0.0
  %v4018 = vmax.f32 %v3762, 0.0
  %v4019 = vmax.f32 %v3763, 0.0
  %v4020 = vmax.f32 %v3764, 0.0
  %v4021 = vmax.f32 %v3765, 0.0
  %v4022 = vmax.f32 %v3766, 0.0
  %v4023 = vmax.f32 %v3767, 0.0
  %v4024 = vmax.f32 %v3768, 0.0
  %v4025 = vmax.f32 %v3769, 0.0
  %v4026 = vmax.f32 %v3770, 0.0
  %v4027 = vmax.f32 %v3771, 0.0
  %v4028 = vmax.f32 %v3772, 0.0
  %v4029 = vmax.f32 %v3773, 0.0
  %v4030 = vmax.f32 %v3774, 0.0
  %v4031 = vmax.f32 %v3775, 0.0
  %v4032 = vmax.f32 %v3776, 0.0
  %v4033 = vmax.f32 %v3777, 0.0
  %v4034 = vmax.f32 %v3778, 0.0
  %v4035 = vmax.f32 %v3779, 0.0
  %v4036 = vld [vmem:[%s3] sm:$0xff]
  %v4037 = vld [vmem:[%s3 + $0x8] sm:$0xff]
  %v4038 = vld [vmem:[%s3 + $0x10] sm:$0xff]
  %v4039 = vld [vmem:[%s3 + $0x18] sm:$0xff]
  %4040 = vmatprep.subr.mxu0 %v3901
  %4041 = vmatpush1.msra.mxu0 %v3900
  %4042 = vmatprep.subr.mxu0 %v3893
  %4043 = vmatpush1.msra.mxu0 %v3892
  %4044 = vmatprep.subr.mxu0 %v3885
  %4045 = vmatpush1.msra.mxu0 %v3884
  %4046 = vmatprep.subr.mxu0 %v3877
  %4047 = vmatpush1.msra.mxu0 %v3876
  %4048 = vmatprep.subr.mxu0 %v3869
  %4049 = vmatpush1.msra.mxu0 %v3868
  %4050 = vmatprep.subr.mxu0 %v3861
  %4051 = vmatpush1.msra.mxu0 %v3860
  %4052 = vmatprep.subr.mxu0 %v3853
  %4053 = vmatpush1.msra.mxu0 %v3852
  %4054 = vmatprep.subr.mxu0 %v3845
  %4055 = vmatpush1.msra.mxu0 %v3844
  %4056 = vmatprep.subr.mxu0 %v3837
  %4057 = vmatpush1.msra.mxu0 %v3836
  %4058 = vmatprep.subr.mxu0 %v3829
  %4059 = vmatpush1.msra.mxu0 %v3828
  %4060 = vmatprep.subr.mxu0 %v3821
  %4061 = vmatpush1.msra.mxu0 %v3820
  %4062 = vmatprep.subr.mxu0 %v3813
  %4063 = vmatpush1.msra.mxu0 %v3812
  %4064 = vmatprep.subr.mxu0 %v3805
  %4065 = vmatpush1.msra.mxu0 %v3804
  %4066 = vmatprep.subr.mxu0 %v3797
  %4067 = vmatpush1.msra.mxu0 %v3796
  %4068 = vmatprep.subr.mxu0 %v3789
  %4069 = vmatpush1.msra.mxu0 %v3788
  %4070 = vmatprep.subr.mxu0 %v3781
  %4071 = vmatpush1.msra.mxu0 %v3780
  %4072 = vmatprep.subr.mxu0 %v4029
  %4073 = vmatpush2.msra.mxu0 %v4028
  %4074 = vmatprep.subr.mxu0 %v4021
  %4075 = vmatpush2.msra.mxu0 %v4020
  %4076 = vmatprep.subr.mxu0 %v4013
  %4077 = vmatpush2.msra.mxu0 %v4012
  %4078 = vmatprep.subr.mxu0 %v4005
  %4079 = vmatpush2.msra.mxu0 %v4004
  %4080 = vmatprep.subr.mxu0 %v3997
  %4081 = vmatpush2.msra.mxu0 %v3996
  %4082 = vmatprep.subr.mxu0 %v3989
  %4083 = vmatpush2.msra.mxu0 %v3988
  %4084 = vmatprep.subr.mxu0 %v3981
  %4085 = vmatpush2.msra.mxu0 %v3980
  %4086 = vmatprep.subr.mxu0 %v3973
  %4087 = vmatpush2.msra.mxu0 %v3972
  %4088 = vmatprep.subr.mxu0 %v3965
  %4089 = vmatpush2.msra.mxu0 %v3964
  %4090 = vmatprep.subr.mxu0 %v3957
  %4091 = vmatpush2.msra.mxu0 %v3956
  %4092 = vmatprep.subr.mxu0 %v3949
  %4093 = vmatpush2.msra.mxu0 %v3948
  %4094 = vmatprep.subr.mxu0 %v3941
  %4095 = vmatpush2.msra.mxu0 %v3940
  %4096 = vmatprep.subr.mxu0 %v3933
  %4097 = vmatpush2.msra.mxu0 %v3932
  %4098 = vmatprep.subr.mxu0 %v3925
  %4099 = vmatpush2.msra.mxu0 %v3924
  %4100 = vmatprep.subr.mxu0 %v3917
  %4101 = vmatpush2.msra.mxu0 %v3916
  %4102 = vmatprep.subr.mxu0 %v3909
  %4103 = vmatpush2.msra.mxu0 %v3908
  %4104 = vmatprep.mubr.f32.mxu0 %v4037
  %4105 = vmatmul.mubr.f32.gmra.mxu0 %v4036
  %v4106 = vpop.f32.mrf.mxu0
  %v4107 = vadd.f32 0.0, %v4106
  %v4108 = vpop.f32.mrf.mxu0
  %v4109 = vadd.f32 0.0, %v4108
  %4110 = vmatprep.mubr.f32.mxu0 %v4039
  %4111 = vmatmul.mubr.f32.gmra.mxu0 %v4038
  %v4112 = vpop.f32.mrf.mxu0
  %v4113 = vadd.f32 0.0, %v4112
  %v4114 = vpop.f32.mrf.mxu0
  %v4115 = vadd.f32 0.0, %v4114
  %4116 = vdwg.mxu0
  %4117 = vmatprep.subr.mxu0 %v3903
  %4118 = vmatpush1.msra.mxu0 %v3902
  %4119 = vmatprep.subr.mxu0 %v3895
  %4120 = vmatpush1.msra.mxu0 %v3894
  %4121 = vmatprep.subr.mxu0 %v3887
  %4122 = vmatpush1.msra.mxu0 %v3886
  %4123 = vmatprep.subr.mxu0 %v3879
  %4124 = vmatpush1.msra.mxu0 %v3878
  %4125 = vmatprep.subr.mxu0 %v3871
  %4126 = vmatpush1.msra.mxu0 %v3870
  %4127 = vmatprep.subr.mxu0 %v3863
  %4128 = vmatpush1.msra.mxu0 %v3862
  %4129 = vmatprep.subr.mxu0 %v3855
  %4130 = vmatpush1.msra.mxu0 %v3854
  %4131 = vmatprep.subr.mxu0 %v3847
  %4132 = vmatpush1.msra.mxu0 %v3846
  %4133 = vmatprep.subr.mxu0 %v3839
  %4134 = vmatpush1.msra.mxu0 %v3838
  %4135 = vmatprep.subr.mxu0 %v3831
  %4136 = vmatpush1.msra.mxu0 %v3830
  %4137 = vmatprep.subr.mxu0 %v3823
  %4138 = vmatpush1.msra.mxu0 %v3822
  %4139 = vmatprep.subr.mxu0 %v3815
  %4140 = vmatpush1.msra.mxu0 %v3814
  %4141 = vmatprep.subr.mxu0 %v3807
  %4142 = vmatpush1.msra.mxu0 %v3806
  %4143 = vmatprep.subr.mxu0 %v3799
  %4144 = vmatpush1.msra.mxu0 %v3798
  %4145 = vmatprep.subr.mxu0 %v3791
  %4146 = vmatpush1.msra.mxu0 %v3790
  %4147 = vmatprep.subr.mxu0 %v3783
  %4148 = vmatpush1.msra.mxu0 %v3782
  %4149 = vmatprep.subr.mxu0 %v4031
  %4150 = vmatpush2.msra.mxu0 %v4030
  %4151 = vmatprep.subr.mxu0 %v4023
  %4152 = vmatpush2.msra.mxu0 %v4022
  %4153 = vmatprep.subr.mxu0 %v4015
  %4154 = vmatpush2.msra.mxu0 %v4014
  %4155 = vmatprep.subr.mxu0 %v4007
  %4156 = vmatpush2.msra.mxu0 %v4006
  %4157 = vmatprep.subr.mxu0 %v3999
  %4158 = vmatpush2.msra.mxu0 %v3998
  %4159 = vmatprep.subr.mxu0 %v3991
  %4160 = vmatpush2.msra.mxu0 %v3990
  %4161 = vmatprep.subr.mxu0 %v3983
  %4162 = vmatpush2.msra.mxu0 %v3982
  %4163 = vmatprep.subr.mxu0 %v3975
  %4164 = vmatpush2.msra.mxu0 %v3974
  %4165 = vmatprep.subr.mxu0 %v3967
  %4166 = vmatpush2.msra.mxu0 %v3966
  %4167 = vmatprep.subr.mxu0 %v3959
  %4168 = vmatpush2.msra.mxu0 %v3958
  %4169 = vmatprep.subr.mxu0 %v3951
  %4170 = vmatpush2.msra.mxu0 %v3950
  %4171 = vmatprep.subr.mxu0 %v3943
  %4172 = vmatpush2.msra.mxu0 %v3942
  %4173 = vmatprep.subr.mxu0 %v3935
  %4174 = vmatpush2.msra.mxu0 %v3934
  %4175 = vmatprep.subr.mxu0 %v3927
  %4176 = vmatpush2.msra.mxu0 %v3926
  %4177 = vmatprep.subr.mxu0 %v3919
  %4178 = vmatpush2.msra.mxu0 %v3918
  %4179 = vmatprep.subr.mxu0 %v3911
  %4180 = vmatpush2.msra.mxu0 %v3910
  %4181 = vmatprep.mubr.f32.mxu0 %v4037
  %4182 = vmatmul.mubr.f32.gmra.mxu0 %v4036
  %v4183 = vpop.f32.mrf.mxu0
  %v4184 = vadd.f32 0.0, %v4183
  %v4185 = vpop.f32.mrf.mxu0
  %v4186 = vadd.f32 0.0, %v4185
  %4187 = vmatprep.mubr.f32.mxu0 %v4039
  %4188 = vmatmul.mubr.f32.gmra.mxu0 %v4038
  %v4189 = vpop.f32.mrf.mxu0
  %v4190 = vadd.f32 0.0, %v4189
  %v4191 = vpop.f32.mrf.mxu0
  %v4192 = vadd.f32 0.0, %v4191
  %4193 = vdwg.mxu0
  %4194 = vmatprep.subr.mxu0 %v3905
  %4195 = vmatpush1.msra.mxu0 %v3904
  %4196 = vmatprep.subr.mxu0 %v3897
  %4197 = vmatpush1.msra.mxu0 %v3896
  %4198 = vmatprep.subr.mxu0 %v3889
  %4199 = vmatpush1.msra.mxu0 %v3888
  %4200 = vmatprep.subr.mxu0 %v3881
  %4201 = vmatpush1.msra.mxu0 %v3880
  %4202 = vmatprep.subr.mxu0 %v3873
  %4203 = vmatpush1.msra.mxu0 %v3872
  %4204 = vmatprep.subr.mxu0 %v3865
  %4205 = vmatpush1.msra.mxu0 %v3864
  %4206 = vmatprep.subr.mxu0 %v3857
  %4207 = vmatpush1.msra.mxu0 %v3856
  %4208 = vmatprep.subr.mxu0 %v3849
  %4209 = vmatpush1.msra.mxu0 %v3848
  %4210 = vmatprep.subr.mxu0 %v3841
  %4211 = vmatpush1.msra.mxu0 %v3840
  %4212 = vmatprep.subr.mxu0 %v3833
  %4213 = vmatpush1.msra.mxu0 %v3832
  %4214 = vmatprep.subr.mxu0 %v3825
  %4215 = vmatpush1.msra.mxu0 %v3824
  %4216 = vmatprep.subr.mxu0 %v3817
  %4217 = vmatpush1.msra.mxu0 %v3816
  %4218 = vmatprep.subr.mxu0 %v3809
  %4219 = vmatpush1.msra.mxu0 %v3808
  %4220 = vmatprep.subr.mxu0 %v3801
  %4221 = vmatpush1.msra.mxu0 %v3800
  %4222 = vmatprep.subr.mxu0 %v3793
  %4223 = vmatpush1.msra.mxu0 %v3792
  %4224 = vmatprep.subr.mxu0 %v3785
  %4225 = vmatpush1.msra.mxu0 %v3784
  %4226 = vmatprep.subr.mxu0 %v4033
  %4227 = vmatpush2.msra.mxu0 %v4032
  %4228 = vmatprep.subr.mxu0 %v4025
  %4229 = vmatpush2.msra.mxu0 %v4024
  %4230 = vmatprep.subr.mxu0 %v4017
  %4231 = vmatpush2.msra.mxu0 %v4016
  %4232 = vmatprep.subr.mxu0 %v4009
  %4233 = vmatpush2.msra.mxu0 %v4008
  %4234 = vmatprep.subr.mxu0 %v4001
  %4235 = vmatpush2.msra.mxu0 %v4000
  %4236 = vmatprep.subr.mxu0 %v3993
  %4237 = vmatpush2.msra.mxu0 %v3992
  %4238 = vmatprep.subr.mxu0 %v3985
  %4239 = vmatpush2.msra.mxu0 %v3984
  %4240 = vmatprep.subr.mxu0 %v3977
  %4241 = vmatpush2.msra.mxu0 %v3976
  %4242 = vmatprep.subr.mxu0 %v3969
  %4243 = vmatpush2.msra.mxu0 %v3968
  %4244 = vmatprep.subr.mxu0 %v3961
  %4245 = vmatpush2.msra.mxu0 %v3960
  %4246 = vmatprep.subr.mxu0 %v3953
  %4247 = vmatpush2.msra.mxu0 %v3952
  %4248 = vmatprep.subr.mxu0 %v3945
  %4249 = vmatpush2.msra.mxu0 %v3944
  %4250 = vmatprep.subr.mxu0 %v3937
  %4251 = vmatpush2.msra.mxu0 %v3936
  %4252 = vmatprep.subr.mxu0 %v3929
  %4253 = vmatpush2.msra.mxu0 %v3928
  %4254 = vmatprep.subr.mxu0 %v3921
  %4255 = vmatpush2.msra.mxu0 %v3920
  %4256 = vmatprep.subr.mxu0 %v3913
  %4257 = vmatpush2.msra.mxu0 %v3912
  %4258 = vmatprep.mubr.f32.mxu0 %v4037
  %4259 = vmatmul.mubr.f32.gmra.mxu0 %v4036
  %v4260 = vpop.f32.mrf.mxu0
  %v4261 = vadd.f32 0.0, %v4260
  %v4262 = vpop.f32.mrf.mxu0
  %v4263 = vadd.f32 0.0, %v4262
  %4264 = vmatprep.mubr.f32.mxu0 %v4039
  %4265 = vmatmul.mubr.f32.gmra.mxu0 %v4038
  %v4266 = vpop.f32.mrf.mxu0
  %v4267 = vadd.f32 0.0, %v4266
  %v4268 = vpop.f32.mrf.mxu0
  %v4269 = vadd.f32 0.0, %v4268
  %4270 = vdwg.mxu0
  %4271 = vmatprep.subr.mxu0 %v3907
  %4272 = vmatpush1.msra.mxu0 %v3906
  %4273 = vmatprep.subr.mxu0 %v3899
  %4274 = vmatpush1.msra.mxu0 %v3898
  %4275 = vmatprep.subr.mxu0 %v3891
  %4276 = vmatpush1.msra.mxu0 %v3890
  %4277 = vmatprep.subr.mxu0 %v3883
  %4278 = vmatpush1.msra.mxu0 %v3882
  %4279 = vmatprep.subr.mxu0 %v3875
  %4280 = vmatpush1.msra.mxu0 %v3874
  %4281 = vmatprep.subr.mxu0 %v3867
  %4282 = vmatpush1.msra.mxu0 %v3866
  %4283 = vmatprep.subr.mxu0 %v3859
  %4284 = vmatpush1.msra.mxu0 %v3858
  %4285 = vmatprep.subr.mxu0 %v3851
  %4286 = vmatpush1.msra.mxu0 %v3850
  %4287 = vmatprep.subr.mxu0 %v3843
  %4288 = vmatpush1.msra.mxu0 %v3842
  %4289 = vmatprep.subr.mxu0 %v3835
  %4290 = vmatpush1.msra.mxu0 %v3834
  %4291 = vmatprep.subr.mxu0 %v3827
  %4292 = vmatpush1.msra.mxu0 %v3826
  %4293 = vmatprep.subr.mxu0 %v3819
  %4294 = vmatpush1.msra.mxu0 %v3818
  %4295 = vmatprep.subr.mxu0 %v3811
  %4296 = vmatpush1.msra.mxu0 %v3810
  %4297 = vmatprep.subr.mxu0 %v3803
  %4298 = vmatpush1.msra.mxu0 %v3802
  %4299 = vmatprep.subr.mxu0 %v3795
  %4300 = vmatpush1.msra.mxu0 %v3794
  %4301 = vmatprep.subr.mxu0 %v3787
  %4302 = vmatpush1.msra.mxu0 %v3786
  %4303 = vmatprep.subr.mxu0 %v4035
  %4304 = vmatpush2.msra.mxu0 %v4034
  %4305 = vmatprep.subr.mxu0 %v4027
  %4306 = vmatpush2.msra.mxu0 %v4026
  %4307 = vmatprep.subr.mxu0 %v4019
  %4308 = vmatpush2.msra.mxu0 %v4018
  %4309 = vmatprep.subr.mxu0 %v4011
  %4310 = vmatpush2.msra.mxu0 %v4010
  %4311 = vmatprep.subr.mxu0 %v4003
  %4312 = vmatpush2.msra.mxu0 %v4002
  %4313 = vmatprep.subr.mxu0 %v3995
  %4314 = vmatpush2.msra.mxu0 %v3994
  %4315 = vmatprep.subr.mxu0 %v3987
  %4316 = vmatpush2.msra.mxu0 %v3986
  %4317 = vmatprep.subr.mxu0 %v3979
  %4318 = vmatpush2.msra.mxu0 %v3978
  %4319 = vmatprep.subr.mxu0 %v3971
  %4320 = vmatpush2.msra.mxu0 %v3970
  %4321 = vmatprep.subr.mxu0 %v3963
  %4322 = vmatpush2.msra.mxu0 %v3962
  %4323 = vmatprep.subr.mxu0 %v3955
  %4324 = vmatpush2.msra.mxu0 %v3954
  %4325 = vmatprep.subr.mxu0 %v3947
  %4326 = vmatpush2.msra.mxu0 %v3946
  %4327 = vmatprep.subr.mxu0 %v3939
  %4328 = vmatpush2.msra.mxu0 %v3938
  %4329 = vmatprep.subr.mxu0 %v3931
  %4330 = vmatpush2.msra.mxu0 %v3930
  %4331 = vmatprep.subr.mxu0 %v3923
  %4332 = vmatpush2.msra.mxu0 %v3922
  %4333 = vmatprep.subr.mxu0 %v3915
  %4334 = vmatpush2.msra.mxu0 %v3914
  %4335 = vmatprep.mubr.f32.mxu0 %v4037
  %4336 = vmatmul.mubr.f32.gmra.mxu0 %v4036
  %v4337 = vpop.f32.mrf.mxu0
  %v4338 = vadd.f32 0.0, %v4337
  %v4339 = vpop.f32.mrf.mxu0
  %v4340 = vadd.f32 0.0, %v4339
  %4341 = vmatprep.mubr.f32.mxu0 %v4039
  %4342 = vmatmul.mubr.f32.gmra.mxu0 %v4038
  %v4343 = vpop.f32.mrf.mxu0
  %v4344 = vadd.f32 0.0, %v4343
  %v4345 = vpop.f32.mrf.mxu0
  %v4346 = vadd.f32 0.0, %v4345
  %4347 = vdwg.mxu0
  %v4348 = vld [vmem:[%s4] sm:$0xff]
  %v4349 = vld [vmem:[%s4 + $0x8] sm:$0xff]
  %v4350 = vld [vmem:[%s4 + $0x10] sm:$0xff]
  %v4351 = vld [vmem:[%s4 + $0x18] sm:$0xff]
  %v4352 = vld [vmem:[%s4 + $0x20] sm:$0xff]
  %v4353 = vld [vmem:[%s4 + $0x28] sm:$0xff]
  %v4354 = vld [vmem:[%s4 + $0x30] sm:$0xff]
  %v4355 = vld [vmem:[%s4 + $0x38] sm:$0xff]
  %v4356 = vld [vmem:[%s4 + $0x40] sm:$0xff]
  %v4357 = vld [vmem:[%s4 + $0x48] sm:$0xff]
  %v4358 = vld [vmem:[%s4 + $0x50] sm:$0xff]
  %v4359 = vld [vmem:[%s4 + $0x58] sm:$0xff]
  %v4360 = vld [vmem:[%s4 + $0x60] sm:$0xff]
  %v4361 = vld [vmem:[%s4 + $0x68] sm:$0xff]
  %v4362 = vld [vmem:[%s4 + $0x70] sm:$0xff]
  %v4363 = vld [vmem:[%s4 + $0x78] sm:$0xff]
  %v4364 = vld [vmem:[%s4 + $0x80] sm:$0xff]
  %v4365 = vld [vmem:[%s4 + $0x88] sm:$0xff]
  %v4366 = vld [vmem:[%s4 + $0x90] sm:$0xff]
  %v4367 = vld [vmem:[%s4 + $0x98] sm:$0xff]
  %v4368 = vld [vmem:[%s4 + $0xa0] sm:$0xff]
  %v4369 = vld [vmem:[%s4 + $0xa8] sm:$0xff]
  %v4370 = vld [vmem:[%s4 + $0xb0] sm:$0xff]
  %v4371 = vld [vmem:[%s4 + $0xb8] sm:$0xff]
  %v4372 = vld [vmem:[%s4 + $0xc0] sm:$0xff]
  %v4373 = vld [vmem:[%s4 + $0xc8] sm:$0xff]
  %v4374 = vld [vmem:[%s4 + $0xd0] sm:$0xff]
  %v4375 = vld [vmem:[%s4 + $0xd8] sm:$0xff]
  %v4376 = vld [vmem:[%s4 + $0xe0] sm:$0xff]
  %v4377 = vld [vmem:[%s4 + $0xe8] sm:$0xff]
  %v4378 = vld [vmem:[%s4 + $0xf0] sm:$0xff]
  %v4379 = vld [vmem:[%s4 + $0xf8] sm:$0xff]
  %v4380 = vld [vmem:[%s4 + $0x100] sm:$0xff]
  %v4381 = vld [vmem:[%s4 + $0x108] sm:$0xff]
  %v4382 = vld [vmem:[%s4 + $0x110] sm:$0xff]
  %v4383 = vld [vmem:[%s4 + $0x118] sm:$0xff]
  %v4384 = vld [vmem:[%s4 + $0x120] sm:$0xff]
  %v4385 = vld [vmem:[%s4 + $0x128] sm:$0xff]
  %v4386 = vld [vmem:[%s4 + $0x130] sm:$0xff]
  %v4387 = vld [vmem:[%s4 + $0x138] sm:$0xff]
  %v4388 = vld [vmem:[%s4 + $0x140] sm:$0xff]
  %v4389 = vld [vmem:[%s4 + $0x148] sm:$0xff]
  %v4390 = vld [vmem:[%s4 + $0x150] sm:$0xff]
  %v4391 = vld [vmem:[%s4 + $0x158] sm:$0xff]
  %v4392 = vld [vmem:[%s4 + $0x160] sm:$0xff]
  %v4393 = vld [vmem:[%s4 + $0x168] sm:$0xff]
  %v4394 = vld [vmem:[%s4 + $0x170] sm:$0xff]
  %v4395 = vld [vmem:[%s4 + $0x178] sm:$0xff]
  %v4396 = vld [vmem:[%s4 + $0x180] sm:$0xff]
  %v4397 = vld [vmem:[%s4 + $0x188] sm:$0xff]
  %v4398 = vld [vmem:[%s4 + $0x190] sm:$0xff]
  %v4399 = vld [vmem:[%s4 + $0x198] sm:$0xff]
  %v4400 = vld [vmem:[%s4 + $0x1a0] sm:$0xff]
  %v4401 = vld [vmem:[%s4 + $0x1a8] sm:$0xff]
  %v4402 = vld [vmem:[%s4 + $0x1b0] sm:$0xff]
  %v4403 = vld [vmem:[%s4 + $0x1b8] sm:$0xff]
  %v4404 = vld [vmem:[%s4 + $0x1c0] sm:$0xff]
  %v4405 = vld [vmem:[%s4 + $0x1c8] sm:$0xff]
  %v4406 = vld [vmem:[%s4 + $0x1d0] sm:$0xff]
  %v4407 = vld [vmem:[%s4 + $0x1d8] sm:$0xff]
  %v4408 = vld [vmem:[%s4 + $0x1e0] sm:$0xff]
  %v4409 = vld [vmem:[%s4 + $0x1e8] sm:$0xff]
  %v4410 = vld [vmem:[%s4 + $0x1f0] sm:$0xff]
  %v4411 = vld [vmem:[%s4 + $0x1f8] sm:$0xff]
  %v4412 = vld [vmem:[%s4 + $0x200] sm:$0xff]
  %v4413 = vld [vmem:[%s4 + $0x208] sm:$0xff]
  %v4414 = vld [vmem:[%s4 + $0x210] sm:$0xff]
  %v4415 = vld [vmem:[%s4 + $0x218] sm:$0xff]
  %v4416 = vld [vmem:[%s4 + $0x220] sm:$0xff]
  %v4417 = vld [vmem:[%s4 + $0x228] sm:$0xff]
  %v4418 = vld [vmem:[%s4 + $0x230] sm:$0xff]
  %v4419 = vld [vmem:[%s4 + $0x238] sm:$0xff]
  %v4420 = vld [vmem:[%s4 + $0x240] sm:$0xff]
  %v4421 = vld [vmem:[%s4 + $0x248] sm:$0xff]
  %v4422 = vld [vmem:[%s4 + $0x250] sm:$0xff]
  %v4423 = vld [vmem:[%s4 + $0x258] sm:$0xff]
  %v4424 = vld [vmem:[%s4 + $0x260] sm:$0xff]
  %v4425 = vld [vmem:[%s4 + $0x268] sm:$0xff]
  %v4426 = vld [vmem:[%s4 + $0x270] sm:$0xff]
  %v4427 = vld [vmem:[%s4 + $0x278] sm:$0xff]
  %v4428 = vld [vmem:[%s4 + $0x280] sm:$0xff]
  %v4429 = vld [vmem:[%s4 + $0x288] sm:$0xff]
  %v4430 = vld [vmem:[%s4 + $0x290] sm:$0xff]
  %v4431 = vld [vmem:[%s4 + $0x298] sm:$0xff]
  %v4432 = vld [vmem:[%s4 + $0x2a0] sm:$0xff]
  %v4433 = vld [vmem:[%s4 + $0x2a8] sm:$0xff]
  %v4434 = vld [vmem:[%s4 + $0x2b0] sm:$0xff]
  %v4435 = vld [vmem:[%s4 + $0x2b8] sm:$0xff]
  %v4436 = vld [vmem:[%s4 + $0x2c0] sm:$0xff]
  %v4437 = vld [vmem:[%s4 + $0x2c8] sm:$0xff]
  %v4438 = vld [vmem:[%s4 + $0x2d0] sm:$0xff]
  %v4439 = vld [vmem:[%s4 + $0x2d8] sm:$0xff]
  %v4440 = vld [vmem:[%s4 + $0x2e0] sm:$0xff]
  %v4441 = vld [vmem:[%s4 + $0x2e8] sm:$0xff]
  %v4442 = vld [vmem:[%s4 + $0x2f0] sm:$0xff]
  %v4443 = vld [vmem:[%s4 + $0x2f8] sm:$0xff]
  %v4444 = vld [vmem:[%s4 + $0x300] sm:$0xff]
  %v4445 = vld [vmem:[%s4 + $0x308] sm:$0xff]
  %v4446 = vld [vmem:[%s4 + $0x310] sm:$0xff]
  %v4447 = vld [vmem:[%s4 + $0x318] sm:$0xff]
  %v4448 = vld [vmem:[%s4 + $0x320] sm:$0xff]
  %v4449 = vld [vmem:[%s4 + $0x328] sm:$0xff]
  %v4450 = vld [vmem:[%s4 + $0x330] sm:$0xff]
  %v4451 = vld [vmem:[%s4 + $0x338] sm:$0xff]
  %v4452 = vld [vmem:[%s4 + $0x340] sm:$0xff]
  %v4453 = vld [vmem:[%s4 + $0x348] sm:$0xff]
  %v4454 = vld [vmem:[%s4 + $0x350] sm:$0xff]
  %v4455 = vld [vmem:[%s4 + $0x358] sm:$0xff]
  %v4456 = vld [vmem:[%s4 + $0x360] sm:$0xff]
  %v4457 = vld [vmem:[%s4 + $0x368] sm:$0xff]
  %v4458 = vld [vmem:[%s4 + $0x370] sm:$0xff]
  %v4459 = vld [vmem:[%s4 + $0x378] sm:$0xff]
  %v4460 = vld [vmem:[%s4 + $0x380] sm:$0xff]
  %v4461 = vld [vmem:[%s4 + $0x388] sm:$0xff]
  %v4462 = vld [vmem:[%s4 + $0x390] sm:$0xff]
  %v4463 = vld [vmem:[%s4 + $0x398] sm:$0xff]
  %v4464 = vld [vmem:[%s4 + $0x3a0] sm:$0xff]
  %v4465 = vld [vmem:[%s4 + $0x3a8] sm:$0xff]
  %v4466 = vld [vmem:[%s4 + $0x3b0] sm:$0xff]
  %v4467 = vld [vmem:[%s4 + $0x3b8] sm:$0xff]
  %v4468 = vld [vmem:[%s4 + $0x3c0] sm:$0xff]
  %v4469 = vld [vmem:[%s4 + $0x3c8] sm:$0xff]
  %v4470 = vld [vmem:[%s4 + $0x3d0] sm:$0xff]
  %v4471 = vld [vmem:[%s4 + $0x3d8] sm:$0xff]
  %v4472 = vld [vmem:[%s4 + $0x3e0] sm:$0xff]
  %v4473 = vld [vmem:[%s4 + $0x3e8] sm:$0xff]
  %v4474 = vld [vmem:[%s4 + $0x3f0] sm:$0xff]
  %v4475 = vld [vmem:[%s4 + $0x3f8] sm:$0xff]
  %4476 = vmatprep.subr.mxu0 0.0
  %4477 = vmatpush1.msra.mxu0 %v4363
  %4478 = vmatprep.subr.mxu0 0.0
  %4479 = vmatpush1.msra.mxu0 %v4362
  %4480 = vmatprep.subr.mxu0 0.0
  %4481 = vmatpush1.msra.mxu0 %v4361
  %4482 = vmatprep.subr.mxu0 0.0
  %4483 = vmatpush1.msra.mxu0 %v4360
  %4484 = vmatprep.subr.mxu0 0.0
  %4485 = vmatpush1.msra.mxu0 %v4359
  %4486 = vmatprep.subr.mxu0 0.0
  %4487 = vmatpush1.msra.mxu0 %v4358
  %4488 = vmatprep.subr.mxu0 0.0
  %4489 = vmatpush1.msra.mxu0 %v4357
  %4490 = vmatprep.subr.mxu0 0.0
  %4491 = vmatpush1.msra.mxu0 %v4356
  %4492 = vmatprep.subr.mxu0 0.0
  %4493 = vmatpush1.msra.mxu0 %v4355
  %4494 = vmatprep.subr.mxu0 0.0
  %4495 = vmatpush1.msra.mxu0 %v4354
  %4496 = vmatprep.subr.mxu0 0.0
  %4497 = vmatpush1.msra.mxu0 %v4353
  %4498 = vmatprep.subr.mxu0 0.0
  %4499 = vmatpush1.msra.mxu0 %v4352
  %4500 = vmatprep.subr.mxu0 0.0
  %4501 = vmatpush1.msra.mxu0 %v4351
  %4502 = vmatprep.subr.mxu0 0.0
  %4503 = vmatpush1.msra.mxu0 %v4350
  %4504 = vmatprep.subr.mxu0 0.0
  %4505 = vmatpush1.msra.mxu0 %v4349
  %4506 = vmatprep.subr.mxu0 0.0
  %4507 = vmatpush1.msra.mxu0 %v4348
  %4508 = vmatprep.subr.mxu0 0.0
  %4509 = vmatpush2.msra.mxu0 %v4379
  %4510 = vmatprep.subr.mxu0 0.0
  %4511 = vmatpush2.msra.mxu0 %v4378
  %4512 = vmatprep.subr.mxu0 0.0
  %4513 = vmatpush2.msra.mxu0 %v4377
  %4514 = vmatprep.subr.mxu0 0.0
  %4515 = vmatpush2.msra.mxu0 %v4376
  %4516 = vmatprep.subr.mxu0 0.0
  %4517 = vmatpush2.msra.mxu0 %v4375
  %4518 = vmatprep.subr.mxu0 0.0
  %4519 = vmatpush2.msra.mxu0 %v4374
  %4520 = vmatprep.subr.mxu0 0.0
  %4521 = vmatpush2.msra.mxu0 %v4373
  %4522 = vmatprep.subr.mxu0 0.0
  %4523 = vmatpush2.msra.mxu0 %v4372
  %4524 = vmatprep.subr.mxu0 0.0
  %4525 = vmatpush2.msra.mxu0 %v4371
  %4526 = vmatprep.subr.mxu0 0.0
  %4527 = vmatpush2.msra.mxu0 %v4370
  %4528 = vmatprep.subr.mxu0 0.0
  %4529 = vmatpush2.msra.mxu0 %v4369
  %4530 = vmatprep.subr.mxu0 0.0
  %4531 = vmatpush2.msra.mxu0 %v4368
  %4532 = vmatprep.subr.mxu0 0.0
  %4533 = vmatpush2.msra.mxu0 %v4367
  %4534 = vmatprep.subr.mxu0 0.0
  %4535 = vmatpush2.msra.mxu0 %v4366
  %4536 = vmatprep.subr.mxu0 0.0
  %4537 = vmatpush2.msra.mxu0 %v4365
  %4538 = vmatprep.subr.mxu0 0.0
  %4539 = vmatpush2.msra.mxu0 %v4364
  %4540 = vmatprep.mubr.f32.mxu0 %v4109
  %4541 = vmatmul.mubr.f32.gmra.mxu0 %v4107
  %v4542 = vpop.f32.mrf.mxu0
  %v4543 = vadd.f32 0.0, %v4542
  %v4544 = vpop.f32.mrf.mxu0
  %4545 = vmatprep.mubr.f32.mxu0 %v4115
  %4546 = vmatmul.mubr.f32.gmra.mxu0 %v4113
  %v4547 = vpop.f32.mrf.mxu0
  %v4548 = vadd.f32 0.0, %v4547
  %v4549 = vpop.f32.mrf.mxu0
  %4550 = vdwg.mxu0
  %4551 = vmatprep.subr.mxu0 0.0
  %4552 = vmatpush1.msra.mxu0 %v4395
  %4553 = vmatprep.subr.mxu0 0.0
  %4554 = vmatpush1.msra.mxu0 %v4394
  %4555 = vmatprep.subr.mxu0 0.0
  %4556 = vmatpush1.msra.mxu0 %v4393
  %4557 = vmatprep.subr.mxu0 0.0
  %4558 = vmatpush1.msra.mxu0 %v4392
  %4559 = vmatprep.subr.mxu0 0.0
  %4560 = vmatpush1.msra.mxu0 %v4391
  %4561 = vmatprep.subr.mxu0 0.0
  %4562 = vmatpush1.msra.mxu0 %v4390
  %4563 = vmatprep.subr.mxu0 0.0
  %4564 = vmatpush1.msra.mxu0 %v4389
  %4565 = vmatprep.subr.mxu0 0.0
  %4566 = vmatpush1.msra.mxu0 %v4388
  %4567 = vmatprep.subr.mxu0 0.0
  %4568 = vmatpush1.msra.mxu0 %v4387
  %4569 = vmatprep.subr.mxu0 0.0
  %4570 = vmatpush1.msra.mxu0 %v4386
  %4571 = vmatprep.subr.mxu0 0.0
  %4572 = vmatpush1.msra.mxu0 %v4385
  %4573 = vmatprep.subr.mxu0 0.0
  %4574 = vmatpush1.msra.mxu0 %v4384
  %4575 = vmatprep.subr.mxu0 0.0
  %4576 = vmatpush1.msra.mxu0 %v4383
  %4577 = vmatprep.subr.mxu0 0.0
  %4578 = vmatpush1.msra.mxu0 %v4382
  %4579 = vmatprep.subr.mxu0 0.0
  %4580 = vmatpush1.msra.mxu0 %v4381
  %4581 = vmatprep.subr.mxu0 0.0
  %4582 = vmatpush1.msra.mxu0 %v4380
  %4583 = vmatprep.subr.mxu0 0.0
  %4584 = vmatpush2.msra.mxu0 %v4411
  %4585 = vmatprep.subr.mxu0 0.0
  %4586 = vmatpush2.msra.mxu0 %v4410
  %4587 = vmatprep.subr.mxu0 0.0
  %4588 = vmatpush2.msra.mxu0 %v4409
  %4589 = vmatprep.subr.mxu0 0.0
  %4590 = vmatpush2.msra.mxu0 %v4408
  %4591 = vmatprep.subr.mxu0 0.0
  %4592 = vmatpush2.msra.mxu0 %v4407
  %4593 = vmatprep.subr.mxu0 0.0
  %4594 = vmatpush2.msra.mxu0 %v4406
  %4595 = vmatprep.subr.mxu0 0.0
  %4596 = vmatpush2.msra.mxu0 %v4405
  %4597 = vmatprep.subr.mxu0 0.0
  %4598 = vmatpush2.msra.mxu0 %v4404
  %4599 = vmatprep.subr.mxu0 0.0
  %4600 = vmatpush2.msra.mxu0 %v4403
  %4601 = vmatprep.subr.mxu0 0.0
  %4602 = vmatpush2.msra.mxu0 %v4402
  %4603 = vmatprep.subr.mxu0 0.0
  %4604 = vmatpush2.msra.mxu0 %v4401
  %4605 = vmatprep.subr.mxu0 0.0
  %4606 = vmatpush2.msra.mxu0 %v4400
  %4607 = vmatprep.subr.mxu0 0.0
  %4608 = vmatpush2.msra.mxu0 %v4399
  %4609 = vmatprep.subr.mxu0 0.0
  %4610 = vmatpush2.msra.mxu0 %v4398
  %4611 = vmatprep.subr.mxu0 0.0
  %4612 = vmatpush2.msra.mxu0 %v4397
  %4613 = vmatprep.subr.mxu0 0.0
  %4614 = vmatpush2.msra.mxu0 %v4396
  %4615 = vmatprep.mubr.f32.mxu0 %v4186
  %4616 = vmatmul.mubr.f32.gmra.mxu0 %v4184
  %v4617 = vpop.f32.mrf.mxu0
  %v4618 = vadd.f32 %v4543, %v4617
  %v4619 = vpop.f32.mrf.mxu0
  %4620 = vmatprep.mubr.f32.mxu0 %v4192
  %4621 = vmatmul.mubr.f32.gmra.mxu0 %v4190
  %v4622 = vpop.f32.mrf.mxu0
  %v4623 = vadd.f32 %v4548, %v4622
  %v4624 = vpop.f32.mrf.mxu0
  %4625 = vdwg.mxu0
  %4626 = vmatprep.subr.mxu0 0.0
  %4627 = vmatpush1.msra.mxu0 %v4427
  %4628 = vmatprep.subr.mxu0 0.0
  %4629 = vmatpush1.msra.mxu0 %v4426
  %4630 = vmatprep.subr.mxu0 0.0
  %4631 = vmatpush1.msra.mxu0 %v4425
  %4632 = vmatprep.subr.mxu0 0.0
  %4633 = vmatpush1.msra.mxu0 %v4424
  %4634 = vmatprep.subr.mxu0 0.0
  %4635 = vmatpush1.msra.mxu0 %v4423
  %4636 = vmatprep.subr.mxu0 0.0
  %4637 = vmatpush1.msra.mxu0 %v4422
  %4638 = vmatprep.subr.mxu0 0.0
  %4639 = vmatpush1.msra.mxu0 %v4421
  %4640 = vmatprep.subr.mxu0 0.0
  %4641 = vmatpush1.msra.mxu0 %v4420
  %4642 = vmatprep.subr.mxu0 0.0
  %4643 = vmatpush1.msra.mxu0 %v4419
  %4644 = vmatprep.subr.mxu0 0.0
  %4645 = vmatpush1.msra.mxu0 %v4418
  %4646 = vmatprep.subr.mxu0 0.0
  %4647 = vmatpush1.msra.mxu0 %v4417
  %4648 = vmatprep.subr.mxu0 0.0
  %4649 = vmatpush1.msra.mxu0 %v4416
  %4650 = vmatprep.subr.mxu0 0.0
  %4651 = vmatpush1.msra.mxu0 %v4415
  %4652 = vmatprep.subr.mxu0 0.0
  %4653 = vmatpush1.msra.mxu0 %v4414
  %4654 = vmatprep.subr.mxu0 0.0
  %4655 = vmatpush1.msra.mxu0 %v4413
  %4656 = vmatprep.subr.mxu0 0.0
  %4657 = vmatpush1.msra.mxu0 %v4412
  %4658 = vmatprep.subr.mxu0 0.0
  %4659 = vmatpush2.msra.mxu0 %v4443
  %4660 = vmatprep.subr.mxu0 0.0
  %4661 = vmatpush2.msra.mxu0 %v4442
  %4662 = vmatprep.subr.mxu0 0.0
  %4663 = vmatpush2.msra.mxu0 %v4441
  %4664 = vmatprep.subr.mxu0 0.0
  %4665 = vmatpush2.msra.mxu0 %v4440
  %4666 = vmatprep.subr.mxu0 0.0
  %4667 = vmatpush2.msra.mxu0 %v4439
  %4668 = vmatprep.subr.mxu0 0.0
  %4669 = vmatpush2.msra.mxu0 %v4438
  %4670 = vmatprep.subr.mxu0 0.0
  %4671 = vmatpush2.msra.mxu0 %v4437
  %4672 = vmatprep.subr.mxu0 0.0
  %4673 = vmatpush2.msra.mxu0 %v4436
  %4674 = vmatprep.subr.mxu0 0.0
  %4675 = vmatpush2.msra.mxu0 %v4435
  %4676 = vmatprep.subr.mxu0 0.0
  %4677 = vmatpush2.msra.mxu0 %v4434
  %4678 = vmatprep.subr.mxu0 0.0
  %4679 = vmatpush2.msra.mxu0 %v4433
  %4680 = vmatprep.subr.mxu0 0.0
  %4681 = vmatpush2.msra.mxu0 %v4432
  %4682 = vmatprep.subr.mxu0 0.0
  %4683 = vmatpush2.msra.mxu0 %v4431
  %4684 = vmatprep.subr.mxu0 0.0
  %4685 = vmatpush2.msra.mxu0 %v4430
  %4686 = vmatprep.subr.mxu0 0.0
  %4687 = vmatpush2.msra.mxu0 %v4429
  %4688 = vmatprep.subr.mxu0 0.0
  %4689 = vmatpush2.msra.mxu0 %v4428
  %4690 = vmatprep.mubr.f32.mxu0 %v4263
  %4691 = vmatmul.mubr.f32.gmra.mxu0 %v4261
  %v4692 = vpop.f32.mrf.mxu0
  %v4693 = vadd.f32 %v4618, %v4692
  %v4694 = vpop.f32.mrf.mxu0
  %4695 = vmatprep.mubr.f32.mxu0 %v4269
  %4696 = vmatmul.mubr.f32.gmra.mxu0 %v4267
  %v4697 = vpop.f32.mrf.mxu0
  %v4698 = vadd.f32 %v4623, %v4697
  %v4699 = vpop.f32.mrf.mxu0
  %4700 = vdwg.mxu0
  %4701 = vmatprep.subr.mxu0 0.0
  %4702 = vmatpush1.msra.mxu0 %v4459
  %4703 = vmatprep.subr.mxu0 0.0
  %4704 = vmatpush1.msra.mxu0 %v4458
  %4705 = vmatprep.subr.mxu0 0.0
  %4706 = vmatpush1.msra.mxu0 %v4457
  %4707 = vmatprep.subr.mxu0 0.0
  %4708 = vmatpush1.msra.mxu0 %v4456
  %4709 = vmatprep.subr.mxu0 0.0
  %4710 = vmatpush1.msra.mxu0 %v4455
  %4711 = vmatprep.subr.mxu0 0.0
  %4712 = vmatpush1.msra.mxu0 %v4454
  %4713 = vmatprep.subr.mxu0 0.0
  %4714 = vmatpush1.msra.mxu0 %v4453
  %4715 = vmatprep.subr.mxu0 0.0
  %4716 = vmatpush1.msra.mxu0 %v4452
  %4717 = vmatprep.subr.mxu0 0.0
  %4718 = vmatpush1.msra.mxu0 %v4451
  %4719 = vmatprep.subr.mxu0 0.0
  %4720 = vmatpush1.msra.mxu0 %v4450
  %4721 = vmatprep.subr.mxu0 0.0
  %4722 = vmatpush1.msra.mxu0 %v4449
  %4723 = vmatprep.subr.mxu0 0.0
  %4724 = vmatpush1.msra.mxu0 %v4448
  %4725 = vmatprep.subr.mxu0 0.0
  %4726 = vmatpush1.msra.mxu0 %v4447
  %4727 = vmatprep.subr.mxu0 0.0
  %4728 = vmatpush1.msra.mxu0 %v4446
  %4729 = vmatprep.subr.mxu0 0.0
  %4730 = vmatpush1.msra.mxu0 %v4445
  %4731 = vmatprep.subr.mxu0 0.0
  %4732 = vmatpush1.msra.mxu0 %v4444
  %4733 = vmatprep.subr.mxu0 0.0
  %4734 = vmatpush2.msra.mxu0 %v4475
  %4735 = vmatprep.subr.mxu0 0.0
  %4736 = vmatpush2.msra.mxu0 %v4474
  %4737 = vmatprep.subr.mxu0 0.0
  %4738 = vmatpush2.msra.mxu0 %v4473
  %4739 = vmatprep.subr.mxu0 0.0
  %4740 = vmatpush2.msra.mxu0 %v4472
  %4741 = vmatprep.subr.mxu0 0.0
  %4742 = vmatpush2.msra.mxu0 %v4471
  %4743 = vmatprep.subr.mxu0 0.0
  %4744 = vmatpush2.msra.mxu0 %v4470
  %4745 = vmatprep.subr.mxu0 0.0
  %4746 = vmatpush2.msra.mxu0 %v4469
  %4747 = vmatprep.subr.mxu0 0.0
  %4748 = vmatpush2.msra.mxu0 %v4468
  %4749 = vmatprep.subr.mxu0 0.0
  %4750 = vmatpush2.msra.mxu0 %v4467
  %4751 = vmatprep.subr.mxu0 0.0
  %4752 = vmatpush2.msra.mxu0 %v4466
  %4753 = vmatprep.subr.mxu0 0.0
  %4754 = vmatpush2.msra.mxu0 %v4465
  %4755 = vmatprep.subr.mxu0 0.0
  %4756 = vmatpush2.msra.mxu0 %v4464
  %4757 = vmatprep.subr.mxu0 0.0
  %4758 = vmatpush2.msra.mxu0 %v4463
  %4759 = vmatprep.subr.mxu0 0.0
  %4760 = vmatpush2.msra.mxu0 %v4462
  %4761 = vmatprep.subr.mxu0 0.0
  %4762 = vmatpush2.msra.mxu0 %v4461
  %4763 = vmatprep.subr.mxu0 0.0
  %4764 = vmatpush2.msra.mxu0 %v4460
  %4765 = vmatprep.mubr.f32.mxu0 %v4340
  %4766 = vmatmul.mubr.f32.gmra.mxu0 %v4338
  %v4767 = vpop.f32.mrf.mxu0
  %v4768 = vadd.f32 %v4693, %v4767
  %v4769 = vpop.f32.mrf.mxu0
  %4770 = vmatprep.mubr.f32.mxu0 %v4346
  %4771 = vmatmul.mubr.f32.gmra.mxu0 %v4344
  %v4772 = vpop.f32.mrf.mxu0
  %v4773 = vadd.f32 %v4698, %v4772
  %v4774 = vpop.f32.mrf.mxu0
  %4775 = vdwg.mxu0
  %4776 = vst [vmem:[%s11] sm:$0xff] %v4768
  %4777 = vst [vmem:[%s11 + $0x8] sm:$0xff] %v4773
  %v4778 = vld [vmem:[%s5] sm:$0xf]
  %vm4779 = vcmask 64512
  %v4781 = vsel %vm4779, %v4778, 0
  %4783 = vmatprep.subr.mxu0 0.0
  %4784 = vmatpush1.msra.mxu0 0.0
  %4785 = vmatprep.subr.mxu0 0.0
  %4786 = vmatpush1.msra.mxu0 0.0
  %4787 = vmatprep.subr.mxu0 0.0
  %4788 = vmatpush1.msra.mxu0 0.0
  %4789 = vmatprep.subr.mxu0 0.0
  %4790 = vmatpush1.msra.mxu0 0.0
  %4791 = vmatprep.subr.mxu0 0.0
  %4792 = vmatpush1.msra.mxu0 0.0
  %4793 = vmatprep.subr.mxu0 0.0
  %4794 = vmatpush1.msra.mxu0 0.0
  %4795 = vmatprep.subr.mxu0 0.0
  %4796 = vmatpush1.msra.mxu0 0.0
  %4797 = vmatprep.subr.mxu0 0.0
  %4798 = vmatpush1.msra.mxu0 0.0
  %4799 = vmatprep.subr.mxu0 0.0
  %4800 = vmatpush1.msra.mxu0 0.0
  %4801 = vmatprep.subr.mxu0 0.0
  %4802 = vmatpush1.msra.mxu0 0.0
  %4803 = vmatprep.subr.mxu0 0.0
  %4804 = vmatpush1.msra.mxu0 0.0
  %4805 = vmatprep.subr.mxu0 0.0
  %4806 = vmatpush1.msra.mxu0 0.0
  %4807 = vmatprep.subr.mxu0 0.0
  %4808 = vmatpush1.msra.mxu0 0.0
  %4809 = vmatprep.subr.mxu0 0.0
  %4810 = vmatpush1.msra.mxu0 0.0
  %4811 = vmatprep.subr.mxu0 0.0
  %4812 = vmatpush1.msra.mxu0 0.0
  %4813 = vmatprep.subr.mxu0 0.0
  %4814 = vmatpush1.msra.mxu0 %v4768
  %4815 = vmatprep.subr.mxu0 0.0
  %4816 = vmatpush2.msra.mxu0 0.0
  %4817 = vmatprep.subr.mxu0 0.0
  %4818 = vmatpush2.msra.mxu0 0.0
  %4819 = vmatprep.subr.mxu0 0.0
  %4820 = vmatpush2.msra.mxu0 0.0
  %4821 = vmatprep.subr.mxu0 0.0
  %4822 = vmatpush2.msra.mxu0 0.0
  %4823 = vmatprep.subr.mxu0 0.0
  %4824 = vmatpush2.msra.mxu0 0.0
  %4825 = vmatprep.subr.mxu0 0.0
  %4826 = vmatpush2.msra.mxu0 0.0
  %4827 = vmatprep.subr.mxu0 0.0
  %4828 = vmatpush2.msra.mxu0 0.0
  %4829 = vmatprep.subr.mxu0 0.0
  %4830 = vmatpush2.msra.mxu0 0.0
  %4831 = vmatprep.subr.mxu0 0.0
  %4832 = vmatpush2.msra.mxu0 0.0
  %4833 = vmatprep.subr.mxu0 0.0
  %4834 = vmatpush2.msra.mxu0 0.0
  %4835 = vmatprep.subr.mxu0 0.0
  %4836 = vmatpush2.msra.mxu0 0.0
  %4837 = vmatprep.subr.mxu0 0.0
  %4838 = vmatpush2.msra.mxu0 0.0
  %4839 = vmatprep.subr.mxu0 0.0
  %4840 = vmatpush2.msra.mxu0 0.0
  %4841 = vmatprep.subr.mxu0 0.0
  %4842 = vmatpush2.msra.mxu0 0.0
  %4843 = vmatprep.subr.mxu0 0.0
  %4844 = vmatpush2.msra.mxu0 0.0
  %4845 = vmatprep.subr.mxu0 0.0
  %4846 = vmatpush2.msra.mxu0 0.0
  %4847 = vmatprep.mubr.f32.mxu0 0.0
  %4848 = vmatmul.mubr.f32.gmra.mxu0 %v4781
  %v4849 = vpop.f32.mrf.mxu0
  %v4850 = vadd.f32 0.0, %v4849
  %v4851 = vpop.f32.mrf.mxu0
  %4852 = vdwg.mxu0
  %v4853 = vld [vmem:[%s6] sm:$0xff]
  %v4854 = vld [vmem:[%s6 + $0x8] sm:$0xff]
  %v4855 = vld [vmem:[%s6 + $0x10] sm:$0xff]
  %v4856 = vld [vmem:[%s6 + $0x18] sm:$0xff]
  %v4857 = vld [vmem:[%s6 + $0x20] sm:$0xff]
  %v4858 = vld [vmem:[%s6 + $0x28] sm:$0xff]
  %v4859 = vld [vmem:[%s6 + $0x30] sm:$0xff]
  %v4860 = vld [vmem:[%s6 + $0x38] sm:$0xff]
  %v4861 = vld [vmem:[%s6 + $0x40] sm:$0xff]
  %v4862 = vld [vmem:[%s6 + $0x48] sm:$0xff]
  %v4863 = vld [vmem:[%s6 + $0x50] sm:$0xff]
  %v4864 = vld [vmem:[%s6 + $0x58] sm:$0xff]
  %v4865 = vld [vmem:[%s6 + $0x60] sm:$0xff]
  %v4866 = vld [vmem:[%s6 + $0x68] sm:$0xff]
  %v4867 = vld [vmem:[%s6 + $0x70] sm:$0xff]
  %v4868 = vld [vmem:[%s6 + $0x78] sm:$0xff]
  %v4869 = vld [vmem:[%s7] sm:$0xff]
  %v4870 = vld [vmem:[%s7 + $0x8] sm:$0xff]
  %v4871 = vld [vmem:[%s7 + $0x10] sm:$0xff]
  %v4872 = vld [vmem:[%s7 + $0x18] sm:$0xff]
  %v4873 = vmul.f32 %v4850, %v4850
  %4874 = vmatprep.subr.mxu0 0.0
  %4875 = vmatpush1.msra.mxu0 %v4868
  %4876 = vmatprep.subr.mxu0 0.0
  %4877 = vmatpush1.msra.mxu0 %v4867
  %4878 = vmatprep.subr.mxu0 0.0
  %4879 = vmatpush1.msra.mxu0 %v4866
  %4880 = vmatprep.subr.mxu0 0.0
  %4881 = vmatpush1.msra.mxu0 %v4865
  %4882 = vmatprep.subr.mxu0 0.0
  %4883 = vmatpush1.msra.mxu0 %v4864
  %4884 = vmatprep.subr.mxu0 0.0
  %4885 = vmatpush1.msra.mxu0 %v4863
  %4886 = vmatprep.subr.mxu0 0.0
  %4887 = vmatpush1.msra.mxu0 %v4862
  %4888 = vmatprep.subr.mxu0 0.0
  %4889 = vmatpush1.msra.mxu0 %v4861
  %4890 = vmatprep.subr.mxu0 0.0
  %4891 = vmatpush1.msra.mxu0 %v4860
  %4892 = vmatprep.subr.mxu0 0.0
  %4893 = vmatpush1.msra.mxu0 %v4859
  %4894 = vmatprep.subr.mxu0 0.0
  %4895 = vmatpush1.msra.mxu0 %v4858
  %4896 = vmatprep.subr.mxu0 0.0
  %4897 = vmatpush1.msra.mxu0 %v4857
  %4898 = vmatprep.subr.mxu0 0.0
  %4899 = vmatpush1.msra.mxu0 %v4856
  %4900 = vmatprep.subr.mxu0 0.0
  %4901 = vmatpush1.msra.mxu0 %v4855
  %4902 = vmatprep.subr.mxu0 0.0
  %4903 = vmatpush1.msra.mxu0 %v4854
  %4904 = vmatprep.subr.mxu0 0.0
  %4905 = vmatpush1.msra.mxu0 %v4853
  %4906 = vmatprep.subr.mxu0 0.0
  %4907 = vmatpush2.msra.mxu0 0.0
  %4908 = vmatprep.subr.mxu0 0.0
  %4909 = vmatpush2.msra.mxu0 0.0
  %4910 = vmatprep.subr.mxu0 0.0
  %4911 = vmatpush2.msra.mxu0 0.0
  %4912 = vmatprep.subr.mxu0 0.0
  %4913 = vmatpush2.msra.mxu0 0.0
  %4914 = vmatprep.subr.mxu0 0.0
  %4915 = vmatpush2.msra.mxu0 0.0
  %4916 = vmatprep.subr.mxu0 0.0
  %4917 = vmatpush2.msra.mxu0 0.0
  %4918 = vmatprep.subr.mxu0 0.0
  %4919 = vmatpush2.msra.mxu0 0.0
  %4920 = vmatprep.subr.mxu0 0.0
  %4921 = vmatpush2.msra.mxu0 0.0
  %4922 = vmatprep.subr.mxu0 0.0
  %4923 = vmatpush2.msra.mxu0 0.0
  %4924 = vmatprep.subr.mxu0 0.0
  %4925 = vmatpush2.msra.mxu0 0.0
  %4926 = vmatprep.subr.mxu0 0.0
  %4927 = vmatpush2.msra.mxu0 0.0
  %4928 = vmatprep.subr.mxu0 0.0
  %4929 = vmatpush2.msra.mxu0 0.0
  %4930 = vmatprep.subr.mxu0 0.0
  %4931 = vmatpush2.msra.mxu0 0.0
  %4932 = vmatprep.subr.mxu0 0.0
  %4933 = vmatpush2.msra.mxu0 0.0
  %4934 = vmatprep.subr.mxu0 0.0
  %4935 = vmatpush2.msra.mxu0 0.0
  %4936 = vmatprep.subr.mxu0 0.0
  %4937 = vmatpush2.msra.mxu0 0.0
  %4938 = vmatprep.mubr.f32.mxu0 0.0
  %4939 = vmatmul.mubr.f32.gmra.mxu0 %v4873
  %v4940 = vpop.f32.mrf.mxu0
  %v4941 = vadd.f32 0.0, %v4940
  %v4942 = vpop.f32.mrf.mxu0
  %4943 = vdwg.mxu0
  %v4944 = vmax.f32 %v4941, 1e-24
  %v4945 = vrsqrt.pop %v4944
  %vm4946 = vcmask 261120
  %v4948 = vsel %vm4946, %v4945, 0
  %4950 = vmatprep.subr.mxu0 0.0
  %4951 = vmatpush1.msra.mxu0 0.0
  %4952 = vmatprep.subr.mxu0 0.0
  %4953 = vmatpush1.msra.mxu0 0.0
  %4954 = vmatprep.subr.mxu0 0.0
  %4955 = vmatpush1.msra.mxu0 0.0
  %4956 = vmatprep.subr.mxu0 0.0
  %4957 = vmatpush1.msra.mxu0 0.0
  %4958 = vmatprep.subr.mxu0 0.0
  %4959 = vmatpush1.msra.mxu0 0.0
  %4960 = vmatprep.subr.mxu0 0.0
  %4961 = vmatpush1.msra.mxu0 0.0
  %4962 = vmatprep.subr.mxu0 0.0
  %4963 = vmatpush1.msra.mxu0 0.0
  %4964 = vmatprep.subr.mxu0 0.0
  %4965 = vmatpush1.msra.mxu0 0.0
  %4966 = vmatprep.subr.mxu0 0.0
  %4967 = vmatpush1.msra.mxu0 0.0
  %4968 = vmatprep.subr.mxu0 0.0
  %4969 = vmatpush1.msra.mxu0 0.0
  %4970 = vmatprep.subr.mxu0 0.0
  %4971 = vmatpush1.msra.mxu0 0.0
  %4972 = vmatprep.subr.mxu0 0.0
  %4973 = vmatpush1.msra.mxu0 0.0
  %4974 = vmatprep.subr.mxu0 0.0
  %4975 = vmatpush1.msra.mxu0 %v4872
  %4976 = vmatprep.subr.mxu0 0.0
  %4977 = vmatpush1.msra.mxu0 %v4871
  %4978 = vmatprep.subr.mxu0 0.0
  %4979 = vmatpush1.msra.mxu0 %v4870
  %4980 = vmatprep.subr.mxu0 0.0
  %4981 = vmatpush1.msra.mxu0 %v4869
  %4982 = vmatprep.subr.mxu0 0.0
  %4983 = vmatpush2.msra.mxu0 0.0
  %4984 = vmatprep.subr.mxu0 0.0
  %4985 = vmatpush2.msra.mxu0 0.0
  %4986 = vmatprep.subr.mxu0 0.0
  %4987 = vmatpush2.msra.mxu0 0.0
  %4988 = vmatprep.subr.mxu0 0.0
  %4989 = vmatpush2.msra.mxu0 0.0
  %4990 = vmatprep.subr.mxu0 0.0
  %4991 = vmatpush2.msra.mxu0 0.0
  %4992 = vmatprep.subr.mxu0 0.0
  %4993 = vmatpush2.msra.mxu0 0.0
  %4994 = vmatprep.subr.mxu0 0.0
  %4995 = vmatpush2.msra.mxu0 0.0
  %4996 = vmatprep.subr.mxu0 0.0
  %4997 = vmatpush2.msra.mxu0 0.0
  %4998 = vmatprep.subr.mxu0 0.0
  %4999 = vmatpush2.msra.mxu0 0.0
  %5000 = vmatprep.subr.mxu0 0.0
  %5001 = vmatpush2.msra.mxu0 0.0
  %5002 = vmatprep.subr.mxu0 0.0
  %5003 = vmatpush2.msra.mxu0 0.0
  %5004 = vmatprep.subr.mxu0 0.0
  %5005 = vmatpush2.msra.mxu0 0.0
  %5006 = vmatprep.subr.mxu0 0.0
  %5007 = vmatpush2.msra.mxu0 0.0
  %5008 = vmatprep.subr.mxu0 0.0
  %5009 = vmatpush2.msra.mxu0 0.0
  %5010 = vmatprep.subr.mxu0 0.0
  %5011 = vmatpush2.msra.mxu0 0.0
  %5012 = vmatprep.subr.mxu0 0.0
  %5013 = vmatpush2.msra.mxu0 0.0
  %5014 = vmatprep.mubr.f32.mxu0 0.0
  %5015 = vmatmul.mubr.f32.gmra.mxu0 %v4948
  %v5016 = vpop.f32.mrf.mxu0
  %v5017 = vadd.f32 0.0, %v5016
  %v5018 = vpop.f32.mrf.mxu0
  %5019 = vdwg.mxu0
  %v5020 = vmul.f32 %v4850, %v5017
  %v5021 = vmul.f32 %v4773, %v4773
  %5022 = vmatprep.subr.mxu0 0.0
  %5023 = vmatpush1.msra.mxu0 %v4868
  %5024 = vmatprep.subr.mxu0 0.0
  %5025 = vmatpush1.msra.mxu0 %v4867
  %5026 = vmatprep.subr.mxu0 0.0
  %5027 = vmatpush1.msra.mxu0 %v4866
  %5028 = vmatprep.subr.mxu0 0.0
  %5029 = vmatpush1.msra.mxu0 %v4865
  %5030 = vmatprep.subr.mxu0 0.0
  %5031 = vmatpush1.msra.mxu0 %v4864
  %5032 = vmatprep.subr.mxu0 0.0
  %5033 = vmatpush1.msra.mxu0 %v4863
  %5034 = vmatprep.subr.mxu0 0.0
  %5035 = vmatpush1.msra.mxu0 %v4862
  %5036 = vmatprep.subr.mxu0 0.0
  %5037 = vmatpush1.msra.mxu0 %v4861
  %5038 = vmatprep.subr.mxu0 0.0
  %5039 = vmatpush1.msra.mxu0 %v4860
  %5040 = vmatprep.subr.mxu0 0.0
  %5041 = vmatpush1.msra.mxu0 %v4859
  %5042 = vmatprep.subr.mxu0 0.0
  %5043 = vmatpush1.msra.mxu0 %v4858
  %5044 = vmatprep.subr.mxu0 0.0
  %5045 = vmatpush1.msra.mxu0 %v4857
  %5046 = vmatprep.subr.mxu0 0.0
  %5047 = vmatpush1.msra.mxu0 %v4856
  %5048 = vmatprep.subr.mxu0 0.0
  %5049 = vmatpush1.msra.mxu0 %v4855
  %5050 = vmatprep.subr.mxu0 0.0
  %5051 = vmatpush1.msra.mxu0 %v4854
  %5052 = vmatprep.subr.mxu0 0.0
  %5053 = vmatpush1.msra.mxu0 %v4853
  %5054 = vmatprep.subr.mxu0 0.0
  %5055 = vmatpush2.msra.mxu0 0.0
  %5056 = vmatprep.subr.mxu0 0.0
  %5057 = vmatpush2.msra.mxu0 0.0
  %5058 = vmatprep.subr.mxu0 0.0
  %5059 = vmatpush2.msra.mxu0 0.0
  %5060 = vmatprep.subr.mxu0 0.0
  %5061 = vmatpush2.msra.mxu0 0.0
  %5062 = vmatprep.subr.mxu0 0.0
  %5063 = vmatpush2.msra.mxu0 0.0
  %5064 = vmatprep.subr.mxu0 0.0
  %5065 = vmatpush2.msra.mxu0 0.0
  %5066 = vmatprep.subr.mxu0 0.0
  %5067 = vmatpush2.msra.mxu0 0.0
  %5068 = vmatprep.subr.mxu0 0.0
  %5069 = vmatpush2.msra.mxu0 0.0
  %5070 = vmatprep.subr.mxu0 0.0
  %5071 = vmatpush2.msra.mxu0 0.0
  %5072 = vmatprep.subr.mxu0 0.0
  %5073 = vmatpush2.msra.mxu0 0.0
  %5074 = vmatprep.subr.mxu0 0.0
  %5075 = vmatpush2.msra.mxu0 0.0
  %5076 = vmatprep.subr.mxu0 0.0
  %5077 = vmatpush2.msra.mxu0 0.0
  %5078 = vmatprep.subr.mxu0 0.0
  %5079 = vmatpush2.msra.mxu0 0.0
  %5080 = vmatprep.subr.mxu0 0.0
  %5081 = vmatpush2.msra.mxu0 0.0
  %5082 = vmatprep.subr.mxu0 0.0
  %5083 = vmatpush2.msra.mxu0 0.0
  %5084 = vmatprep.subr.mxu0 0.0
  %5085 = vmatpush2.msra.mxu0 0.0
  %5086 = vmatprep.mubr.f32.mxu0 0.0
  %5087 = vmatmul.mubr.f32.gmra.mxu0 %v5021
  %v5088 = vpop.f32.mrf.mxu0
  %v5089 = vadd.f32 0.0, %v5088
  %v5090 = vpop.f32.mrf.mxu0
  %5091 = vdwg.mxu0
  %v5092 = vmax.f32 %v5089, 1e-24
  %v5093 = vrsqrt.pop %v5092
  %v5095 = vsel %vm4946, %v5093, 0
  %5097 = vmatprep.subr.mxu0 0.0
  %5098 = vmatpush1.msra.mxu0 0.0
  %5099 = vmatprep.subr.mxu0 0.0
  %5100 = vmatpush1.msra.mxu0 0.0
  %5101 = vmatprep.subr.mxu0 0.0
  %5102 = vmatpush1.msra.mxu0 0.0
  %5103 = vmatprep.subr.mxu0 0.0
  %5104 = vmatpush1.msra.mxu0 0.0
  %5105 = vmatprep.subr.mxu0 0.0
  %5106 = vmatpush1.msra.mxu0 0.0
  %5107 = vmatprep.subr.mxu0 0.0
  %5108 = vmatpush1.msra.mxu0 0.0
  %5109 = vmatprep.subr.mxu0 0.0
  %5110 = vmatpush1.msra.mxu0 0.0
  %5111 = vmatprep.subr.mxu0 0.0
  %5112 = vmatpush1.msra.mxu0 0.0
  %5113 = vmatprep.subr.mxu0 0.0
  %5114 = vmatpush1.msra.mxu0 0.0
  %5115 = vmatprep.subr.mxu0 0.0
  %5116 = vmatpush1.msra.mxu0 0.0
  %5117 = vmatprep.subr.mxu0 0.0
  %5118 = vmatpush1.msra.mxu0 0.0
  %5119 = vmatprep.subr.mxu0 0.0
  %5120 = vmatpush1.msra.mxu0 0.0
  %5121 = vmatprep.subr.mxu0 0.0
  %5122 = vmatpush1.msra.mxu0 %v4872
  %5123 = vmatprep.subr.mxu0 0.0
  %5124 = vmatpush1.msra.mxu0 %v4871
  %5125 = vmatprep.subr.mxu0 0.0
  %5126 = vmatpush1.msra.mxu0 %v4870
  %5127 = vmatprep.subr.mxu0 0.0
  %5128 = vmatpush1.msra.mxu0 %v4869
  %5129 = vmatprep.subr.mxu0 0.0
  %5130 = vmatpush2.msra.mxu0 0.0
  %5131 = vmatprep.subr.mxu0 0.0
  %5132 = vmatpush2.msra.mxu0 0.0
  %5133 = vmatprep.subr.mxu0 0.0
  %5134 = vmatpush2.msra.mxu0 0.0
  %5135 = vmatprep.subr.mxu0 0.0
  %5136 = vmatpush2.msra.mxu0 0.0
  %5137 = vmatprep.subr.mxu0 0.0
  %5138 = vmatpush2.msra.mxu0 0.0
  %5139 = vmatprep.subr.mxu0 0.0
  %5140 = vmatpush2.msra.mxu0 0.0
  %5141 = vmatprep.subr.mxu0 0.0
  %5142 = vmatpush2.msra.mxu0 0.0
  %5143 = vmatprep.subr.mxu0 0.0
  %5144 = vmatpush2.msra.mxu0 0.0
  %5145 = vmatprep.subr.mxu0 0.0
  %5146 = vmatpush2.msra.mxu0 0.0
  %5147 = vmatprep.subr.mxu0 0.0
  %5148 = vmatpush2.msra.mxu0 0.0
  %5149 = vmatprep.subr.mxu0 0.0
  %5150 = vmatpush2.msra.mxu0 0.0
  %5151 = vmatprep.subr.mxu0 0.0
  %5152 = vmatpush2.msra.mxu0 0.0
  %5153 = vmatprep.subr.mxu0 0.0
  %5154 = vmatpush2.msra.mxu0 0.0
  %5155 = vmatprep.subr.mxu0 0.0
  %5156 = vmatpush2.msra.mxu0 0.0
  %5157 = vmatprep.subr.mxu0 0.0
  %5158 = vmatpush2.msra.mxu0 0.0
  %5159 = vmatprep.subr.mxu0 0.0
  %5160 = vmatpush2.msra.mxu0 0.0
  %5161 = vmatprep.mubr.f32.mxu0 0.0
  %5162 = vmatmul.mubr.f32.gmra.mxu0 %v5095
  %v5163 = vpop.f32.mrf.mxu0
  %v5164 = vadd.f32 0.0, %v5163
  %v5165 = vpop.f32.mrf.mxu0
  %5166 = vdwg.mxu0
  %v5167 = vmul.f32 %v4773, %v5164
  %v5168 = vld [vmem:[%s8] sm:$0xff]
  %v5169 = vld [vmem:[%s8 + $0x8] sm:$0xff]
  %v5170 = vld [vmem:[%s8 + $0x10] sm:$0xff]
  %v5171 = vld [vmem:[%s8 + $0x18] sm:$0xff]
  %v5172 = vld [vmem:[%s8 + $0x20] sm:$0xff]
  %v5173 = vld [vmem:[%s8 + $0x28] sm:$0xff]
  %v5174 = vld [vmem:[%s8 + $0x30] sm:$0xff]
  %v5175 = vld [vmem:[%s8 + $0x38] sm:$0xff]
  %v5176 = vld [vmem:[%s8 + $0x40] sm:$0xff]
  %v5177 = vld [vmem:[%s8 + $0x48] sm:$0xff]
  %v5178 = vld [vmem:[%s8 + $0x50] sm:$0xff]
  %v5179 = vld [vmem:[%s8 + $0x58] sm:$0xff]
  %v5180 = vld [vmem:[%s8 + $0x60] sm:$0xff]
  %v5181 = vld [vmem:[%s8 + $0x68] sm:$0xff]
  %v5182 = vld [vmem:[%s8 + $0x70] sm:$0xff]
  %v5183 = vld [vmem:[%s8 + $0x78] sm:$0xff]
  %vm5184 = vcmask 31744
  %v5186 = vsel %vm5184, %v5168, 0
  %v5189 = vsel %vm5184, %v5169, 0
  %v5192 = vsel %vm5184, %v5170, 0
  %v5195 = vsel %vm5184, %v5171, 0
  %v5198 = vsel %vm5184, %v5172, 0
  %v5201 = vsel %vm5184, %v5173, 0
  %v5204 = vsel %vm5184, %v5174, 0
  %v5207 = vsel %vm5184, %v5175, 0
  %v5210 = vsel %vm5184, %v5176, 0
  %v5213 = vsel %vm5184, %v5177, 0
  %v5216 = vsel %vm5184, %v5178, 0
  %v5219 = vsel %vm5184, %v5179, 0
  %v5222 = vsel %vm5184, %v5180, 0
  %v5225 = vsel %vm5184, %v5181, 0
  %v5228 = vsel %vm5184, %v5182, 0
  %v5231 = vsel %vm5184, %v5183, 0
  %vm5233 = vcmask 1043456
  %v5235 = vsel %vm5233, %v5020, 0
  %5237 = vmatprep.subr.mxu0 0.0
  %5238 = vmatpush1.msra.mxu0 0.0
  %5239 = vmatprep.subr.mxu0 0.0
  %5240 = vmatpush1.msra.mxu0 0.0
  %5241 = vmatprep.subr.mxu0 0.0
  %5242 = vmatpush1.msra.mxu0 0.0
  %5243 = vmatprep.subr.mxu0 0.0
  %5244 = vmatpush1.msra.mxu0 0.0
  %5245 = vmatprep.subr.mxu0 0.0
  %5246 = vmatpush1.msra.mxu0 0.0
  %5247 = vmatprep.subr.mxu0 0.0
  %5248 = vmatpush1.msra.mxu0 0.0
  %5249 = vmatprep.subr.mxu0 0.0
  %5250 = vmatpush1.msra.mxu0 0.0
  %5251 = vmatprep.subr.mxu0 0.0
  %5252 = vmatpush1.msra.mxu0 0.0
  %5253 = vmatprep.subr.mxu0 0.0
  %5254 = vmatpush1.msra.mxu0 0.0
  %5255 = vmatprep.subr.mxu0 0.0
  %5256 = vmatpush1.msra.mxu0 0.0
  %5257 = vmatprep.subr.mxu0 0.0
  %5258 = vmatpush1.msra.mxu0 0.0
  %5259 = vmatprep.subr.mxu0 0.0
  %5260 = vmatpush1.msra.mxu0 0.0
  %5261 = vmatprep.subr.mxu0 0.0
  %5262 = vmatpush1.msra.mxu0 0.0
  %5263 = vmatprep.subr.mxu0 0.0
  %5264 = vmatpush1.msra.mxu0 0.0
  %5265 = vmatprep.subr.mxu0 0.0
  %5266 = vmatpush1.msra.mxu0 0.0
  %5267 = vmatprep.subr.mxu0 0.0
  %5268 = vmatpush1.msra.mxu0 %v5235
  %5269 = vmatprep.subr.mxu0 0.0
  %5270 = vmatpush2.msra.mxu0 0.0
  %5271 = vmatprep.subr.mxu0 0.0
  %5272 = vmatpush2.msra.mxu0 0.0
  %5273 = vmatprep.subr.mxu0 0.0
  %5274 = vmatpush2.msra.mxu0 0.0
  %5275 = vmatprep.subr.mxu0 0.0
  %5276 = vmatpush2.msra.mxu0 0.0
  %5277 = vmatprep.subr.mxu0 0.0
  %5278 = vmatpush2.msra.mxu0 0.0
  %5279 = vmatprep.subr.mxu0 0.0
  %5280 = vmatpush2.msra.mxu0 0.0
  %5281 = vmatprep.subr.mxu0 0.0
  %5282 = vmatpush2.msra.mxu0 0.0
  %5283 = vmatprep.subr.mxu0 0.0
  %5284 = vmatpush2.msra.mxu0 0.0
  %5285 = vmatprep.subr.mxu0 0.0
  %5286 = vmatpush2.msra.mxu0 0.0
  %5287 = vmatprep.subr.mxu0 0.0
  %5288 = vmatpush2.msra.mxu0 0.0
  %5289 = vmatprep.subr.mxu0 0.0
  %5290 = vmatpush2.msra.mxu0 0.0
  %5291 = vmatprep.subr.mxu0 0.0
  %5292 = vmatpush2.msra.mxu0 0.0
  %5293 = vmatprep.subr.mxu0 0.0
  %5294 = vmatpush2.msra.mxu0 0.0
  %5295 = vmatprep.subr.mxu0 0.0
  %5296 = vmatpush2.msra.mxu0 0.0
  %5297 = vmatprep.subr.mxu0 0.0
  %5298 = vmatpush2.msra.mxu0 0.0
  %5299 = vmatprep.subr.mxu0 0.0
  %5300 = vmatpush2.msra.mxu0 0.0
  %5301 = vmatprep.mubr.f32.mxu0 0.0
  %5302 = vmatmul.mubr.f32.gmra.mxu0 %v5186
  %v5303 = vpop.f32.mrf.mxu0
  %v5304 = vadd.f32 0.0, %v5303
  %v5305 = vpop.f32.mrf.mxu0
  %5306 = vmatprep.mubr.f32.mxu0 0.0
  %5307 = vmatmul.mubr.f32.gmra.mxu0 %v5189
  %v5308 = vpop.f32.mrf.mxu0
  %v5309 = vadd.f32 0.0, %v5308
  %v5310 = vpop.f32.mrf.mxu0
  %5311 = vmatprep.mubr.f32.mxu0 0.0
  %5312 = vmatmul.mubr.f32.gmra.mxu0 %v5192
  %v5313 = vpop.f32.mrf.mxu0
  %v5314 = vadd.f32 0.0, %v5313
  %v5315 = vpop.f32.mrf.mxu0
  %5316 = vmatprep.mubr.f32.mxu0 0.0
  %5317 = vmatmul.mubr.f32.gmra.mxu0 %v5195
  %v5318 = vpop.f32.mrf.mxu0
  %v5319 = vadd.f32 0.0, %v5318
  %v5320 = vpop.f32.mrf.mxu0
  %5321 = vmatprep.mubr.f32.mxu0 0.0
  %5322 = vmatmul.mubr.f32.gmra.mxu0 %v5198
  %v5323 = vpop.f32.mrf.mxu0
  %v5324 = vadd.f32 0.0, %v5323
  %v5325 = vpop.f32.mrf.mxu0
  %5326 = vmatprep.mubr.f32.mxu0 0.0
  %5327 = vmatmul.mubr.f32.gmra.mxu0 %v5201
  %v5328 = vpop.f32.mrf.mxu0
  %v5329 = vadd.f32 0.0, %v5328
  %v5330 = vpop.f32.mrf.mxu0
  %5331 = vmatprep.mubr.f32.mxu0 0.0
  %5332 = vmatmul.mubr.f32.gmra.mxu0 %v5204
  %v5333 = vpop.f32.mrf.mxu0
  %v5334 = vadd.f32 0.0, %v5333
  %v5335 = vpop.f32.mrf.mxu0
  %5336 = vmatprep.mubr.f32.mxu0 0.0
  %5337 = vmatmul.mubr.f32.gmra.mxu0 %v5207
  %v5338 = vpop.f32.mrf.mxu0
  %v5339 = vadd.f32 0.0, %v5338
  %v5340 = vpop.f32.mrf.mxu0
  %5341 = vmatprep.mubr.f32.mxu0 0.0
  %5342 = vmatmul.mubr.f32.gmra.mxu0 %v5210
  %v5343 = vpop.f32.mrf.mxu0
  %v5344 = vadd.f32 0.0, %v5343
  %v5345 = vpop.f32.mrf.mxu0
  %5346 = vmatprep.mubr.f32.mxu0 0.0
  %5347 = vmatmul.mubr.f32.gmra.mxu0 %v5213
  %v5348 = vpop.f32.mrf.mxu0
  %v5349 = vadd.f32 0.0, %v5348
  %v5350 = vpop.f32.mrf.mxu0
  %5351 = vmatprep.mubr.f32.mxu0 0.0
  %5352 = vmatmul.mubr.f32.gmra.mxu0 %v5216
  %v5353 = vpop.f32.mrf.mxu0
  %v5354 = vadd.f32 0.0, %v5353
  %v5355 = vpop.f32.mrf.mxu0
  %5356 = vmatprep.mubr.f32.mxu0 0.0
  %5357 = vmatmul.mubr.f32.gmra.mxu0 %v5219
  %v5358 = vpop.f32.mrf.mxu0
  %v5359 = vadd.f32 0.0, %v5358
  %v5360 = vpop.f32.mrf.mxu0
  %5361 = vmatprep.mubr.f32.mxu0 0.0
  %5362 = vmatmul.mubr.f32.gmra.mxu0 %v5222
  %v5363 = vpop.f32.mrf.mxu0
  %v5364 = vadd.f32 0.0, %v5363
  %v5365 = vpop.f32.mrf.mxu0
  %5366 = vmatprep.mubr.f32.mxu0 0.0
  %5367 = vmatmul.mubr.f32.gmra.mxu0 %v5225
  %v5368 = vpop.f32.mrf.mxu0
  %v5369 = vadd.f32 0.0, %v5368
  %v5370 = vpop.f32.mrf.mxu0
  %5371 = vmatprep.mubr.f32.mxu0 0.0
  %5372 = vmatmul.mubr.f32.gmra.mxu0 %v5228
  %v5373 = vpop.f32.mrf.mxu0
  %v5374 = vadd.f32 0.0, %v5373
  %v5375 = vpop.f32.mrf.mxu0
  %5376 = vmatprep.mubr.f32.mxu0 0.0
  %5377 = vmatmul.mubr.f32.gmra.mxu0 %v5231
  %v5378 = vpop.f32.mrf.mxu0
  %v5379 = vadd.f32 0.0, %v5378
  %v5380 = vpop.f32.mrf.mxu0
  %5381 = vdwg.mxu0
  %v5382 = vld [vmem:[%s9] sm:$0xff]
  %v5383 = vld [vmem:[%s9 + $0x8] sm:$0xff]
  %v5384 = vld [vmem:[%s9 + $0x10] sm:$0xff]
  %v5385 = vld [vmem:[%s9 + $0x18] sm:$0xff]
  %v5386 = vld [vmem:[%s9 + $0x20] sm:$0xff]
  %v5387 = vld [vmem:[%s9 + $0x28] sm:$0xff]
  %v5388 = vld [vmem:[%s9 + $0x30] sm:$0xff]
  %v5389 = vld [vmem:[%s9 + $0x38] sm:$0xff]
  %v5390 = vld [vmem:[%s9 + $0x40] sm:$0xff]
  %v5391 = vld [vmem:[%s9 + $0x48] sm:$0xff]
  %v5392 = vld [vmem:[%s9 + $0x50] sm:$0xff]
  %v5393 = vld [vmem:[%s9 + $0x58] sm:$0xff]
  %v5394 = vld [vmem:[%s9 + $0x60] sm:$0xff]
  %v5395 = vld [vmem:[%s9 + $0x68] sm:$0xff]
  %v5396 = vld [vmem:[%s9 + $0x70] sm:$0xff]
  %v5397 = vld [vmem:[%s9 + $0x78] sm:$0xff]
  %v5398 = vmul.f32 %v5304, %v5382
  %v5399 = vmul.f32 %v5309, %v5383
  %v5400 = vmul.f32 %v5314, %v5384
  %v5401 = vmul.f32 %v5319, %v5385
  %v5402 = vmul.f32 %v5324, %v5386
  %v5403 = vmul.f32 %v5329, %v5387
  %v5404 = vmul.f32 %v5334, %v5388
  %v5405 = vmul.f32 %v5339, %v5389
  %v5406 = vmul.f32 %v5344, %v5390
  %v5407 = vmul.f32 %v5349, %v5391
  %v5408 = vmul.f32 %v5354, %v5392
  %v5409 = vmul.f32 %v5359, %v5393
  %v5410 = vmul.f32 %v5364, %v5394
  %v5411 = vmul.f32 %v5369, %v5395
  %v5412 = vmul.f32 %v5374, %v5396
  %v5413 = vmul.f32 %v5379, %v5397
  %v5414 = vpack.c.bf16 %v5167, %v5167
  %v5415 = vpack.c.bf16 %v5399, %v5398
  %v5416 = vpack.c.bf16 %v5401, %v5400
  %v5417 = vpack.c.bf16 %v5403, %v5402
  %v5418 = vpack.c.bf16 %v5405, %v5404
  %v5419 = vpack.c.bf16 %v5407, %v5406
  %v5420 = vpack.c.bf16 %v5409, %v5408
  %v5421 = vpack.c.bf16 %v5411, %v5410
  %v5422 = vpack.c.bf16 %v5413, %v5412
  %5423 = vmatprep.subr.bf16.mxu0 0
  %5424 = vmatpush1.bf16.xpose.msra.mxu0 %v5422
  %5425 = vmatprep.subr.bf16.mxu0 0
  %5426 = vmatpush1.bf16.xpose.msra.mxu0 %v5421
  %5427 = vmatprep.subr.bf16.mxu0 0
  %5428 = vmatpush1.bf16.xpose.msra.mxu0 %v5420
  %5429 = vmatprep.subr.bf16.mxu0 0
  %5430 = vmatpush1.bf16.xpose.msra.mxu0 %v5419
  %5431 = vmatprep.subr.bf16.mxu0 0
  %5432 = vmatpush1.bf16.xpose.msra.mxu0 %v5418
  %5433 = vmatprep.subr.bf16.mxu0 0
  %5434 = vmatpush1.bf16.xpose.msra.mxu0 %v5417
  %5435 = vmatprep.subr.bf16.mxu0 0
  %5436 = vmatpush1.bf16.xpose.msra.mxu0 %v5416
  %5437 = vmatprep.subr.bf16.mxu0 0
  %5438 = vmatpush1.bf16.xpose.msra.mxu0 %v5415
  %5439 = vmatprep.subr.bf16.mxu0 0
  %5440 = vmatpush2.bf16.xpose.msra.mxu0 0
  %5441 = vmatprep.subr.bf16.mxu0 0
  %5442 = vmatpush2.bf16.xpose.msra.mxu0 0
  %5443 = vmatprep.subr.bf16.mxu0 0
  %5444 = vmatpush2.bf16.xpose.msra.mxu0 0
  %5445 = vmatprep.subr.bf16.mxu0 0
  %5446 = vmatpush2.bf16.xpose.msra.mxu0 0
  %5447 = vmatprep.subr.bf16.mxu0 0
  %5448 = vmatpush2.bf16.xpose.msra.mxu0 0
  %5449 = vmatprep.subr.bf16.mxu0 0
  %5450 = vmatpush2.bf16.xpose.msra.mxu0 0
  %5451 = vmatprep.subr.bf16.mxu0 0
  %5452 = vmatpush2.bf16.xpose.msra.mxu0 0
  %5453 = vmatprep.subr.bf16.mxu0 0
  %5454 = vmatpush2.bf16.xpose.msra.mxu0 0
  %5455 = vmatprep.mubr.bf16.mxu0 0
  %5456 = vmatmul.mubr.bf16.gmra.mxu0 %v5414
  %v5457 = vpop.f32.mrf.mxu0
  %v5458 = vadd.f32 0.0, %v5457
  %v5459 = vpop.f32.mrf.mxu0
  %v5460 = vpop.f32.mrf.mxu0
  %v5461 = vpop.f32.mrf.mxu0
  %5462 = vdwg.mxu0
  %s5463 = sld [smem:[#allocation2]]
  %v5464 = vstv %s5463
  %v5465 = vmul.f32 %v5458, %v5464
  %5466 = vst [vmem:[%s12] sm:$0xff] %v5465
  // Predicated region
  $region46: #{meta_baseline_forward.1} parent=0 // pred_check
    _
  $region47: #{meta_baseline_forward.1} parent=0 // pred_check_branch
    %5468 = sbr.rel (0) target = $region49
  $region48: #{meta_baseline_forward.1} parent=0 // pred_region
    _
  $region49: #{meta_baseline_forward.1} parent=0 // pred_fallthru
    _
  // Predicated region
  $region50: #{meta_baseline_forward.1} parent=0 // pred_check
    _
  $region51: #{meta_baseline_forward.1} parent=0 // pred_check_branch
    %5470 = sbr.rel (0) target = $region53
  $region52: #{meta_baseline_forward.1} parent=0 // pred_region
    _
  $region53: #{meta_baseline_forward.1} parent=0 // pred_fallthru
    _
  // Predicated region
  $region54: #{meta_baseline_forward.1} parent=0 // pred_check
    _
  $region55: #{meta_baseline_forward.1} parent=0 // pred_check_branch
    %5472 = sbr.rel (0) target = $region57
  $region56: #{meta_baseline_forward.1} parent=0 // pred_region
    _
  $region57: #{meta_baseline_forward.1} parent=0 // pred_fallthru
    _
  // Predicated region
  $region58: #{meta_baseline_forward.1} parent=0 // pred_check
    _
  $region59: #{meta_baseline_forward.1} parent=0 // pred_check_branch
    %5474 = sbr.rel (0) target = $region61
  $region60: #{meta_baseline_forward.1} parent=0 // pred_region
    _
  $region61: #{meta_baseline_forward.1} parent=0 // pred_fallthru
    _

</llo_original>
